<compile_context>
chip_gen: v7x
topology: tpu7x:2x2x1
jax: 0.10.0
libtpu: 0.0.40
codegen_flags: <defaults>
</compile_context>

<pallas_src>
import functools

import jax
import jax.numpy as jnp
import numpy as np
from jax.experimental import pallas as pl
from jax.experimental.pallas import tpu as pltpu


# ------------------------------ fused kernel --------------------------------

def _fused_kernel(alpha_ref, p_ref, wc_ref, cb_ref,
                  w1_ref, b1_ref, w2_ref, b2_ref, w3_ref, b3_ref,
                  w4_ref, b4_ref, out_ref, *, bm, hw):
    # ---- synthetic backbone: 3x3 SAME conv as one bf16 matmul over im2col patches
    y = jnp.dot(wc_ref[...], p_ref[...],
                preferred_element_type=jnp.float32)            # (Cout, bm*HW), f32 acc
    y = jnp.maximum(y + cb_ref[...], 0.0)                      # conv bias + ReLU
    cout = y.shape[0]
    # Global average pool: split the lane axis per-sample and reduce over HW (XLU
    # cross-lane reduce) -- no selector matmul, no big VMEM operand.
    feats_cf = jnp.mean(y.reshape(cout, bm, hw), axis=-1)      # (Cout, bm)

    # ---- classifier head: Linear -> PReLU, with eval-mode BatchNorm1d already
    # folded into the *following* Linear's weights/bias (Dropout = identity in eval).
    def linear_prelu(x, w_ref, b_ref, slope):
        w = w_ref[...]                                          # bf16 weights
        h = jnp.dot(x.astype(w.dtype), w,
                    preferred_element_type=jnp.float32) + b_ref[...]
        return jnp.where(h >= 0.0, h, slope * h)                # PReLU (single slope)

    # First Linear consumes the (Cout, bm) GAP result via a transposed-lhs matmul.
    w1 = w1_ref[...]
    h = jax.lax.dot_general(
        feats_cf.astype(w1.dtype), w1,
        dimension_numbers=(((0,), (0,)), ((), ())),
        preferred_element_type=jnp.float32) + b1_ref[...]       # (bm, 1024)
    h = jnp.where(h >= 0.0, h, alpha_ref[0] * h)

    h = linear_prelu(h, w2_ref, b2_ref, alpha_ref[1])           # 1024 -> 512
    h = linear_prelu(h, w3_ref, b3_ref, alpha_ref[2])           # 512  -> 128

    w4 = w4_ref[...]                                            # (128, 128) lane-padded
    out_ref[...] = jnp.dot(h.astype(w4.dtype), w4,
                           preferred_element_type=jnp.float32) + b4_ref[...]


# ------------------------------ host wrapper --------------------------------

def _fold_bn_into_next_linear(bn, w_next, b_next, eps=1e-5):
    """Inference BN(x) = x*s + t; Linear(BN(x)) = x @ (s[:,None]*W) + (t @ W + b)."""
    s = (bn["g"] * jax.lax.rsqrt(bn["v"] + eps)).reshape(-1)
    t = bn["be"].reshape(-1) - bn["m"].reshape(-1) * s
    return w_next * s[:, None], b_next + t[None, :] @ w_next


def timm_model_complex_forward(x, conv_params, cls_params):
    B, Cin, H, W = x.shape
    conv_w = conv_params["w"]
    conv_b = conv_params["b"]
    Cout = conv_w.shape[0]                 # "representation features" F
    K = Cin * 9
    Kp = ((K + 7) // 8) * 8                # 8-aligned contraction dim
    HW = H * W
    num_classes = cls_params["w4"].shape[1]
    NC_PAD = 128                           # lane-dense output slab, sliced after call

    # --- batch tiling: whole (small) batch in one step; else 8-aligned tiles capped
    # at 256 with >= 2 grid steps (keeps both v7x TensorCores busy). Ragged batches
    # are zero-padded and sliced off after the call.
    if B <= 8:
        bm = B
    else:
        bm = max(8, min(256, (B // 2) // 8 * 8))
    B_pad = ((B + bm - 1) // bm) * bm
    if B_pad != B:
        x = jnp.pad(x, ((0, B_pad - B), (0, 0), (0, 0), (0, 0)))

    # --- host glue: im2col for the 3x3 SAME conv, lane-dense bf16 (Kp, B*HW) layout.
    # conv_general_dilated_patches orders the patch axis as (cin, kh, kw), identical
    # to conv_w.reshape(Cout, Cin*9), so this is exact for any Cin.
    # TODO(synk): for very large B/HW, build the 9 shifted patch rows inside the
    # kernel from a (Cin, bm*HW) tile of x instead of materializing im2col in HBM.
    patches = jax.lax.conv_general_dilated_patches(
        x.astype(jnp.float32), filter_shape=(3, 3),
        window_strides=(1, 1), padding="SAME")                    # (B_pad, K, H, W)
    p_t = patches.reshape(B_pad, K, HW).transpose(1, 0, 2).reshape(K, B_pad * HW)
    p_t = jnp.pad(p_t, ((0, Kp - K), (0, 0))).astype(jnp.bfloat16)

    wc = jnp.pad(conv_w.reshape(Cout, K).astype(jnp.float32),
                 ((0, 0), (0, Kp - K))).astype(jnp.bfloat16)       # (Cout, Kp)
    cb = conv_b.reshape(Cout, 1).astype(jnp.float32)               # (Cout, 1)

    # --- fold eval-mode BatchNorm1d into the following Linear; bf16 weights for MXU
    w1 = cls_params["w1"].astype(jnp.bfloat16)
    b1 = cls_params["b1"].astype(jnp.float32)
    w2f, b2f = _fold_bn_into_next_linear(cls_params["bn1"], cls_params["w2"], cls_params["b2"])
    w3f, b3f = _fold_bn_into_next_linear(cls_params["bn2"], cls_params["w3"], cls_params["b3"])
    w4f, b4f = _fold_bn_into_next_linear(cls_params["bn3"], cls_params["w4"], cls_params["b4"])
    w2f, w3f = w2f.astype(jnp.bfloat16), w3f.astype(jnp.bfloat16)
    b2f, b3f = b2f.astype(jnp.float32), b3f.astype(jnp.float32)
    # Lane-dense output: zero-pad the last Linear to 128 output columns.
    w4p = jnp.pad(w4f, ((0, 0), (0, NC_PAD - num_classes))).astype(jnp.bfloat16)
    b4p = jnp.pad(b4f, ((0, 0), (0, NC_PAD - num_classes))).astype(jnp.float32)

    # PReLU slopes -> one (3,) SMEM scalar array (independent per PReLU).
    alpha = jnp.concatenate([cls_params["a1"].reshape(1),
                             cls_params["a2"].reshape(1),
                             cls_params["a3"].reshape(1)]).astype(jnp.float32)

    grid = (B_pad // bm,)
    kernel = functools.partial(_fused_kernel, bm=bm, hw=HW)
    vmem_limit = 64 * 1024 * 1024 if bm > 64 else None   # only raise cap for big tiles

    out = pl.pallas_call(
        kernel,
        out_shape=jax.ShapeDtypeStruct((B_pad, NC_PAD), jnp.float32),
        grid=grid,
        in_specs=[
            pl.BlockSpec(memory_space=pltpu.MemorySpace.SMEM),     # PReLU slopes (3,)
            pl.BlockSpec((Kp, bm * HW), lambda i: (0, i)),         # im2col patch tile (bf16)
            pl.BlockSpec(wc.shape, lambda i: (0, 0)),              # conv weight (bf16)
            pl.BlockSpec(cb.shape, lambda i: (0, 0)),              # conv bias
            pl.BlockSpec(w1.shape, lambda i: (0, 0)),              # Linear1 (bf16)
            pl.BlockSpec(b1.shape, lambda i: (0, 0)),
            pl.BlockSpec(w2f.shape, lambda i: (0, 0)),             # Linear2 (BN1 folded)
            pl.BlockSpec(b2f.shape, lambda i: (0, 0)),
            pl.BlockSpec(w3f.shape, lambda i: (0, 0)),             # Linear3 (BN2 folded)
            pl.BlockSpec(b3f.shape, lambda i: (0, 0)),
            pl.BlockSpec(w4p.shape, lambda i: (0, 0)),             # Linear4 (BN3 folded, lane-padded)
            pl.BlockSpec(b4p.shape, lambda i: (0, 0)),
        ],
        out_specs=pl.BlockSpec((bm, NC_PAD), lambda i: (i, 0)),
        compiler_params=pltpu.CompilerParams(
            dimension_semantics=("parallel",),
            vmem_limit_bytes=vmem_limit),
    )(alpha, p_t, wc, cb, w1, b1, w2f, b2f, w3f, b3f, w4p, b4p)
    return out[:B, :num_classes]


# ------------------------------ f32 reference --------------------------------

def reference_forward(x, conv_params, cls_params, eps=1e-5):
    y = jax.lax.conv_general_dilated(
        x, conv_params["w"], window_strides=(1, 1), padding="SAME",
        dimension_numbers=("NCHW", "OIHW", "NCHW"))
    y = jnp.maximum(y + conv_params["b"].reshape(1, -1, 1, 1), 0.0)
    feats = y.mean(axis=(2, 3))                                    # (B, F)

    def prelu(h, a):
        return jnp.where(h >= 0.0, h, a * h)

    def bn(p, h):
        s = p["g"].reshape(-1) * jax.lax.rsqrt(p["v"].reshape(-1) + eps)
        return (h - p["m"].reshape(-1)) * s + p["be"].reshape(-1)

    h = bn(cls_params["bn1"], prelu(feats @ cls_params["w1"] + cls_params["b1"], cls_params["a1"]))
    h = bn(cls_params["bn2"], prelu(h @ cls_params["w2"] + cls_params["b2"], cls_params["a2"]))
    h = bn(cls_params["bn3"], prelu(h @ cls_params["w3"] + cls_params["b3"], cls_params["a3"]))
    return h @ cls_params["w4"] + cls_params["b4"]


# ------------------------------- parameters ---------------------------------

def init_params(key, in_chans=1, feat_dim=32, num_classes=3):
    ks = jax.random.split(key, 10)

    def uni(k, shape, fan_in):
        bound = 1.0 / jnp.sqrt(fan_in)
        return jax.random.uniform(k, shape, jnp.float32, -bound, bound)

    conv_params = {
        "w": uni(ks[0], (feat_dim, in_chans, 3, 3), in_chans * 9),
        "b": uni(ks[1], (feat_dim,), in_chans * 9),
    }

    def bn(n):
        # Fresh BatchNorm1d (inference): gamma=1, beta=0, running_mean=0, running_var=1
        return {"g": jnp.ones((1, n), jnp.float32), "be": jnp.zeros((1, n), jnp.float32),
                "m": jnp.zeros((1, n), jnp.float32), "v": jnp.ones((1, n), jnp.float32)}

    prelu = jnp.full((1,), 0.25, jnp.float32)     # PyTorch PReLU default init (1 param)

    cls_params = {
        "w1": uni(ks[2], (feat_dim, 1024), feat_dim),
        "b1": uni(ks[3], (1, 1024), feat_dim),
        "a1": prelu, "bn1": bn(1024),
        "w2": uni(ks[4], (1024, 512), 1024),
        "b2": uni(ks[5], (1, 512), 1024),
        "a2": prelu, "bn2": bn(512),
        "w3": uni(ks[6], (512, 128), 512),
        "b3": uni(ks[7], (1, 128), 512),
        "a3": prelu, "bn3": bn(128),
        "w4": uni(ks[8], (128, num_classes), 128),
        "b4": uni(ks[9], (1, num_classes), 128),
    }
    return conv_params, cls_params


if __name__ == "__main__":
    key = jax.random.PRNGKey(0)
    k_x, k_p = jax.random.split(key)

    B, Cin, H, W = 2, 4, 16, 16
    x = jax.random.normal(k_x, (B, Cin, H, W), jnp.float32)

    conv_params, cls_params = init_params(k_p, in_chans=Cin,
                                          feat_dim=32, num_classes=3)

    fwd = jax.jit(timm_model_complex_forward)
    out = jax.block_until_ready(fwd(x, conv_params, cls_params))
    assert out.shape == (B, 3), out.shape

    # Loose-tolerance check against the pure-JAX f32 reference (bf16 MXU path).
    ref = reference_forward(x, conv_params, cls_params)
    np.testing.assert_allclose(np.asarray(out), np.asarray(ref), rtol=5e-2, atol=5e-2)
    print("KERNEL_OK")
</pallas_src>

<mosaic_0001>
module attributes {stable_mosaic.version = 11 : i64} {
  func.func @_fused_kernel(%arg0: i32, %arg1: memref<3xf32, #tpu.memory_space<smem>>, %arg2: memref<40x512xbf16, #tpu.memory_space<vmem>>, %arg3: memref<32x40xbf16, #tpu.memory_space<vmem>>, %arg4: memref<32x1xf32, #tpu.memory_space<vmem>>, %arg5: memref<32x1024xbf16, #tpu.memory_space<vmem>>, %arg6: memref<1x1024xf32, #tpu.memory_space<vmem>>, %arg7: memref<1024x512xbf16, #tpu.memory_space<vmem>>, %arg8: memref<1x512xf32, #tpu.memory_space<vmem>>, %arg9: memref<512x128xbf16, #tpu.memory_space<vmem>>, %arg10: memref<1x128xf32, #tpu.memory_space<vmem>>, %arg11: memref<128x128xbf16, #tpu.memory_space<vmem>>, %arg12: memref<1x128xf32, #tpu.memory_space<vmem>>, %arg13: memref<2x128xf32, #tpu.memory_space<vmem>>) attributes {dimension_semantics = [#tpu.dimension_semantics<parallel>], iteration_bounds = array<i64: 1>, scalar_prefetch = 0 : i64, scratch_operands = 0 : i64, tpu.core_type = #tpu.core_type<tc>, window_params = [{transform_indices = @transform_0, window_bounds = array<i64: 3>}, {transform_indices = @transform_1, window_bounds = array<i64: 40, 512>}, {pipeline_mode = #tpu.pipeline_mode<synchronous>, transform_indices = @transform_2, window_bounds = array<i64: 32, 40>}, {pipeline_mode = #tpu.pipeline_mode<synchronous>, transform_indices = @transform_3, window_bounds = array<i64: 32, 1>}, {pipeline_mode = #tpu.pipeline_mode<synchronous>, transform_indices = @transform_4, window_bounds = array<i64: 32, 1024>}, {pipeline_mode = #tpu.pipeline_mode<synchronous>, transform_indices = @transform_5, window_bounds = array<i64: 1, 1024>}, {pipeline_mode = #tpu.pipeline_mode<synchronous>, transform_indices = @transform_6, window_bounds = array<i64: 1024, 512>}, {pipeline_mode = #tpu.pipeline_mode<synchronous>, transform_indices = @transform_7, window_bounds = array<i64: 1, 512>}, {pipeline_mode = #tpu.pipeline_mode<synchronous>, transform_indices = @transform_8, window_bounds = array<i64: 512, 128>}, {pipeline_mode = #tpu.pipeline_mode<synchronous>, transform_indices = @transform_9, window_bounds = array<i64: 1, 128>}, {pipeline_mode = #tpu.pipeline_mode<synchronous>, transform_indices = @transform_10, window_bounds = array<i64: 128, 128>}, {pipeline_mode = #tpu.pipeline_mode<synchronous>, transform_indices = @transform_11, window_bounds = array<i64: 1, 128>}, {transform_indices = @transform_12, window_bounds = array<i64: 2, 128>}]} {
    %c0 = arith.constant 0 : index
    %c0_0 = arith.constant 0 : index
    %0 = vector.load %arg3[%c0, %c0_0] : memref<32x40xbf16, #tpu.memory_space<vmem>>, vector<32x40xbf16>
    %c0_1 = arith.constant 0 : index
    %c0_2 = arith.constant 0 : index
    %1 = vector.load %arg2[%c0_1, %c0_2] : memref<40x512xbf16, #tpu.memory_space<vmem>>, vector<40x512xbf16>
    %cst = arith.constant dense<0.000000e+00> : vector<32x512xf32>
    %2 = tpu.matmul %0, %1, %cst {dimension_numbers = #tpu.dot_dimension_numbers<[1], [0], [0], [1], [0, 0, 1, 1], [], []>} : vector<32x40xbf16>, vector<40x512xbf16>, vector<32x512xf32> -> vector<32x512xf32>
    %c0_3 = arith.constant 0 : index
    %c0_4 = arith.constant 0 : index
    %3 = vector.load %arg4[%c0_3, %c0_4] : memref<32x1xf32, #tpu.memory_space<vmem>>, vector<32x1xf32>
    %4 = vector.broadcast %3 : vector<32x1xf32> to vector<32x512xf32>
    %5 = arith.addf %2, %4 : vector<32x512xf32>
    %cst_5 = arith.constant 0.000000e+00 : f32
    %6 = vector.broadcast %cst_5 : f32 to vector<32x512xf32>
    %7 = arith.maximumf %5, %6 : vector<32x512xf32>
    %8 = vector.shape_cast %7 : vector<32x512xf32> to vector<32x2x256xf32>
    %cst_6 = arith.constant dense<0.000000e+00> : vector<32x2xf32>
    %9 = vector.multi_reduction <add>, %8, %cst_6 [2] : vector<32x2x256xf32> to vector<32x2xf32>
    %cst_7 = arith.constant 2.560000e+02 : f32
    %10 = vector.broadcast %cst_7 : f32 to vector<32x2xf32>
    %11 = arith.divf %9, %10 : vector<32x2xf32>
    %c0_8 = arith.constant 0 : index
    %c0_9 = arith.constant 0 : index
    %12 = vector.load %arg5[%c0_8, %c0_9] : memref<32x1024xbf16, #tpu.memory_space<vmem>>, vector<32x1024xbf16>
    %13 = arith.truncf %11 : vector<32x2xf32> to vector<32x2xbf16>
    %cst_10 = arith.constant dense<0.000000e+00> : vector<2x1024xf32>
    %14 = tpu.matmul %13, %12, %cst_10 {dimension_numbers = #tpu.dot_dimension_numbers<[0], [0], [1], [1], [0, 1, 1, 1], [], []>} : vector<32x2xbf16>, vector<32x1024xbf16>, vector<2x1024xf32> -> vector<2x1024xf32>
    %c0_11 = arith.constant 0 : index
    %c0_12 = arith.constant 0 : index
    %15 = vector.load %arg6[%c0_11, %c0_12] : memref<1x1024xf32, #tpu.memory_space<vmem>>, vector<1x1024xf32>
    %16 = vector.broadcast %15 : vector<1x1024xf32> to vector<2x1024xf32>
    %17 = arith.addf %14, %16 : vector<2x1024xf32>
    %cst_13 = arith.constant 0.000000e+00 : f32
    %18 = vector.broadcast %cst_13 : f32 to vector<2x1024xf32>
    %19 = arith.cmpf oge, %17, %18 : vector<2x1024xf32>
    %c0_14 = arith.constant 0 : index
    %20 = memref.load %arg1[%c0_14] : memref<3xf32, #tpu.memory_space<smem>>
    %21 = vector.broadcast %20 : f32 to vector<2x1024xf32>
    %22 = arith.mulf %21, %17 : vector<2x1024xf32>
    %23 = arith.select %19, %17, %22 : vector<2x1024xi1>, vector<2x1024xf32>
    %c1 = arith.constant 1 : index
    %24 = memref.load %arg1[%c1] : memref<3xf32, #tpu.memory_space<smem>>
    %c0_15 = arith.constant 0 : index
    %c0_16 = arith.constant 0 : index
    %25 = vector.load %arg7[%c0_15, %c0_16] : memref<1024x512xbf16, #tpu.memory_space<vmem>>, vector<1024x512xbf16>
    %26 = arith.truncf %23 : vector<2x1024xf32> to vector<2x1024xbf16>
    %cst_17 = arith.constant dense<0.000000e+00> : vector<2x512xf32>
    %27 = tpu.matmul %26, %25, %cst_17 {dimension_numbers = #tpu.dot_dimension_numbers<[1], [0], [0], [1], [0, 0, 1, 1], [], []>} : vector<2x1024xbf16>, vector<1024x512xbf16>, vector<2x512xf32> -> vector<2x512xf32>
    %c0_18 = arith.constant 0 : index
    %c0_19 = arith.constant 0 : index
    %28 = vector.load %arg8[%c0_18, %c0_19] : memref<1x512xf32, #tpu.memory_space<vmem>>, vector<1x512xf32>
    %29 = vector.broadcast %28 : vector<1x512xf32> to vector<2x512xf32>
    %30 = arith.addf %27, %29 : vector<2x512xf32>
    %cst_20 = arith.constant 0.000000e+00 : f32
    %31 = vector.broadcast %cst_20 : f32 to vector<2x512xf32>
    %32 = arith.cmpf oge, %30, %31 : vector<2x512xf32>
    %33 = vector.broadcast %24 : f32 to vector<2x512xf32>
    %34 = arith.mulf %33, %30 : vector<2x512xf32>
    %35 = arith.select %32, %30, %34 : vector<2x512xi1>, vector<2x512xf32>
    %c2 = arith.constant 2 : index
    %36 = memref.load %arg1[%c2] : memref<3xf32, #tpu.memory_space<smem>>
    %c0_21 = arith.constant 0 : index
    %c0_22 = arith.constant 0 : index
    %37 = vector.load %arg9[%c0_21, %c0_22] : memref<512x128xbf16, #tpu.memory_space<vmem>>, vector<512x128xbf16>
    %38 = arith.truncf %35 : vector<2x512xf32> to vector<2x512xbf16>
    %cst_23 = arith.constant dense<0.000000e+00> : vector<2x128xf32>
    %39 = tpu.matmul %38, %37, %cst_23 {dimension_numbers = #tpu.dot_dimension_numbers<[1], [0], [0], [1], [0, 0, 1, 1], [], []>} : vector<2x512xbf16>, vector<512x128xbf16>, vector<2x128xf32> -> vector<2x128xf32>
    %c0_24 = arith.constant 0 : index
    %c0_25 = arith.constant 0 : index
    %40 = vector.load %arg10[%c0_24, %c0_25] : memref<1x128xf32, #tpu.memory_space<vmem>>, vector<1x128xf32>
    %41 = vector.broadcast %40 : vector<1x128xf32> to vector<2x128xf32>
    %42 = arith.addf %39, %41 : vector<2x128xf32>
    %cst_26 = arith.constant 0.000000e+00 : f32
    %43 = vector.broadcast %cst_26 : f32 to vector<2x128xf32>
    %44 = arith.cmpf oge, %42, %43 : vector<2x128xf32>
    %45 = vector.broadcast %36 : f32 to vector<2x128xf32>
    %46 = arith.mulf %45, %42 : vector<2x128xf32>
    %47 = arith.select %44, %42, %46 : vector<2x128xi1>, vector<2x128xf32>
    %c0_27 = arith.constant 0 : index
    %c0_28 = arith.constant 0 : index
    %48 = vector.load %arg11[%c0_27, %c0_28] : memref<128x128xbf16, #tpu.memory_space<vmem>>, vector<128x128xbf16>
    %49 = arith.truncf %47 : vector<2x128xf32> to vector<2x128xbf16>
    %cst_29 = arith.constant dense<0.000000e+00> : vector<2x128xf32>
    %50 = tpu.matmul %49, %48, %cst_29 {dimension_numbers = #tpu.dot_dimension_numbers<[1], [0], [0], [1], [0, 0, 1, 1], [], []>} : vector<2x128xbf16>, vector<128x128xbf16>, vector<2x128xf32> -> vector<2x128xf32>
    %c0_30 = arith.constant 0 : index
    %c0_31 = arith.constant 0 : index
    %51 = vector.load %arg12[%c0_30, %c0_31] : memref<1x128xf32, #tpu.memory_space<vmem>>, vector<1x128xf32>
    %52 = vector.broadcast %51 : vector<1x128xf32> to vector<2x128xf32>
    %53 = arith.addf %50, %52 : vector<2x128xf32>
    %c0_32 = arith.constant 0 : index
    %c0_33 = arith.constant 0 : index
    %54 = vector.load %arg13[%c0_32, %c0_33] : memref<2x128xf32, #tpu.memory_space<vmem>>, vector<2x128xf32>
    tpu.vector_store %arg13[%c0_32, %c0_33], %53 {strides = array<i32>} : memref<2x128xf32, #tpu.memory_space<vmem>>, vector<2x128xf32>,
    return
  }
  func.func @transform_0(%arg0: i32) -> i32 {
    %c0_i32 = arith.constant 0 : i32
    %c0_i32_0 = arith.constant 0 : i32
    return %c0_i32 : i32
  }
  func.func @transform_1(%arg0: i32) -> (i32, i32) {
    %c0_i32 = arith.constant 0 : i32
    %c0_i32_0 = arith.constant 0 : i32
    return %c0_i32, %arg0 : i32, i32
  }
  func.func @transform_2(%arg0: i32) -> (i32, i32) {
    %c0_i32 = arith.constant 0 : i32
    %c0_i32_0 = arith.constant 0 : i32
    %c0_i32_1 = arith.constant 0 : i32
    return %c0_i32, %c0_i32_0 : i32, i32
  }
  func.func @transform_3(%arg0: i32) -> (i32, i32) {
    %c0_i32 = arith.constant 0 : i32
    %c0_i32_0 = arith.constant 0 : i32
    %c0_i32_1 = arith.constant 0 : i32
    return %c0_i32, %c0_i32_0 : i32, i32
  }
  func.func @transform_4(%arg0: i32) -> (i32, i32) {
    %c0_i32 = arith.constant 0 : i32
    %c0_i32_0 = arith.constant 0 : i32
    %c0_i32_1 = arith.constant 0 : i32
    return %c0_i32, %c0_i32_0 : i32, i32
  }
  func.func @transform_5(%arg0: i32) -> (i32, i32) {
    %c0_i32 = arith.constant 0 : i32
    %c0_i32_0 = arith.constant 0 : i32
    %c0_i32_1 = arith.constant 0 : i32
    return %c0_i32, %c0_i32_0 : i32, i32
  }
  func.func @transform_6(%arg0: i32) -> (i32, i32) {
    %c0_i32 = arith.constant 0 : i32
    %c0_i32_0 = arith.constant 0 : i32
    %c0_i32_1 = arith.constant 0 : i32
    return %c0_i32, %c0_i32_0 : i32, i32
  }
  func.func @transform_7(%arg0: i32) -> (i32, i32) {
    %c0_i32 = arith.constant 0 : i32
    %c0_i32_0 = arith.constant 0 : i32
    %c0_i32_1 = arith.constant 0 : i32
    return %c0_i32, %c0_i32_0 : i32, i32
  }
  func.func @transform_8(%arg0: i32) -> (i32, i32) {
    %c0_i32 = arith.constant 0 : i32
    %c0_i32_0 = arith.constant 0 : i32
    %c0_i32_1 = arith.constant 0 : i32
    return %c0_i32, %c0_i32_0 : i32, i32
  }
  func.func @transform_9(%arg0: i32) -> (i32, i32) {
    %c0_i32 = arith.constant 0 : i32
    %c0_i32_0 = arith.constant 0 : i32
    %c0_i32_1 = arith.constant 0 : i32
    return %c0_i32, %c0_i32_0 : i32, i32
  }
  func.func @transform_10(%arg0: i32) -> (i32, i32) {
    %c0_i32 = arith.constant 0 : i32
    %c0_i32_0 = arith.constant 0 : i32
    %c0_i32_1 = arith.constant 0 : i32
    return %c0_i32, %c0_i32_0 : i32, i32
  }
  func.func @transform_11(%arg0: i32) -> (i32, i32) {
    %c0_i32 = arith.constant 0 : i32
    %c0_i32_0 = arith.constant 0 : i32
    %c0_i32_1 = arith.constant 0 : i32
    return %c0_i32, %c0_i32_0 : i32, i32
  }
  func.func @transform_12(%arg0: i32) -> (i32, i32) {
    %c0_i32 = arith.constant 0 : i32
    %c0_i32_0 = arith.constant 0 : i32
    return %arg0, %c0_i32 : i32, i32
  }
}

</mosaic_0001>

<llo_original>
// kernel: timm_model_complex_forward.1
$region0: #{timm_model_complex_forward.1}
  #allocation0 [shape = 'u32[]', space=smem, size = 0x4, offset = 0x4, fixed_abs, tag = 'smem constant byte address 0x4 - core index']
  #allocation1 [shape = 'u32[144,128]{1,0:T(1,128)}', space=vmem, size = 0x12000, scoped, tag = 'internal scratch']
  %s0 = inlined_call_operand.vmem [shape: f32[3], index: 0, kind: input, shape index: {}]
  %s1 = inlined_call_operand.vmem [shape: bf16[40,512], index: 1, kind: input, shape index: {}]
  %s2 = inlined_call_operand.vmem [shape: bf16[32,40], index: 2, kind: input, shape index: {}]
  %s3 = inlined_call_operand.vmem [shape: f32[32,1], index: 3, kind: input, shape index: {}]
  %s4 = inlined_call_operand.vmem [shape: bf16[32,1024], index: 4, kind: input, shape index: {}]
  %s5 = inlined_call_operand.vmem [shape: f32[1,1024], index: 5, kind: input, shape index: {}]
  %s6 = inlined_call_operand.vmem [shape: bf16[1024,512], index: 6, kind: input, shape index: {}]
  %s7 = inlined_call_operand.vmem [shape: f32[1,512], index: 7, kind: input, shape index: {}]
  %s8 = inlined_call_operand.vmem [shape: bf16[512,128], index: 8, kind: input, shape index: {}]
  %s9 = inlined_call_operand.vmem [shape: f32[1,128], index: 9, kind: input, shape index: {}]
  %s10 = inlined_call_operand.vmem [shape: bf16[128,128], index: 10, kind: input, shape index: {}]
  %s11 = inlined_call_operand.vmem [shape: f32[1,128], index: 11, kind: input, shape index: {}]
  %s12 = inlined_call_operand.hbm [shape: f32[2,128], index: 12, kind: output, shape index: {}]
  %s13 = sld [smem:[#allocation0]]
  $region62: #{timm_model_complex_forward.1} parent=0
    _
  %s15 = ssub.s32 1, %s13
  %s16 = scalar_select 0, %s15, %s13
  $region1: #{timm_model_complex_forward.1} parent=0
    #allocation2 [shape = 'u8[512]{0}', space=smem, size = 0x200, scoped, tag = 'input window, operand 0, single buffered']
    #allocation3 [shape = 's32[1]{0}', space=sflag, size = 0x4, scoped, tag = 'scoped memory for timm_model_complex_forward.1']
    #allocation4 [shape = 's32[1]{0}', space=sflag, size = 0x4, scoped, tag = 'scoped memory for timm_model_complex_forward.1']
    #allocation5 [shape = 'u8[1024]{0}', space=vmem, size = 0x400, scoped, tag = 'output window, operand 0, single buffered']
    %17 = vsyncpa [#allocation4], 0
    %18 = vsyncpa [#allocation3], 0
    // Predicated region
    $region2: #{timm_model_complex_forward.1} parent=1 // pred_check
      _
    $region3: #{timm_model_complex_forward.1} parent=1 // pred_check_branch
      %20 = sbr.rel (0) target = $region5
    $region4: #{timm_model_complex_forward.1} parent=1 // pred_region
      %s22 = ssub.s32 16, 16
      %23 = vsyncadd [#allocation4], %s22
      %s25 = sshll.u32 %s0, 4
      %s26 = int_to_ptr.vmem [resolvable:$true] %s25
      %28 = dma.vmem_to_smem %s26, 16, [#allocation2], [#allocation4]
    $region5: #{timm_model_complex_forward.1} parent=1 // pred_fallthru
      _
    // Predicated region
    $region6: #{timm_model_complex_forward.1} parent=1 // pred_check
      _
    $region7: #{timm_model_complex_forward.1} parent=1 // pred_check_branch
      %30 = sbr.rel (0) target = $region9
    $region8: #{timm_model_complex_forward.1} parent=1 // pred_region
      _
    $region9: #{timm_model_complex_forward.1} parent=1 // pred_fallthru
      _
    // Predicated region
    $region10: #{timm_model_complex_forward.1} parent=1 // pred_check
      _
    $region11: #{timm_model_complex_forward.1} parent=1 // pred_check_branch
      %32 = sbr.rel (0) target = $region13
    $region12: #{timm_model_complex_forward.1} parent=1 // pred_region
      _
    $region13: #{timm_model_complex_forward.1} parent=1 // pred_fallthru
      _
    // Predicated region
    $region14: #{timm_model_complex_forward.1} parent=1 // pred_check
      _
    $region15: #{timm_model_complex_forward.1} parent=1 // pred_check_branch
      %34 = sbr.rel (0) target = $region17
    $region16: #{timm_model_complex_forward.1} parent=1 // pred_region
      _
    $region17: #{timm_model_complex_forward.1} parent=1 // pred_fallthru
      _
    // Predicated region
    $region18: #{timm_model_complex_forward.1} parent=1 // pred_check
      _
    $region19: #{timm_model_complex_forward.1} parent=1 // pred_check_branch
      %36 = sbr.rel (0) target = $region21
    $region20: #{timm_model_complex_forward.1} parent=1 // pred_region
      _
    $region21: #{timm_model_complex_forward.1} parent=1 // pred_fallthru
      _
    // Predicated region
    $region22: #{timm_model_complex_forward.1} parent=1 // pred_check
      _
    $region23: #{timm_model_complex_forward.1} parent=1 // pred_check_branch
      %38 = sbr.rel (0) target = $region25
    $region24: #{timm_model_complex_forward.1} parent=1 // pred_region
      _
    $region25: #{timm_model_complex_forward.1} parent=1 // pred_fallthru
      _
    // Predicated region
    $region26: #{timm_model_complex_forward.1} parent=1 // pred_check
      _
    $region27: #{timm_model_complex_forward.1} parent=1 // pred_check_branch
      %40 = sbr.rel (0) target = $region29
    $region28: #{timm_model_complex_forward.1} parent=1 // pred_region
      _
    $region29: #{timm_model_complex_forward.1} parent=1 // pred_fallthru
      _
    // Predicated region
    $region30: #{timm_model_complex_forward.1} parent=1 // pred_check
      _
    $region31: #{timm_model_complex_forward.1} parent=1 // pred_check_branch
      %42 = sbr.rel (0) target = $region33
    $region32: #{timm_model_complex_forward.1} parent=1 // pred_region
      _
    $region33: #{timm_model_complex_forward.1} parent=1 // pred_fallthru
      _
    // Predicated region
    $region34: #{timm_model_complex_forward.1} parent=1 // pred_check
      _
    $region35: #{timm_model_complex_forward.1} parent=1 // pred_check_branch
      %44 = sbr.rel (0) target = $region37
    $region36: #{timm_model_complex_forward.1} parent=1 // pred_region
      _
    $region37: #{timm_model_complex_forward.1} parent=1 // pred_fallthru
      _
    // Predicated region
    $region38: #{timm_model_complex_forward.1} parent=1 // pred_check
      _
    $region39: #{timm_model_complex_forward.1} parent=1 // pred_check_branch
      %46 = sbr.rel (0) target = $region41
    $region40: #{timm_model_complex_forward.1} parent=1 // pred_region
      _
    $region41: #{timm_model_complex_forward.1} parent=1 // pred_fallthru
      _
    // Predicated region
    $region42: #{timm_model_complex_forward.1} parent=1 // pred_check
      _
    $region43: #{timm_model_complex_forward.1} parent=1 // pred_check_branch
      %48 = sbr.rel (0) target = $region45
    $region44: #{timm_model_complex_forward.1} parent=1 // pred_region
      _
    $region45: #{timm_model_complex_forward.1} parent=1 // pred_fallthru
      _
    // Predicated region
    $region46: #{timm_model_complex_forward.1} parent=1 // pred_check
      _
    $region47: #{timm_model_complex_forward.1} parent=1 // pred_check_branch
      %50 = sbr.rel (0) target = $region49
    $region48: #{timm_model_complex_forward.1} parent=1 // pred_region
      _
    $region49: #{timm_model_complex_forward.1} parent=1 // pred_fallthru
      _
    // Predicated region
    $region50: #{timm_model_complex_forward.1} parent=1 // pred_check
      _
    $region51: #{timm_model_complex_forward.1} parent=1 // pred_check_branch
      %52 = sbr.rel (0) target = $region53
    $region52: #{timm_model_complex_forward.1} parent=1 // pred_region
      %53 = dma.done [#allocation4], 16
    $region53: #{timm_model_complex_forward.1} parent=1 // pred_fallthru
      _
    %54 = sfence
    %v56 = vld [vmem:[%s2] sm:$0xf]
    %v57 = vld [vmem:[%s2 + $0x4] sm:$0xf]
    %v58 = vld [vmem:[%s2 + $0x8] sm:$0xf]
    %v59 = vld [vmem:[%s2 + $0xc] sm:$0xf]
    %v60 = vld [vmem:[%s1] sm:$0xff]
    %v61 = vld [vmem:[%s1 + $0x8] sm:$0xff]
    %v62 = vld [vmem:[%s1 + $0x10] sm:$0xff]
    %v63 = vld [vmem:[%s1 + $0x18] sm:$0xff]
    %v64 = vld [vmem:[%s1 + $0x20] sm:$0xff]
    %v65 = vld [vmem:[%s1 + $0x28] sm:$0xff]
    %v66 = vld [vmem:[%s1 + $0x30] sm:$0xff]
    %v67 = vld [vmem:[%s1 + $0x38] sm:$0xff]
    %v68 = vld [vmem:[%s1 + $0x40] sm:$0xff]
    %v69 = vld [vmem:[%s1 + $0x48] sm:$0xff]
    %v70 = vld [vmem:[%s3] sm:$0xff]
    %v71 = vld [vmem:[%s3 + $0x8] sm:$0xff]
    %v72 = vld [vmem:[%s3 + $0x10] sm:$0xff]
    %v73 = vld [vmem:[%s3 + $0x18] sm:$0xff]
    %75 = vset.pattern.permute.xlu0 0
    %76 = vperm.xlu0 %75, %v70
    %v77 = vpop.permute.xlu0 %76
    %80 = vset.pattern.permute.xlu0 0
    %81 = vperm.xlu0 %80, %v71
    %v82 = vpop.permute.xlu0 %81
    %85 = vset.pattern.permute.xlu0 0
    %86 = vperm.xlu0 %85, %v72
    %v87 = vpop.permute.xlu0 %86
    %90 = vset.pattern.permute.xlu0 0
    %91 = vperm.xlu0 %90, %v73
    %v92 = vpop.permute.xlu0 %91
    %v98 = vunpack.c.l.b16 %v56
    %v99 = vunpack.c.l.b16 %v57
    %v100 = vunpack.c.l.b16 %v58
    %v101 = vunpack.c.l.b16 %v59
    %v102 = vpack.c.b16 %v99, %v98
    %v103 = vpack.c.b16 %v101, %v100
    %v114 = vunpack.c.l.b16 %v60
    %v115 = vunpack.c.h.b16 %v60
    %v116 = vunpack.c.l.b16 %v61
    %v117 = vunpack.c.h.b16 %v61
    %v118 = vunpack.c.l.b16 %v62
    %v119 = vunpack.c.h.b16 %v62
    %v120 = vunpack.c.l.b16 %v63
    %v121 = vunpack.c.h.b16 %v63
    %v122 = vunpack.c.l.b16 %v64
    %v123 = vunpack.c.h.b16 %v64
    %v124 = vunpack.c.l.b16 %v65
    %v125 = vunpack.c.h.b16 %v65
    %v126 = vunpack.c.l.b16 %v66
    %v127 = vunpack.c.h.b16 %v66
    %v128 = vunpack.c.l.b16 %v67
    %v129 = vunpack.c.h.b16 %v67
    %v130 = vunpack.c.l.b16 %v68
    %v131 = vunpack.c.h.b16 %v68
    %v132 = vunpack.c.l.b16 %v69
    %v133 = vunpack.c.h.b16 %v69
    %v134 = vpack.c.b16 %v118, %v114
    %v135 = vpack.c.b16 %v119, %v115
    %v136 = vpack.c.b16 %v120, %v116
    %v137 = vpack.c.b16 %v121, %v117
    %v138 = vpack.c.b16 %v126, %v122
    %v139 = vpack.c.b16 %v127, %v123
    %v140 = vpack.c.b16 %v128, %v124
    %v141 = vpack.c.b16 %v129, %v125
    %v142 = vpack.c.b16 %v130, %v130
    %v143 = vpack.c.b16 %v131, %v131
    %v144 = vpack.c.b16 %v132, %v132
    %v145 = vpack.c.b16 %v133, %v133
    %vm154 = vcmask 326656
    %v156 = vsel %vm154, %v102, 0
    %v159 = vsel %vm154, %v103, 0
    %vm161 = vcmask 1043456
    %v163 = vsel %vm161, %v142, 0
    %v166 = vsel %vm161, %v143, 0
    %v169 = vsel %vm161, %v144, 0
    %v172 = vsel %vm161, %v145, 0
    %174 = vmatprep.subr.bf16.mxu0 %v135
    %175 = vmatpush1.bf16.msra.mxu0 %v134
    %176 = vmatprep.subr.bf16.mxu0 %v139
    %177 = vmatpush1.bf16.msra.mxu0 %v138
    %178 = vmatprep.subr.bf16.mxu0 %v166
    %179 = vmatpush1.bf16.msra.mxu0 %v163
    %180 = vmatprep.subr.bf16.mxu0 0
    %181 = vmatpush1.bf16.msra.mxu0 0
    %182 = vmatprep.subr.bf16.mxu0 0
    %183 = vmatpush1.bf16.msra.mxu0 0
    %184 = vmatprep.subr.bf16.mxu0 0
    %185 = vmatpush1.bf16.msra.mxu0 0
    %186 = vmatprep.subr.bf16.mxu0 0
    %187 = vmatpush1.bf16.msra.mxu0 0
    %188 = vmatprep.subr.bf16.mxu0 0
    %189 = vmatpush1.bf16.msra.mxu0 0
    %190 = vmatprep.subr.bf16.mxu0 0
    %191 = vmatpush1.bf16.msra.mxu0 0
    %192 = vmatprep.subr.bf16.mxu0 0
    %193 = vmatpush1.bf16.msra.mxu0 0
    %194 = vmatprep.subr.bf16.mxu0 0
    %195 = vmatpush1.bf16.msra.mxu0 0
    %196 = vmatprep.subr.bf16.mxu0 0
    %197 = vmatpush1.bf16.msra.mxu0 0
    %198 = vmatprep.subr.bf16.mxu0 0
    %199 = vmatpush1.bf16.msra.mxu0 0
    %200 = vmatprep.subr.bf16.mxu0 0
    %201 = vmatpush1.bf16.msra.mxu0 0
    %202 = vmatprep.subr.bf16.mxu0 0
    %203 = vmatpush1.bf16.msra.mxu0 0
    %204 = vmatprep.subr.bf16.mxu0 0
    %205 = vmatpush1.bf16.msra.mxu0 0
    %206 = vmatprep.mubr.bf16.mxu0 0
    %207 = vmatmul.mubr.bf16.gmra.mrb[0].mxu0 %v156
    %v208 = vpop.f32.mrb[0].mxu0
    %v209 = vadd.f32 %v77, %v208
    %v210 = vpop.f32.mrb[0].mxu0
    %v211 = vadd.f32 %v77, %v210
    %v212 = vpop.f32.mrb[0].mxu0
    %v213 = vadd.f32 %v82, %v212
    %v214 = vpop.f32.mrb[0].mxu0
    %v215 = vadd.f32 %v82, %v214
    %216 = vmatprep.mubr.bf16.mxu0 0
    %217 = vmatmul.mubr.bf16.gmra.mrb[0].mxu0 %v159
    %v218 = vpop.f32.mrb[0].mxu0
    %v219 = vadd.f32 %v87, %v218
    %v220 = vpop.f32.mrb[0].mxu0
    %v221 = vadd.f32 %v87, %v220
    %v222 = vpop.f32.mrb[0].mxu0
    %v223 = vadd.f32 %v92, %v222
    %v224 = vpop.f32.mrb[0].mxu0
    %v225 = vadd.f32 %v92, %v224
    %226 = vdwg.mxu0
    %227 = vmatprep.subr.bf16.mxu0 %v137
    %228 = vmatpush1.bf16.msra.mxu0 %v136
    %229 = vmatprep.subr.bf16.mxu0 %v141
    %230 = vmatpush1.bf16.msra.mxu0 %v140
    %231 = vmatprep.subr.bf16.mxu0 %v172
    %232 = vmatpush1.bf16.msra.mxu0 %v169
    %233 = vmatprep.subr.bf16.mxu0 0
    %234 = vmatpush1.bf16.msra.mxu0 0
    %235 = vmatprep.subr.bf16.mxu0 0
    %236 = vmatpush1.bf16.msra.mxu0 0
    %237 = vmatprep.subr.bf16.mxu0 0
    %238 = vmatpush1.bf16.msra.mxu0 0
    %239 = vmatprep.subr.bf16.mxu0 0
    %240 = vmatpush1.bf16.msra.mxu0 0
    %241 = vmatprep.subr.bf16.mxu0 0
    %242 = vmatpush1.bf16.msra.mxu0 0
    %243 = vmatprep.subr.bf16.mxu0 0
    %244 = vmatpush1.bf16.msra.mxu0 0
    %245 = vmatprep.subr.bf16.mxu0 0
    %246 = vmatpush1.bf16.msra.mxu0 0
    %247 = vmatprep.subr.bf16.mxu0 0
    %248 = vmatpush1.bf16.msra.mxu0 0
    %249 = vmatprep.subr.bf16.mxu0 0
    %250 = vmatpush1.bf16.msra.mxu0 0
    %251 = vmatprep.subr.bf16.mxu0 0
    %252 = vmatpush1.bf16.msra.mxu0 0
    %253 = vmatprep.subr.bf16.mxu0 0
    %254 = vmatpush1.bf16.msra.mxu0 0
    %255 = vmatprep.subr.bf16.mxu0 0
    %256 = vmatpush1.bf16.msra.mxu0 0
    %257 = vmatprep.subr.bf16.mxu0 0
    %258 = vmatpush1.bf16.msra.mxu0 0
    %259 = vmatprep.mubr.bf16.mxu0 0
    %260 = vmatmul.mubr.bf16.gmra.mrb[0].mxu0 %v156
    %v261 = vpop.f32.mrb[0].mxu0
    %v262 = vadd.f32 %v77, %v261
    %v263 = vpop.f32.mrb[0].mxu0
    %v264 = vadd.f32 %v77, %v263
    %v265 = vpop.f32.mrb[0].mxu0
    %v266 = vadd.f32 %v82, %v265
    %v267 = vpop.f32.mrb[0].mxu0
    %v268 = vadd.f32 %v82, %v267
    %269 = vmatprep.mubr.bf16.mxu0 0
    %270 = vmatmul.mubr.bf16.gmra.mrb[0].mxu0 %v159
    %v271 = vpop.f32.mrb[0].mxu0
    %v272 = vadd.f32 %v87, %v271
    %v273 = vpop.f32.mrb[0].mxu0
    %v274 = vadd.f32 %v87, %v273
    %v275 = vpop.f32.mrb[0].mxu0
    %v276 = vadd.f32 %v92, %v275
    %v277 = vpop.f32.mrb[0].mxu0
    %v278 = vadd.f32 %v92, %v277
    %279 = vdwg.mxu0
    %v280 = vmax.f32 %v209, 0.0
    %v281 = vmax.f32 %v211, 0.0
    %v282 = vmax.f32 %v262, 0.0
    %v283 = vmax.f32 %v264, 0.0
    %v284 = vmax.f32 %v213, 0.0
    %v285 = vmax.f32 %v215, 0.0
    %v286 = vmax.f32 %v266, 0.0
    %v287 = vmax.f32 %v268, 0.0
    %v288 = vmax.f32 %v219, 0.0
    %v289 = vmax.f32 %v221, 0.0
    %v290 = vmax.f32 %v272, 0.0
    %v291 = vmax.f32 %v274, 0.0
    %v292 = vmax.f32 %v223, 0.0
    %v293 = vmax.f32 %v225, 0.0
    %v294 = vmax.f32 %v276, 0.0
    %v295 = vmax.f32 %v278, 0.0
    %v296 = vcombine.high %v280, 0.0
    %v298 = vunpack.c.l.s4 1983009808
    %v299 = vunpack.c.0.s8 %v298
    %v300 = vlaneseq
    %v301 = vshrl.u32 %v300, 7
    %v302 = vsub.s32 %v299, %v301
    %v303 = vrot.slane %v280, %v302
    %v305 = vunpack.c.l.s4 1983009808
    %v306 = vunpack.c.0.s8 %v305
    %v307 = vlaneseq
    %v308 = vshrl.u32 %v307, 7
    %v309 = vsub.s32 %v306, %v308
    %v310 = vrot.slane %v296, %v309
    %v311 = vcombine.high %v282, 0.0
    %v313 = vunpack.c.l.s4 1983009808
    %v314 = vunpack.c.0.s8 %v313
    %v315 = vlaneseq
    %v316 = vshrl.u32 %v315, 7
    %v317 = vsub.s32 %v314, %v316
    %v318 = vrot.slane %v282, %v317
    %v320 = vunpack.c.l.s4 1983009808
    %v321 = vunpack.c.0.s8 %v320
    %v322 = vlaneseq
    %v323 = vshrl.u32 %v322, 7
    %v324 = vsub.s32 %v321, %v323
    %v325 = vrot.slane %v311, %v324
    %v326 = vcombine.low %v303, %v318
    %v327 = vcombine.high %v303, %v318
    %v329 = vunpack.c.l.s4 1934713408
    %v330 = vunpack.c.0.s8 %v329
    %v331 = vlaneseq
    %v332 = vshrl.u32 %v331, 7
    %v333 = vsub.s32 %v330, %v332
    %v334 = vrot.slane %v326, %v333
    %v336 = vunpack.c.l.s4 1934713408
    %v337 = vunpack.c.0.s8 %v336
    %v338 = vlaneseq
    %v339 = vshrl.u32 %v338, 7
    %v340 = vsub.s32 %v337, %v339
    %v341 = vrot.slane %v327, %v340
    %v342 = vcombine.low %v310, %v325
    %v343 = vcombine.high %v310, %v325
    %v345 = vunpack.c.l.s4 1934713408
    %v346 = vunpack.c.0.s8 %v345
    %v347 = vlaneseq
    %v348 = vshrl.u32 %v347, 7
    %v349 = vsub.s32 %v346, %v348
    %v350 = vrot.slane %v342, %v349
    %v352 = vunpack.c.l.s4 1934713408
    %v353 = vunpack.c.0.s8 %v352
    %v354 = vlaneseq
    %v355 = vshrl.u32 %v354, 7
    %v356 = vsub.s32 %v353, %v355
    %v357 = vrot.slane %v343, %v356
    %v358 = vcombine.high %v334, 0.0
    %v359 = vcombine.high %v341, 0.0
    %v360 = vcombine.high %v350, 0.0
    %v361 = vcombine.high %v357, 0.0
    %v362 = vcombine.high %v284, 0.0
    %v364 = vunpack.c.l.s4 1983009808
    %v365 = vunpack.c.0.s8 %v364
    %v366 = vlaneseq
    %v367 = vshrl.u32 %v366, 7
    %v368 = vsub.s32 %v365, %v367
    %v369 = vrot.slane %v284, %v368
    %v371 = vunpack.c.l.s4 1983009808
    %v372 = vunpack.c.0.s8 %v371
    %v373 = vlaneseq
    %v374 = vshrl.u32 %v373, 7
    %v375 = vsub.s32 %v372, %v374
    %v376 = vrot.slane %v362, %v375
    %v377 = vcombine.high %v286, 0.0
    %v379 = vunpack.c.l.s4 1983009808
    %v380 = vunpack.c.0.s8 %v379
    %v381 = vlaneseq
    %v382 = vshrl.u32 %v381, 7
    %v383 = vsub.s32 %v380, %v382
    %v384 = vrot.slane %v286, %v383
    %v386 = vunpack.c.l.s4 1983009808
    %v387 = vunpack.c.0.s8 %v386
    %v388 = vlaneseq
    %v389 = vshrl.u32 %v388, 7
    %v390 = vsub.s32 %v387, %v389
    %v391 = vrot.slane %v377, %v390
    %v392 = vcombine.low %v369, %v384
    %v393 = vcombine.high %v369, %v384
    %v395 = vunpack.c.l.s4 1934713408
    %v396 = vunpack.c.0.s8 %v395
    %v397 = vlaneseq
    %v398 = vshrl.u32 %v397, 7
    %v399 = vsub.s32 %v396, %v398
    %v400 = vrot.slane %v392, %v399
    %v402 = vunpack.c.l.s4 1934713408
    %v403 = vunpack.c.0.s8 %v402
    %v404 = vlaneseq
    %v405 = vshrl.u32 %v404, 7
    %v406 = vsub.s32 %v403, %v405
    %v407 = vrot.slane %v393, %v406
    %v408 = vcombine.low %v376, %v391
    %v409 = vcombine.high %v376, %v391
    %v411 = vunpack.c.l.s4 1934713408
    %v412 = vunpack.c.0.s8 %v411
    %v413 = vlaneseq
    %v414 = vshrl.u32 %v413, 7
    %v415 = vsub.s32 %v412, %v414
    %v416 = vrot.slane %v408, %v415
    %v418 = vunpack.c.l.s4 1934713408
    %v419 = vunpack.c.0.s8 %v418
    %v420 = vlaneseq
    %v421 = vshrl.u32 %v420, 7
    %v422 = vsub.s32 %v419, %v421
    %v423 = vrot.slane %v409, %v422
    %v424 = vcombine.high %v400, 0.0
    %v425 = vcombine.high %v407, 0.0
    %v426 = vcombine.high %v416, 0.0
    %v427 = vcombine.high %v423, 0.0
    %v428 = vcombine.high %v288, 0.0
    %v430 = vunpack.c.l.s4 1983009808
    %v431 = vunpack.c.0.s8 %v430
    %v432 = vlaneseq
    %v433 = vshrl.u32 %v432, 7
    %v434 = vsub.s32 %v431, %v433
    %v435 = vrot.slane %v288, %v434
    %v437 = vunpack.c.l.s4 1983009808
    %v438 = vunpack.c.0.s8 %v437
    %v439 = vlaneseq
    %v440 = vshrl.u32 %v439, 7
    %v441 = vsub.s32 %v438, %v440
    %v442 = vrot.slane %v428, %v441
    %v443 = vcombine.high %v290, 0.0
    %v445 = vunpack.c.l.s4 1983009808
    %v446 = vunpack.c.0.s8 %v445
    %v447 = vlaneseq
    %v448 = vshrl.u32 %v447, 7
    %v449 = vsub.s32 %v446, %v448
    %v450 = vrot.slane %v290, %v449
    %v452 = vunpack.c.l.s4 1983009808
    %v453 = vunpack.c.0.s8 %v452
    %v454 = vlaneseq
    %v455 = vshrl.u32 %v454, 7
    %v456 = vsub.s32 %v453, %v455
    %v457 = vrot.slane %v443, %v456
    %v458 = vcombine.low %v435, %v450
    %v459 = vcombine.high %v435, %v450
    %v461 = vunpack.c.l.s4 1934713408
    %v462 = vunpack.c.0.s8 %v461
    %v463 = vlaneseq
    %v464 = vshrl.u32 %v463, 7
    %v465 = vsub.s32 %v462, %v464
    %v466 = vrot.slane %v458, %v465
    %v468 = vunpack.c.l.s4 1934713408
    %v469 = vunpack.c.0.s8 %v468
    %v470 = vlaneseq
    %v471 = vshrl.u32 %v470, 7
    %v472 = vsub.s32 %v469, %v471
    %v473 = vrot.slane %v459, %v472
    %v474 = vcombine.low %v442, %v457
    %v475 = vcombine.high %v442, %v457
    %v477 = vunpack.c.l.s4 1934713408
    %v478 = vunpack.c.0.s8 %v477
    %v479 = vlaneseq
    %v480 = vshrl.u32 %v479, 7
    %v481 = vsub.s32 %v478, %v480
    %v482 = vrot.slane %v474, %v481
    %v484 = vunpack.c.l.s4 1934713408
    %v485 = vunpack.c.0.s8 %v484
    %v486 = vlaneseq
    %v487 = vshrl.u32 %v486, 7
    %v488 = vsub.s32 %v485, %v487
    %v489 = vrot.slane %v475, %v488
    %v490 = vcombine.high %v466, 0.0
    %v491 = vcombine.high %v473, 0.0
    %v492 = vcombine.high %v482, 0.0
    %v493 = vcombine.high %v489, 0.0
    %v494 = vcombine.high %v292, 0.0
    %v496 = vunpack.c.l.s4 1983009808
    %v497 = vunpack.c.0.s8 %v496
    %v498 = vlaneseq
    %v499 = vshrl.u32 %v498, 7
    %v500 = vsub.s32 %v497, %v499
    %v501 = vrot.slane %v292, %v500
    %v503 = vunpack.c.l.s4 1983009808
    %v504 = vunpack.c.0.s8 %v503
    %v505 = vlaneseq
    %v506 = vshrl.u32 %v505, 7
    %v507 = vsub.s32 %v504, %v506
    %v508 = vrot.slane %v494, %v507
    %v509 = vcombine.high %v294, 0.0
    %v511 = vunpack.c.l.s4 1983009808
    %v512 = vunpack.c.0.s8 %v511
    %v513 = vlaneseq
    %v514 = vshrl.u32 %v513, 7
    %v515 = vsub.s32 %v512, %v514
    %v516 = vrot.slane %v294, %v515
    %v518 = vunpack.c.l.s4 1983009808
    %v519 = vunpack.c.0.s8 %v518
    %v520 = vlaneseq
    %v521 = vshrl.u32 %v520, 7
    %v522 = vsub.s32 %v519, %v521
    %v523 = vrot.slane %v509, %v522
    %v524 = vcombine.low %v501, %v516
    %v525 = vcombine.high %v501, %v516
    %v527 = vunpack.c.l.s4 1934713408
    %v528 = vunpack.c.0.s8 %v527
    %v529 = vlaneseq
    %v530 = vshrl.u32 %v529, 7
    %v531 = vsub.s32 %v528, %v530
    %v532 = vrot.slane %v524, %v531
    %v534 = vunpack.c.l.s4 1934713408
    %v535 = vunpack.c.0.s8 %v534
    %v536 = vlaneseq
    %v537 = vshrl.u32 %v536, 7
    %v538 = vsub.s32 %v535, %v537
    %v539 = vrot.slane %v525, %v538
    %v540 = vcombine.low %v508, %v523
    %v541 = vcombine.high %v508, %v523
    %v543 = vunpack.c.l.s4 1934713408
    %v544 = vunpack.c.0.s8 %v543
    %v545 = vlaneseq
    %v546 = vshrl.u32 %v545, 7
    %v547 = vsub.s32 %v544, %v546
    %v548 = vrot.slane %v540, %v547
    %v550 = vunpack.c.l.s4 1934713408
    %v551 = vunpack.c.0.s8 %v550
    %v552 = vlaneseq
    %v553 = vshrl.u32 %v552, 7
    %v554 = vsub.s32 %v551, %v553
    %v555 = vrot.slane %v541, %v554
    %v556 = vcombine.high %v532, 0.0
    %v557 = vcombine.high %v539, 0.0
    %v558 = vcombine.high %v548, 0.0
    %v559 = vcombine.high %v555, 0.0
    %v560 = vcombine.high %v281, 0.0
    %v562 = vunpack.c.l.s4 1983009808
    %v563 = vunpack.c.0.s8 %v562
    %v564 = vlaneseq
    %v565 = vshrl.u32 %v564, 7
    %v566 = vsub.s32 %v563, %v565
    %v567 = vrot.slane %v281, %v566
    %v569 = vunpack.c.l.s4 1983009808
    %v570 = vunpack.c.0.s8 %v569
    %v571 = vlaneseq
    %v572 = vshrl.u32 %v571, 7
    %v573 = vsub.s32 %v570, %v572
    %v574 = vrot.slane %v560, %v573
    %v575 = vcombine.high %v283, 0.0
    %v577 = vunpack.c.l.s4 1983009808
    %v578 = vunpack.c.0.s8 %v577
    %v579 = vlaneseq
    %v580 = vshrl.u32 %v579, 7
    %v581 = vsub.s32 %v578, %v580
    %v582 = vrot.slane %v283, %v581
    %v584 = vunpack.c.l.s4 1983009808
    %v585 = vunpack.c.0.s8 %v584
    %v586 = vlaneseq
    %v587 = vshrl.u32 %v586, 7
    %v588 = vsub.s32 %v585, %v587
    %v589 = vrot.slane %v575, %v588
    %v590 = vcombine.low %v567, %v582
    %v591 = vcombine.high %v567, %v582
    %v593 = vunpack.c.l.s4 1934713408
    %v594 = vunpack.c.0.s8 %v593
    %v595 = vlaneseq
    %v596 = vshrl.u32 %v595, 7
    %v597 = vsub.s32 %v594, %v596
    %v598 = vrot.slane %v590, %v597
    %v600 = vunpack.c.l.s4 1934713408
    %v601 = vunpack.c.0.s8 %v600
    %v602 = vlaneseq
    %v603 = vshrl.u32 %v602, 7
    %v604 = vsub.s32 %v601, %v603
    %v605 = vrot.slane %v591, %v604
    %v606 = vcombine.low %v574, %v589
    %v607 = vcombine.high %v574, %v589
    %v609 = vunpack.c.l.s4 1934713408
    %v610 = vunpack.c.0.s8 %v609
    %v611 = vlaneseq
    %v612 = vshrl.u32 %v611, 7
    %v613 = vsub.s32 %v610, %v612
    %v614 = vrot.slane %v606, %v613
    %v616 = vunpack.c.l.s4 1934713408
    %v617 = vunpack.c.0.s8 %v616
    %v618 = vlaneseq
    %v619 = vshrl.u32 %v618, 7
    %v620 = vsub.s32 %v617, %v619
    %v621 = vrot.slane %v607, %v620
    %v622 = vcombine.high %v598, 0.0
    %v623 = vcombine.high %v605, 0.0
    %v624 = vcombine.high %v614, 0.0
    %v625 = vcombine.high %v621, 0.0
    %v626 = vcombine.high %v285, 0.0
    %v628 = vunpack.c.l.s4 1983009808
    %v629 = vunpack.c.0.s8 %v628
    %v630 = vlaneseq
    %v631 = vshrl.u32 %v630, 7
    %v632 = vsub.s32 %v629, %v631
    %v633 = vrot.slane %v285, %v632
    %v635 = vunpack.c.l.s4 1983009808
    %v636 = vunpack.c.0.s8 %v635
    %v637 = vlaneseq
    %v638 = vshrl.u32 %v637, 7
    %v639 = vsub.s32 %v636, %v638
    %v640 = vrot.slane %v626, %v639
    %v641 = vcombine.high %v287, 0.0
    %v643 = vunpack.c.l.s4 1983009808
    %v644 = vunpack.c.0.s8 %v643
    %v645 = vlaneseq
    %v646 = vshrl.u32 %v645, 7
    %v647 = vsub.s32 %v644, %v646
    %v648 = vrot.slane %v287, %v647
    %v650 = vunpack.c.l.s4 1983009808
    %v651 = vunpack.c.0.s8 %v650
    %v652 = vlaneseq
    %v653 = vshrl.u32 %v652, 7
    %v654 = vsub.s32 %v651, %v653
    %v655 = vrot.slane %v641, %v654
    %v656 = vcombine.low %v633, %v648
    %v657 = vcombine.high %v633, %v648
    %v659 = vunpack.c.l.s4 1934713408
    %v660 = vunpack.c.0.s8 %v659
    %v661 = vlaneseq
    %v662 = vshrl.u32 %v661, 7
    %v663 = vsub.s32 %v660, %v662
    %v664 = vrot.slane %v656, %v663
    %v666 = vunpack.c.l.s4 1934713408
    %v667 = vunpack.c.0.s8 %v666
    %v668 = vlaneseq
    %v669 = vshrl.u32 %v668, 7
    %v670 = vsub.s32 %v667, %v669
    %v671 = vrot.slane %v657, %v670
    %v672 = vcombine.low %v640, %v655
    %v673 = vcombine.high %v640, %v655
    %v675 = vunpack.c.l.s4 1934713408
    %v676 = vunpack.c.0.s8 %v675
    %v677 = vlaneseq
    %v678 = vshrl.u32 %v677, 7
    %v679 = vsub.s32 %v676, %v678
    %v680 = vrot.slane %v672, %v679
    %v682 = vunpack.c.l.s4 1934713408
    %v683 = vunpack.c.0.s8 %v682
    %v684 = vlaneseq
    %v685 = vshrl.u32 %v684, 7
    %v686 = vsub.s32 %v683, %v685
    %v687 = vrot.slane %v673, %v686
    %v688 = vcombine.high %v664, 0.0
    %v689 = vcombine.high %v671, 0.0
    %v690 = vcombine.high %v680, 0.0
    %v691 = vcombine.high %v687, 0.0
    %v692 = vcombine.high %v289, 0.0
    %v694 = vunpack.c.l.s4 1983009808
    %v695 = vunpack.c.0.s8 %v694
    %v696 = vlaneseq
    %v697 = vshrl.u32 %v696, 7
    %v698 = vsub.s32 %v695, %v697
    %v699 = vrot.slane %v289, %v698
    %v701 = vunpack.c.l.s4 1983009808
    %v702 = vunpack.c.0.s8 %v701
    %v703 = vlaneseq
    %v704 = vshrl.u32 %v703, 7
    %v705 = vsub.s32 %v702, %v704
    %v706 = vrot.slane %v692, %v705
    %v707 = vcombine.high %v291, 0.0
    %v709 = vunpack.c.l.s4 1983009808
    %v710 = vunpack.c.0.s8 %v709
    %v711 = vlaneseq
    %v712 = vshrl.u32 %v711, 7
    %v713 = vsub.s32 %v710, %v712
    %v714 = vrot.slane %v291, %v713
    %v716 = vunpack.c.l.s4 1983009808
    %v717 = vunpack.c.0.s8 %v716
    %v718 = vlaneseq
    %v719 = vshrl.u32 %v718, 7
    %v720 = vsub.s32 %v717, %v719
    %v721 = vrot.slane %v707, %v720
    %v722 = vcombine.low %v699, %v714
    %v723 = vcombine.high %v699, %v714
    %v725 = vunpack.c.l.s4 1934713408
    %v726 = vunpack.c.0.s8 %v725
    %v727 = vlaneseq
    %v728 = vshrl.u32 %v727, 7
    %v729 = vsub.s32 %v726, %v728
    %v730 = vrot.slane %v722, %v729
    %v732 = vunpack.c.l.s4 1934713408
    %v733 = vunpack.c.0.s8 %v732
    %v734 = vlaneseq
    %v735 = vshrl.u32 %v734, 7
    %v736 = vsub.s32 %v733, %v735
    %v737 = vrot.slane %v723, %v736
    %v738 = vcombine.low %v706, %v721
    %v739 = vcombine.high %v706, %v721
    %v741 = vunpack.c.l.s4 1934713408
    %v742 = vunpack.c.0.s8 %v741
    %v743 = vlaneseq
    %v744 = vshrl.u32 %v743, 7
    %v745 = vsub.s32 %v742, %v744
    %v746 = vrot.slane %v738, %v745
    %v748 = vunpack.c.l.s4 1934713408
    %v749 = vunpack.c.0.s8 %v748
    %v750 = vlaneseq
    %v751 = vshrl.u32 %v750, 7
    %v752 = vsub.s32 %v749, %v751
    %v753 = vrot.slane %v739, %v752
    %v754 = vcombine.high %v730, 0.0
    %v755 = vcombine.high %v737, 0.0
    %v756 = vcombine.high %v746, 0.0
    %v757 = vcombine.high %v753, 0.0
    %v758 = vcombine.high %v293, 0.0
    %v760 = vunpack.c.l.s4 1983009808
    %v761 = vunpack.c.0.s8 %v760
    %v762 = vlaneseq
    %v763 = vshrl.u32 %v762, 7
    %v764 = vsub.s32 %v761, %v763
    %v765 = vrot.slane %v293, %v764
    %v767 = vunpack.c.l.s4 1983009808
    %v768 = vunpack.c.0.s8 %v767
    %v769 = vlaneseq
    %v770 = vshrl.u32 %v769, 7
    %v771 = vsub.s32 %v768, %v770
    %v772 = vrot.slane %v758, %v771
    %v773 = vcombine.high %v295, 0.0
    %v775 = vunpack.c.l.s4 1983009808
    %v776 = vunpack.c.0.s8 %v775
    %v777 = vlaneseq
    %v778 = vshrl.u32 %v777, 7
    %v779 = vsub.s32 %v776, %v778
    %v780 = vrot.slane %v295, %v779
    %v782 = vunpack.c.l.s4 1983009808
    %v783 = vunpack.c.0.s8 %v782
    %v784 = vlaneseq
    %v785 = vshrl.u32 %v784, 7
    %v786 = vsub.s32 %v783, %v785
    %v787 = vrot.slane %v773, %v786
    %v788 = vcombine.low %v765, %v780
    %v789 = vcombine.high %v765, %v780
    %v791 = vunpack.c.l.s4 1934713408
    %v792 = vunpack.c.0.s8 %v791
    %v793 = vlaneseq
    %v794 = vshrl.u32 %v793, 7
    %v795 = vsub.s32 %v792, %v794
    %v796 = vrot.slane %v788, %v795
    %v798 = vunpack.c.l.s4 1934713408
    %v799 = vunpack.c.0.s8 %v798
    %v800 = vlaneseq
    %v801 = vshrl.u32 %v800, 7
    %v802 = vsub.s32 %v799, %v801
    %v803 = vrot.slane %v789, %v802
    %v804 = vcombine.low %v772, %v787
    %v805 = vcombine.high %v772, %v787
    %v807 = vunpack.c.l.s4 1934713408
    %v808 = vunpack.c.0.s8 %v807
    %v809 = vlaneseq
    %v810 = vshrl.u32 %v809, 7
    %v811 = vsub.s32 %v808, %v810
    %v812 = vrot.slane %v804, %v811
    %v814 = vunpack.c.l.s4 1934713408
    %v815 = vunpack.c.0.s8 %v814
    %v816 = vlaneseq
    %v817 = vshrl.u32 %v816, 7
    %v818 = vsub.s32 %v815, %v817
    %v819 = vrot.slane %v805, %v818
    %v820 = vcombine.high %v796, 0.0
    %v821 = vcombine.high %v803, 0.0
    %v822 = vcombine.high %v812, 0.0
    %v823 = vcombine.high %v819, 0.0
    %vm824 = vcmask 1041408
    %v825 = vsel %vm824, %v334, 0.0
    %v826 = vsel %vm824, %v598, 0.0
    %v827 = vadd.f32 %v825, %v826
    %828 = vadd.xlane.f32.xlu0 %v827
    %v829 = vpop.xlane.xlu0 %828
    %v830 = vsel %vm824, %v358, 0.0
    %v831 = vsel %vm824, %v622, 0.0
    %v832 = vadd.f32 %v830, %v831
    %833 = vadd.xlane.f32.xlu0 %v832
    %v834 = vpop.xlane.xlu0 %833
    %v835 = vsel %vm824, %v341, 0.0
    %v836 = vsel %vm824, %v605, 0.0
    %v837 = vadd.f32 %v835, %v836
    %838 = vadd.xlane.f32.xlu0 %v837
    %v839 = vpop.xlane.xlu0 %838
    %v840 = vsel %vm824, %v359, 0.0
    %v841 = vsel %vm824, %v623, 0.0
    %v842 = vadd.f32 %v840, %v841
    %843 = vadd.xlane.f32.xlu0 %v842
    %v844 = vpop.xlane.xlu0 %843
    %v845 = vsel %vm824, %v350, 0.0
    %v846 = vsel %vm824, %v614, 0.0
    %v847 = vadd.f32 %v845, %v846
    %848 = vadd.xlane.f32.xlu0 %v847
    %v849 = vpop.xlane.xlu0 %848
    %v850 = vsel %vm824, %v360, 0.0
    %v851 = vsel %vm824, %v624, 0.0
    %v852 = vadd.f32 %v850, %v851
    %853 = vadd.xlane.f32.xlu0 %v852
    %v854 = vpop.xlane.xlu0 %853
    %v855 = vsel %vm824, %v357, 0.0
    %v856 = vsel %vm824, %v621, 0.0
    %v857 = vadd.f32 %v855, %v856
    %858 = vadd.xlane.f32.xlu0 %v857
    %v859 = vpop.xlane.xlu0 %858
    %v860 = vsel %vm824, %v361, 0.0
    %v861 = vsel %vm824, %v625, 0.0
    %v862 = vadd.f32 %v860, %v861
    %863 = vadd.xlane.f32.xlu0 %v862
    %v864 = vpop.xlane.xlu0 %863
    %v865 = vsel %vm824, %v400, 0.0
    %v866 = vsel %vm824, %v664, 0.0
    %v867 = vadd.f32 %v865, %v866
    %868 = vadd.xlane.f32.xlu0 %v867
    %v869 = vpop.xlane.xlu0 %868
    %v870 = vsel %vm824, %v424, 0.0
    %v871 = vsel %vm824, %v688, 0.0
    %v872 = vadd.f32 %v870, %v871
    %873 = vadd.xlane.f32.xlu0 %v872
    %v874 = vpop.xlane.xlu0 %873
    %v875 = vsel %vm824, %v407, 0.0
    %v876 = vsel %vm824, %v671, 0.0
    %v877 = vadd.f32 %v875, %v876
    %878 = vadd.xlane.f32.xlu0 %v877
    %v879 = vpop.xlane.xlu0 %878
    %v880 = vsel %vm824, %v425, 0.0
    %v881 = vsel %vm824, %v689, 0.0
    %v882 = vadd.f32 %v880, %v881
    %883 = vadd.xlane.f32.xlu0 %v882
    %v884 = vpop.xlane.xlu0 %883
    %v885 = vsel %vm824, %v416, 0.0
    %v886 = vsel %vm824, %v680, 0.0
    %v887 = vadd.f32 %v885, %v886
    %888 = vadd.xlane.f32.xlu0 %v887
    %v889 = vpop.xlane.xlu0 %888
    %v890 = vsel %vm824, %v426, 0.0
    %v891 = vsel %vm824, %v690, 0.0
    %v892 = vadd.f32 %v890, %v891
    %893 = vadd.xlane.f32.xlu0 %v892
    %v894 = vpop.xlane.xlu0 %893
    %v895 = vsel %vm824, %v423, 0.0
    %v896 = vsel %vm824, %v687, 0.0
    %v897 = vadd.f32 %v895, %v896
    %898 = vadd.xlane.f32.xlu0 %v897
    %v899 = vpop.xlane.xlu0 %898
    %v900 = vsel %vm824, %v427, 0.0
    %v901 = vsel %vm824, %v691, 0.0
    %v902 = vadd.f32 %v900, %v901
    %903 = vadd.xlane.f32.xlu0 %v902
    %v904 = vpop.xlane.xlu0 %903
    %v905 = vsel %vm824, %v466, 0.0
    %v906 = vsel %vm824, %v730, 0.0
    %v907 = vadd.f32 %v905, %v906
    %908 = vadd.xlane.f32.xlu0 %v907
    %v909 = vpop.xlane.xlu0 %908
    %v910 = vsel %vm824, %v490, 0.0
    %v911 = vsel %vm824, %v754, 0.0
    %v912 = vadd.f32 %v910, %v911
    %913 = vadd.xlane.f32.xlu0 %v912
    %v914 = vpop.xlane.xlu0 %913
    %v915 = vsel %vm824, %v473, 0.0
    %v916 = vsel %vm824, %v737, 0.0
    %v917 = vadd.f32 %v915, %v916
    %918 = vadd.xlane.f32.xlu0 %v917
    %v919 = vpop.xlane.xlu0 %918
    %v920 = vsel %vm824, %v491, 0.0
    %v921 = vsel %vm824, %v755, 0.0
    %v922 = vadd.f32 %v920, %v921
    %923 = vadd.xlane.f32.xlu0 %v922
    %v924 = vpop.xlane.xlu0 %923
    %v925 = vsel %vm824, %v482, 0.0
    %v926 = vsel %vm824, %v746, 0.0
    %v927 = vadd.f32 %v925, %v926
    %928 = vadd.xlane.f32.xlu0 %v927
    %v929 = vpop.xlane.xlu0 %928
    %v930 = vsel %vm824, %v492, 0.0
    %v931 = vsel %vm824, %v756, 0.0
    %v932 = vadd.f32 %v930, %v931
    %933 = vadd.xlane.f32.xlu0 %v932
    %v934 = vpop.xlane.xlu0 %933
    %v935 = vsel %vm824, %v489, 0.0
    %v936 = vsel %vm824, %v753, 0.0
    %v937 = vadd.f32 %v935, %v936
    %938 = vadd.xlane.f32.xlu0 %v937
    %v939 = vpop.xlane.xlu0 %938
    %v940 = vsel %vm824, %v493, 0.0
    %v941 = vsel %vm824, %v757, 0.0
    %v942 = vadd.f32 %v940, %v941
    %943 = vadd.xlane.f32.xlu0 %v942
    %v944 = vpop.xlane.xlu0 %943
    %v945 = vsel %vm824, %v532, 0.0
    %v946 = vsel %vm824, %v796, 0.0
    %v947 = vadd.f32 %v945, %v946
    %948 = vadd.xlane.f32.xlu0 %v947
    %v949 = vpop.xlane.xlu0 %948
    %v950 = vsel %vm824, %v556, 0.0
    %v951 = vsel %vm824, %v820, 0.0
    %v952 = vadd.f32 %v950, %v951
    %953 = vadd.xlane.f32.xlu0 %v952
    %v954 = vpop.xlane.xlu0 %953
    %v955 = vsel %vm824, %v539, 0.0
    %v956 = vsel %vm824, %v803, 0.0
    %v957 = vadd.f32 %v955, %v956
    %958 = vadd.xlane.f32.xlu0 %v957
    %v959 = vpop.xlane.xlu0 %958
    %v960 = vsel %vm824, %v557, 0.0
    %v961 = vsel %vm824, %v821, 0.0
    %v962 = vadd.f32 %v960, %v961
    %963 = vadd.xlane.f32.xlu0 %v962
    %v964 = vpop.xlane.xlu0 %963
    %v965 = vsel %vm824, %v548, 0.0
    %v966 = vsel %vm824, %v812, 0.0
    %v967 = vadd.f32 %v965, %v966
    %968 = vadd.xlane.f32.xlu0 %v967
    %v969 = vpop.xlane.xlu0 %968
    %v970 = vsel %vm824, %v558, 0.0
    %v971 = vsel %vm824, %v822, 0.0
    %v972 = vadd.f32 %v970, %v971
    %973 = vadd.xlane.f32.xlu0 %v972
    %v974 = vpop.xlane.xlu0 %973
    %v975 = vsel %vm824, %v555, 0.0
    %v976 = vsel %vm824, %v819, 0.0
    %v977 = vadd.f32 %v975, %v976
    %978 = vadd.xlane.f32.xlu0 %v977
    %v979 = vpop.xlane.xlu0 %978
    %v980 = vsel %vm824, %v559, 0.0
    %v981 = vsel %vm824, %v823, 0.0
    %v982 = vadd.f32 %v980, %v981
    %983 = vadd.xlane.f32.xlu0 %v982
    %v984 = vpop.xlane.xlu0 %983
    %v985 = vrcp.pop 256.0
    %v986 = vmul.f32 %v829, %v985
    %v987 = vmul.f32 %v834, %v985
    %v988 = vmul.f32 %v839, %v985
    %v989 = vmul.f32 %v844, %v985
    %v990 = vmul.f32 %v849, %v985
    %v991 = vmul.f32 %v854, %v985
    %v992 = vmul.f32 %v859, %v985
    %v993 = vmul.f32 %v864, %v985
    %v994 = vmul.f32 %v869, %v985
    %v995 = vmul.f32 %v874, %v985
    %v996 = vmul.f32 %v879, %v985
    %v997 = vmul.f32 %v884, %v985
    %v998 = vmul.f32 %v889, %v985
    %v999 = vmul.f32 %v894, %v985
    %v1000 = vmul.f32 %v899, %v985
    %v1001 = vmul.f32 %v904, %v985
    %v1002 = vmul.f32 %v909, %v985
    %v1003 = vmul.f32 %v914, %v985
    %v1004 = vmul.f32 %v919, %v985
    %v1005 = vmul.f32 %v924, %v985
    %v1006 = vmul.f32 %v929, %v985
    %v1007 = vmul.f32 %v934, %v985
    %v1008 = vmul.f32 %v939, %v985
    %v1009 = vmul.f32 %v944, %v985
    %v1010 = vmul.f32 %v949, %v985
    %v1011 = vmul.f32 %v954, %v985
    %v1012 = vmul.f32 %v959, %v985
    %v1013 = vmul.f32 %v964, %v985
    %v1014 = vmul.f32 %v969, %v985
    %v1015 = vmul.f32 %v974, %v985
    %v1016 = vmul.f32 %v979, %v985
    %v1017 = vmul.f32 %v984, %v985
    %v1018 = vld [vmem:[%s4] sm:$0xff]
    %v1019 = vld [vmem:[%s4 + $0x8] sm:$0xff]
    %v1020 = vld [vmem:[%s4 + $0x10] sm:$0xff]
    %v1021 = vld [vmem:[%s4 + $0x18] sm:$0xff]
    %v1022 = vld [vmem:[%s4 + $0x20] sm:$0xff]
    %v1023 = vld [vmem:[%s4 + $0x28] sm:$0xff]
    %v1024 = vld [vmem:[%s4 + $0x30] sm:$0xff]
    %v1025 = vld [vmem:[%s4 + $0x38] sm:$0xff]
    %v1026 = vld [vmem:[%s4 + $0x40] sm:$0xff]
    %v1027 = vld [vmem:[%s4 + $0x48] sm:$0xff]
    %v1028 = vld [vmem:[%s4 + $0x50] sm:$0xff]
    %v1029 = vld [vmem:[%s4 + $0x58] sm:$0xff]
    %v1030 = vld [vmem:[%s4 + $0x60] sm:$0xff]
    %v1031 = vld [vmem:[%s4 + $0x68] sm:$0xff]
    %v1032 = vld [vmem:[%s4 + $0x70] sm:$0xff]
    %v1033 = vld [vmem:[%s4 + $0x78] sm:$0xff]
    %v1034 = vpack.c.bf16 %v986, %v986
    %v1035 = vpack.c.bf16 %v987, %v987
    %v1036 = vpack.c.bf16 %v988, %v988
    %v1037 = vpack.c.bf16 %v989, %v989
    %v1038 = vpack.c.bf16 %v990, %v990
    %v1039 = vpack.c.bf16 %v991, %v991
    %v1040 = vpack.c.bf16 %v992, %v992
    %v1041 = vpack.c.bf16 %v993, %v993
    %v1042 = vpack.c.bf16 %v994, %v994
    %v1043 = vpack.c.bf16 %v995, %v995
    %v1044 = vpack.c.bf16 %v996, %v996
    %v1045 = vpack.c.bf16 %v997, %v997
    %v1046 = vpack.c.bf16 %v998, %v998
    %v1047 = vpack.c.bf16 %v999, %v999
    %v1048 = vpack.c.bf16 %v1000, %v1000
    %v1049 = vpack.c.bf16 %v1001, %v1001
    %v1050 = vpack.c.bf16 %v1002, %v1002
    %v1051 = vpack.c.bf16 %v1003, %v1003
    %v1052 = vpack.c.bf16 %v1004, %v1004
    %v1053 = vpack.c.bf16 %v1005, %v1005
    %v1054 = vpack.c.bf16 %v1006, %v1006
    %v1055 = vpack.c.bf16 %v1007, %v1007
    %v1056 = vpack.c.bf16 %v1008, %v1008
    %v1057 = vpack.c.bf16 %v1009, %v1009
    %v1058 = vpack.c.bf16 %v1010, %v1010
    %v1059 = vpack.c.bf16 %v1011, %v1011
    %v1060 = vpack.c.bf16 %v1012, %v1012
    %v1061 = vpack.c.bf16 %v1013, %v1013
    %v1062 = vpack.c.bf16 %v1014, %v1014
    %v1063 = vpack.c.bf16 %v1015, %v1015
    %v1064 = vpack.c.bf16 %v1016, %v1016
    %v1065 = vpack.c.bf16 %v1017, %v1017
    %v1066 = vld [vmem:[%s5] sm:$0xff]
    %v1068 = vlaneseq
    %v1069 = vshrl.u32 %v1068, 7
    %v1070 = vsub.s32 0, %v1069
    %v1071 = vrot.slane %v1066, %v1070
    %v1072 = vlaneseq
    %v1073 = vshrl.u32 %v1072, 7
    %v1074 = vsub.s32 1, %v1073
    %v1075 = vrot.slane %v1066, %v1074
    %v1076 = vlaneseq
    %v1077 = vshrl.u32 %v1076, 7
    %v1078 = vsub.s32 2, %v1077
    %v1079 = vrot.slane %v1066, %v1078
    %v1080 = vlaneseq
    %v1081 = vshrl.u32 %v1080, 7
    %v1082 = vsub.s32 3, %v1081
    %v1083 = vrot.slane %v1066, %v1082
    %v1084 = vlaneseq
    %v1085 = vshrl.u32 %v1084, 7
    %v1086 = vsub.s32 4, %v1085
    %v1087 = vrot.slane %v1066, %v1086
    %v1088 = vlaneseq
    %v1089 = vshrl.u32 %v1088, 7
    %v1090 = vsub.s32 5, %v1089
    %v1091 = vrot.slane %v1066, %v1090
    %v1092 = vlaneseq
    %v1093 = vshrl.u32 %v1092, 7
    %v1094 = vsub.s32 6, %v1093
    %v1095 = vrot.slane %v1066, %v1094
    %v1096 = vlaneseq
    %v1097 = vshrl.u32 %v1096, 7
    %v1098 = vsub.s32 7, %v1097
    %v1099 = vrot.slane %v1066, %v1098
    %v1140 = vunpack.c.l.b16 %v1034
    %v1141 = vunpack.c.l.b16 %v1035
    %v1142 = vunpack.c.l.b16 %v1036
    %v1143 = vunpack.c.l.b16 %v1037
    %v1144 = vunpack.c.l.b16 %v1038
    %v1145 = vunpack.c.l.b16 %v1039
    %v1146 = vunpack.c.l.b16 %v1040
    %v1147 = vunpack.c.l.b16 %v1041
    %v1148 = vunpack.c.l.b16 %v1042
    %v1149 = vunpack.c.l.b16 %v1043
    %v1150 = vunpack.c.l.b16 %v1044
    %v1151 = vunpack.c.l.b16 %v1045
    %v1152 = vunpack.c.l.b16 %v1046
    %v1153 = vunpack.c.l.b16 %v1047
    %v1154 = vunpack.c.l.b16 %v1048
    %v1155 = vunpack.c.l.b16 %v1049
    %v1156 = vunpack.c.l.b16 %v1050
    %v1157 = vunpack.c.l.b16 %v1051
    %v1158 = vunpack.c.l.b16 %v1052
    %v1159 = vunpack.c.l.b16 %v1053
    %v1160 = vunpack.c.l.b16 %v1054
    %v1161 = vunpack.c.l.b16 %v1055
    %v1162 = vunpack.c.l.b16 %v1056
    %v1163 = vunpack.c.l.b16 %v1057
    %v1164 = vunpack.c.l.b16 %v1058
    %v1165 = vunpack.c.l.b16 %v1059
    %v1166 = vunpack.c.l.b16 %v1060
    %v1167 = vunpack.c.l.b16 %v1061
    %v1168 = vunpack.c.l.b16 %v1062
    %v1169 = vunpack.c.l.b16 %v1063
    %v1170 = vunpack.c.l.b16 %v1064
    %v1171 = vunpack.c.l.b16 %v1065
    %v1172 = vlaneseq
    %v1173 = vand.u32 %v1172, 127
    %v1174 = vlaneseq
    %v1175 = vshrl.u32 %v1174, 7
    %v1176 = vsub.s32 %v1173, %v1175
    %v1177 = vrot.slane %v1140, %v1176
    %v1178 = vlaneseq
    %v1179 = vshrl.u32 %v1178, 7
    %v1180 = vsub.s32 %v1173, %v1179
    %v1181 = vrot.slane %v1141, %v1180
    %v1182 = vlaneseq
    %v1183 = vshrl.u32 %v1182, 7
    %v1184 = vsub.s32 %v1173, %v1183
    %v1185 = vrot.slane %v1142, %v1184
    %v1186 = vlaneseq
    %v1187 = vshrl.u32 %v1186, 7
    %v1188 = vsub.s32 %v1173, %v1187
    %v1189 = vrot.slane %v1143, %v1188
    %v1190 = vlaneseq
    %v1191 = vshrl.u32 %v1190, 7
    %v1192 = vsub.s32 %v1173, %v1191
    %v1193 = vrot.slane %v1144, %v1192
    %v1194 = vlaneseq
    %v1195 = vshrl.u32 %v1194, 7
    %v1196 = vsub.s32 %v1173, %v1195
    %v1197 = vrot.slane %v1145, %v1196
    %v1198 = vlaneseq
    %v1199 = vshrl.u32 %v1198, 7
    %v1200 = vsub.s32 %v1173, %v1199
    %v1201 = vrot.slane %v1146, %v1200
    %v1202 = vlaneseq
    %v1203 = vshrl.u32 %v1202, 7
    %v1204 = vsub.s32 %v1173, %v1203
    %v1205 = vrot.slane %v1147, %v1204
    %v1206 = vlaneseq
    %v1207 = vshrl.u32 %v1206, 7
    %v1208 = vsub.s32 %v1173, %v1207
    %v1209 = vrot.slane %v1148, %v1208
    %v1210 = vlaneseq
    %v1211 = vshrl.u32 %v1210, 7
    %v1212 = vsub.s32 %v1173, %v1211
    %v1213 = vrot.slane %v1149, %v1212
    %v1214 = vlaneseq
    %v1215 = vshrl.u32 %v1214, 7
    %v1216 = vsub.s32 %v1173, %v1215
    %v1217 = vrot.slane %v1150, %v1216
    %v1218 = vlaneseq
    %v1219 = vshrl.u32 %v1218, 7
    %v1220 = vsub.s32 %v1173, %v1219
    %v1221 = vrot.slane %v1151, %v1220
    %v1222 = vlaneseq
    %v1223 = vshrl.u32 %v1222, 7
    %v1224 = vsub.s32 %v1173, %v1223
    %v1225 = vrot.slane %v1152, %v1224
    %v1226 = vlaneseq
    %v1227 = vshrl.u32 %v1226, 7
    %v1228 = vsub.s32 %v1173, %v1227
    %v1229 = vrot.slane %v1153, %v1228
    %v1230 = vlaneseq
    %v1231 = vshrl.u32 %v1230, 7
    %v1232 = vsub.s32 %v1173, %v1231
    %v1233 = vrot.slane %v1154, %v1232
    %v1234 = vlaneseq
    %v1235 = vshrl.u32 %v1234, 7
    %v1236 = vsub.s32 %v1173, %v1235
    %v1237 = vrot.slane %v1155, %v1236
    %v1238 = vlaneseq
    %v1239 = vshrl.u32 %v1238, 7
    %v1240 = vsub.s32 %v1173, %v1239
    %v1241 = vrot.slane %v1156, %v1240
    %v1242 = vlaneseq
    %v1243 = vshrl.u32 %v1242, 7
    %v1244 = vsub.s32 %v1173, %v1243
    %v1245 = vrot.slane %v1157, %v1244
    %v1246 = vlaneseq
    %v1247 = vshrl.u32 %v1246, 7
    %v1248 = vsub.s32 %v1173, %v1247
    %v1249 = vrot.slane %v1158, %v1248
    %v1250 = vlaneseq
    %v1251 = vshrl.u32 %v1250, 7
    %v1252 = vsub.s32 %v1173, %v1251
    %v1253 = vrot.slane %v1159, %v1252
    %v1254 = vlaneseq
    %v1255 = vshrl.u32 %v1254, 7
    %v1256 = vsub.s32 %v1173, %v1255
    %v1257 = vrot.slane %v1160, %v1256
    %v1258 = vlaneseq
    %v1259 = vshrl.u32 %v1258, 7
    %v1260 = vsub.s32 %v1173, %v1259
    %v1261 = vrot.slane %v1161, %v1260
    %v1262 = vlaneseq
    %v1263 = vshrl.u32 %v1262, 7
    %v1264 = vsub.s32 %v1173, %v1263
    %v1265 = vrot.slane %v1162, %v1264
    %v1266 = vlaneseq
    %v1267 = vshrl.u32 %v1266, 7
    %v1268 = vsub.s32 %v1173, %v1267
    %v1269 = vrot.slane %v1163, %v1268
    %v1270 = vlaneseq
    %v1271 = vshrl.u32 %v1270, 7
    %v1272 = vsub.s32 %v1173, %v1271
    %v1273 = vrot.slane %v1164, %v1272
    %v1274 = vlaneseq
    %v1275 = vshrl.u32 %v1274, 7
    %v1276 = vsub.s32 %v1173, %v1275
    %v1277 = vrot.slane %v1165, %v1276
    %v1278 = vlaneseq
    %v1279 = vshrl.u32 %v1278, 7
    %v1280 = vsub.s32 %v1173, %v1279
    %v1281 = vrot.slane %v1166, %v1280
    %v1282 = vlaneseq
    %v1283 = vshrl.u32 %v1282, 7
    %v1284 = vsub.s32 %v1173, %v1283
    %v1285 = vrot.slane %v1167, %v1284
    %v1286 = vlaneseq
    %v1287 = vshrl.u32 %v1286, 7
    %v1288 = vsub.s32 %v1173, %v1287
    %v1289 = vrot.slane %v1168, %v1288
    %v1290 = vlaneseq
    %v1291 = vshrl.u32 %v1290, 7
    %v1292 = vsub.s32 %v1173, %v1291
    %v1293 = vrot.slane %v1169, %v1292
    %v1294 = vlaneseq
    %v1295 = vshrl.u32 %v1294, 7
    %v1296 = vsub.s32 %v1173, %v1295
    %v1297 = vrot.slane %v1170, %v1296
    %v1298 = vlaneseq
    %v1299 = vshrl.u32 %v1298, 7
    %v1300 = vsub.s32 %v1173, %v1299
    %v1301 = vrot.slane %v1171, %v1300
    %vm1302 = vcmask 1041409
    %v1303 = vsel %vm1302, %v1181, %v1177
    %vm1304 = vcmask 1042434
    %v1305 = vsel %vm1304, %v1185, %v1303
    %vm1306 = vcmask 1043459
    %v1307 = vsel %vm1306, %v1189, %v1305
    %vm1308 = vcmask 1044484
    %v1309 = vsel %vm1308, %v1193, %v1307
    %vm1310 = vcmask 1045509
    %v1311 = vsel %vm1310, %v1197, %v1309
    %vm1312 = vcmask 1046534
    %v1313 = vsel %vm1312, %v1201, %v1311
    %vm1314 = vcmask 1047559
    %v1315 = vsel %vm1314, %v1205, %v1313
    %v1316 = vsel %vm1302, %v1213, %v1209
    %v1317 = vsel %vm1304, %v1217, %v1316
    %v1318 = vsel %vm1306, %v1221, %v1317
    %v1319 = vsel %vm1308, %v1225, %v1318
    %v1320 = vsel %vm1310, %v1229, %v1319
    %v1321 = vsel %vm1312, %v1233, %v1320
    %v1322 = vsel %vm1314, %v1237, %v1321
    %v1323 = vsel %vm1302, %v1245, %v1241
    %v1324 = vsel %vm1304, %v1249, %v1323
    %v1325 = vsel %vm1306, %v1253, %v1324
    %v1326 = vsel %vm1308, %v1257, %v1325
    %v1327 = vsel %vm1310, %v1261, %v1326
    %v1328 = vsel %vm1312, %v1265, %v1327
    %v1329 = vsel %vm1314, %v1269, %v1328
    %v1330 = vsel %vm1302, %v1277, %v1273
    %v1331 = vsel %vm1304, %v1281, %v1330
    %v1332 = vsel %vm1306, %v1285, %v1331
    %v1333 = vsel %vm1308, %v1289, %v1332
    %v1334 = vsel %vm1310, %v1293, %v1333
    %v1335 = vsel %vm1312, %v1297, %v1334
    %v1336 = vsel %vm1314, %v1301, %v1335
    %v1337 = vpack.c.b16 %v1322, %v1315
    %v1338 = vpack.c.b16 %v1336, %v1329
    %1341 = vxpose.xlu0.c.b16.start [1/8] %v1337, 128
    %1342 = vxpose.xlu0.c.b16.cont [2/8] %v1338, 128
    %1343 = vxpose.xlu0.c.b16.cont [3/8] 0, 128
    %1344 = vxpose.xlu0.c.b16.cont [4/8] 0, 128
    %1345 = vxpose.xlu0.c.b16.cont [5/8] 0, 128
    %1346 = vxpose.xlu0.c.b16.cont [6/8] 0, 128
    %1347 = vxpose.xlu0.c.b16.cont [7/8] 0, 128
    %1348 = vxpose.xlu0.c.b16.end [8/8] 0, 128
    %v1349 = vpop.trf.xlu0
    %v1350 = vpop.trf.xlu0
    %v1351 = vpop.trf.xlu0
    %v1352 = vpop.trf.xlu0
    %v1353 = vpop.trf.xlu0
    %v1354 = vpop.trf.xlu0
    %v1355 = vpop.trf.xlu0
    %v1356 = vpop.trf.xlu0
    %v1373 = vunpack.c.l.b16 %v1018
    %v1374 = vunpack.c.h.b16 %v1018
    %v1375 = vunpack.c.l.b16 %v1019
    %v1376 = vunpack.c.h.b16 %v1019
    %v1377 = vunpack.c.l.b16 %v1020
    %v1378 = vunpack.c.h.b16 %v1020
    %v1379 = vunpack.c.l.b16 %v1021
    %v1380 = vunpack.c.h.b16 %v1021
    %v1381 = vunpack.c.l.b16 %v1022
    %v1382 = vunpack.c.h.b16 %v1022
    %v1383 = vunpack.c.l.b16 %v1023
    %v1384 = vunpack.c.h.b16 %v1023
    %v1385 = vunpack.c.l.b16 %v1024
    %v1386 = vunpack.c.h.b16 %v1024
    %v1387 = vunpack.c.l.b16 %v1025
    %v1388 = vunpack.c.h.b16 %v1025
    %v1389 = vunpack.c.l.b16 %v1026
    %v1390 = vunpack.c.h.b16 %v1026
    %v1391 = vunpack.c.l.b16 %v1027
    %v1392 = vunpack.c.h.b16 %v1027
    %v1393 = vunpack.c.l.b16 %v1028
    %v1394 = vunpack.c.h.b16 %v1028
    %v1395 = vunpack.c.l.b16 %v1029
    %v1396 = vunpack.c.h.b16 %v1029
    %v1397 = vunpack.c.l.b16 %v1030
    %v1398 = vunpack.c.h.b16 %v1030
    %v1399 = vunpack.c.l.b16 %v1031
    %v1400 = vunpack.c.h.b16 %v1031
    %v1401 = vunpack.c.l.b16 %v1032
    %v1402 = vunpack.c.h.b16 %v1032
    %v1403 = vunpack.c.l.b16 %v1033
    %v1404 = vunpack.c.h.b16 %v1033
    %v1405 = vpack.c.b16 %v1381, %v1373
    %v1406 = vpack.c.b16 %v1382, %v1374
    %v1407 = vpack.c.b16 %v1383, %v1375
    %v1408 = vpack.c.b16 %v1384, %v1376
    %v1409 = vpack.c.b16 %v1385, %v1377
    %v1410 = vpack.c.b16 %v1386, %v1378
    %v1411 = vpack.c.b16 %v1387, %v1379
    %v1412 = vpack.c.b16 %v1388, %v1380
    %v1413 = vpack.c.b16 %v1397, %v1389
    %v1414 = vpack.c.b16 %v1398, %v1390
    %v1415 = vpack.c.b16 %v1399, %v1391
    %v1416 = vpack.c.b16 %v1400, %v1392
    %v1417 = vpack.c.b16 %v1401, %v1393
    %v1418 = vpack.c.b16 %v1402, %v1394
    %v1419 = vpack.c.b16 %v1403, %v1395
    %v1420 = vpack.c.b16 %v1404, %v1396
    %vm1437 = vcmask 261120
    %v1439 = vsel %vm1437, %v1349, 0
    %1441 = vmatprep.subr.bf16.mxu0 %v1406
    %1442 = vmatpush1.bf16.msra.mxu0 %v1405
    %1443 = vmatprep.subr.bf16.mxu0 %v1414
    %1444 = vmatpush1.bf16.msra.mxu0 %v1413
    %1445 = vmatprep.subr.bf16.mxu0 0
    %1446 = vmatpush1.bf16.msra.mxu0 0
    %1447 = vmatprep.subr.bf16.mxu0 0
    %1448 = vmatpush1.bf16.msra.mxu0 0
    %1449 = vmatprep.subr.bf16.mxu0 0
    %1450 = vmatpush1.bf16.msra.mxu0 0
    %1451 = vmatprep.subr.bf16.mxu0 0
    %1452 = vmatpush1.bf16.msra.mxu0 0
    %1453 = vmatprep.subr.bf16.mxu0 0
    %1454 = vmatpush1.bf16.msra.mxu0 0
    %1455 = vmatprep.subr.bf16.mxu0 0
    %1456 = vmatpush1.bf16.msra.mxu0 0
    %1457 = vmatprep.subr.bf16.mxu0 0
    %1458 = vmatpush1.bf16.msra.mxu0 0
    %1459 = vmatprep.subr.bf16.mxu0 0
    %1460 = vmatpush1.bf16.msra.mxu0 0
    %1461 = vmatprep.subr.bf16.mxu0 0
    %1462 = vmatpush1.bf16.msra.mxu0 0
    %1463 = vmatprep.subr.bf16.mxu0 0
    %1464 = vmatpush1.bf16.msra.mxu0 0
    %1465 = vmatprep.subr.bf16.mxu0 0
    %1466 = vmatpush1.bf16.msra.mxu0 0
    %1467 = vmatprep.subr.bf16.mxu0 0
    %1468 = vmatpush1.bf16.msra.mxu0 0
    %1469 = vmatprep.subr.bf16.mxu0 0
    %1470 = vmatpush1.bf16.msra.mxu0 0
    %1471 = vmatprep.subr.bf16.mxu0 0
    %1472 = vmatpush1.bf16.msra.mxu0 0
    %1473 = vmatprep.mubr.bf16.mxu0 0
    %1474 = vmatmul.mubr.bf16.gmra.mrb[0].mxu0 %v1439
    %v1475 = vpop.f32.mrb[0].mxu0
    %v1476 = vadd.f32 %v1071, %v1475
    %v1477 = vpop.f32.mrb[0].mxu0
    %v1478 = vadd.f32 %v1075, %v1477
    %v1479 = vpop.f32.mrb[0].mxu0
    %v1480 = vpop.f32.mrb[0].mxu0
    %1481 = vdwg.mxu0
    %1482 = vmatprep.subr.bf16.mxu0 %v1408
    %1483 = vmatpush1.bf16.msra.mxu0 %v1407
    %1484 = vmatprep.subr.bf16.mxu0 %v1416
    %1485 = vmatpush1.bf16.msra.mxu0 %v1415
    %1486 = vmatprep.subr.bf16.mxu0 0
    %1487 = vmatpush1.bf16.msra.mxu0 0
    %1488 = vmatprep.subr.bf16.mxu0 0
    %1489 = vmatpush1.bf16.msra.mxu0 0
    %1490 = vmatprep.subr.bf16.mxu0 0
    %1491 = vmatpush1.bf16.msra.mxu0 0
    %1492 = vmatprep.subr.bf16.mxu0 0
    %1493 = vmatpush1.bf16.msra.mxu0 0
    %1494 = vmatprep.subr.bf16.mxu0 0
    %1495 = vmatpush1.bf16.msra.mxu0 0
    %1496 = vmatprep.subr.bf16.mxu0 0
    %1497 = vmatpush1.bf16.msra.mxu0 0
    %1498 = vmatprep.subr.bf16.mxu0 0
    %1499 = vmatpush1.bf16.msra.mxu0 0
    %1500 = vmatprep.subr.bf16.mxu0 0
    %1501 = vmatpush1.bf16.msra.mxu0 0
    %1502 = vmatprep.subr.bf16.mxu0 0
    %1503 = vmatpush1.bf16.msra.mxu0 0
    %1504 = vmatprep.subr.bf16.mxu0 0
    %1505 = vmatpush1.bf16.msra.mxu0 0
    %1506 = vmatprep.subr.bf16.mxu0 0
    %1507 = vmatpush1.bf16.msra.mxu0 0
    %1508 = vmatprep.subr.bf16.mxu0 0
    %1509 = vmatpush1.bf16.msra.mxu0 0
    %1510 = vmatprep.subr.bf16.mxu0 0
    %1511 = vmatpush1.bf16.msra.mxu0 0
    %1512 = vmatprep.subr.bf16.mxu0 0
    %1513 = vmatpush1.bf16.msra.mxu0 0
    %1514 = vmatprep.mubr.bf16.mxu0 0
    %1515 = vmatmul.mubr.bf16.gmra.mrb[0].mxu0 %v1439
    %v1516 = vpop.f32.mrb[0].mxu0
    %v1517 = vadd.f32 %v1079, %v1516
    %v1518 = vpop.f32.mrb[0].mxu0
    %v1519 = vadd.f32 %v1083, %v1518
    %v1520 = vpop.f32.mrb[0].mxu0
    %v1521 = vpop.f32.mrb[0].mxu0
    %1522 = vdwg.mxu0
    %1523 = vmatprep.subr.bf16.mxu0 %v1410
    %1524 = vmatpush1.bf16.msra.mxu0 %v1409
    %1525 = vmatprep.subr.bf16.mxu0 %v1418
    %1526 = vmatpush1.bf16.msra.mxu0 %v1417
    %1527 = vmatprep.subr.bf16.mxu0 0
    %1528 = vmatpush1.bf16.msra.mxu0 0
    %1529 = vmatprep.subr.bf16.mxu0 0
    %1530 = vmatpush1.bf16.msra.mxu0 0
    %1531 = vmatprep.subr.bf16.mxu0 0
    %1532 = vmatpush1.bf16.msra.mxu0 0
    %1533 = vmatprep.subr.bf16.mxu0 0
    %1534 = vmatpush1.bf16.msra.mxu0 0
    %1535 = vmatprep.subr.bf16.mxu0 0
    %1536 = vmatpush1.bf16.msra.mxu0 0
    %1537 = vmatprep.subr.bf16.mxu0 0
    %1538 = vmatpush1.bf16.msra.mxu0 0
    %1539 = vmatprep.subr.bf16.mxu0 0
    %1540 = vmatpush1.bf16.msra.mxu0 0
    %1541 = vmatprep.subr.bf16.mxu0 0
    %1542 = vmatpush1.bf16.msra.mxu0 0
    %1543 = vmatprep.subr.bf16.mxu0 0
    %1544 = vmatpush1.bf16.msra.mxu0 0
    %1545 = vmatprep.subr.bf16.mxu0 0
    %1546 = vmatpush1.bf16.msra.mxu0 0
    %1547 = vmatprep.subr.bf16.mxu0 0
    %1548 = vmatpush1.bf16.msra.mxu0 0
    %1549 = vmatprep.subr.bf16.mxu0 0
    %1550 = vmatpush1.bf16.msra.mxu0 0
    %1551 = vmatprep.subr.bf16.mxu0 0
    %1552 = vmatpush1.bf16.msra.mxu0 0
    %1553 = vmatprep.subr.bf16.mxu0 0
    %1554 = vmatpush1.bf16.msra.mxu0 0
    %1555 = vmatprep.mubr.bf16.mxu0 0
    %1556 = vmatmul.mubr.bf16.gmra.mrb[0].mxu0 %v1439
    %v1557 = vpop.f32.mrb[0].mxu0
    %v1558 = vadd.f32 %v1087, %v1557
    %v1559 = vpop.f32.mrb[0].mxu0
    %v1560 = vadd.f32 %v1091, %v1559
    %v1561 = vpop.f32.mrb[0].mxu0
    %v1562 = vpop.f32.mrb[0].mxu0
    %1563 = vdwg.mxu0
    %1564 = vmatprep.subr.bf16.mxu0 %v1412
    %1565 = vmatpush1.bf16.msra.mxu0 %v1411
    %1566 = vmatprep.subr.bf16.mxu0 %v1420
    %1567 = vmatpush1.bf16.msra.mxu0 %v1419
    %1568 = vmatprep.subr.bf16.mxu0 0
    %1569 = vmatpush1.bf16.msra.mxu0 0
    %1570 = vmatprep.subr.bf16.mxu0 0
    %1571 = vmatpush1.bf16.msra.mxu0 0
    %1572 = vmatprep.subr.bf16.mxu0 0
    %1573 = vmatpush1.bf16.msra.mxu0 0
    %1574 = vmatprep.subr.bf16.mxu0 0
    %1575 = vmatpush1.bf16.msra.mxu0 0
    %1576 = vmatprep.subr.bf16.mxu0 0
    %1577 = vmatpush1.bf16.msra.mxu0 0
    %1578 = vmatprep.subr.bf16.mxu0 0
    %1579 = vmatpush1.bf16.msra.mxu0 0
    %1580 = vmatprep.subr.bf16.mxu0 0
    %1581 = vmatpush1.bf16.msra.mxu0 0
    %1582 = vmatprep.subr.bf16.mxu0 0
    %1583 = vmatpush1.bf16.msra.mxu0 0
    %1584 = vmatprep.subr.bf16.mxu0 0
    %1585 = vmatpush1.bf16.msra.mxu0 0
    %1586 = vmatprep.subr.bf16.mxu0 0
    %1587 = vmatpush1.bf16.msra.mxu0 0
    %1588 = vmatprep.subr.bf16.mxu0 0
    %1589 = vmatpush1.bf16.msra.mxu0 0
    %1590 = vmatprep.subr.bf16.mxu0 0
    %1591 = vmatpush1.bf16.msra.mxu0 0
    %1592 = vmatprep.subr.bf16.mxu0 0
    %1593 = vmatpush1.bf16.msra.mxu0 0
    %1594 = vmatprep.subr.bf16.mxu0 0
    %1595 = vmatpush1.bf16.msra.mxu0 0
    %1596 = vmatprep.mubr.bf16.mxu0 0
    %1597 = vmatmul.mubr.bf16.gmra.mrb[0].mxu0 %v1439
    %v1598 = vpop.f32.mrb[0].mxu0
    %v1599 = vadd.f32 %v1095, %v1598
    %v1600 = vpop.f32.mrb[0].mxu0
    %v1601 = vadd.f32 %v1099, %v1600
    %v1602 = vpop.f32.mrb[0].mxu0
    %v1603 = vpop.f32.mrb[0].mxu0
    %1604 = vdwg.mxu0
    %vm1605 = vcmp.ge.f32.partialorder %v1476, 0.0
    %vm1606 = vcmp.ge.f32.partialorder %v1478, 0.0
    %vm1607 = vcmp.ge.f32.partialorder %v1517, 0.0
    %vm1608 = vcmp.ge.f32.partialorder %v1519, 0.0
    %vm1609 = vcmp.ge.f32.partialorder %v1558, 0.0
    %vm1610 = vcmp.ge.f32.partialorder %v1560, 0.0
    %vm1611 = vcmp.ge.f32.partialorder %v1599, 0.0
    %vm1612 = vcmp.ge.f32.partialorder %v1601, 0.0
    %s1613 = sld [smem:[#allocation2]]
    %v1614 = vstv %s1613
    %v1615 = vmul.f32 %v1614, %v1476
    %v1616 = vmul.f32 %v1614, %v1478
    %v1617 = vmul.f32 %v1614, %v1517
    %v1618 = vmul.f32 %v1614, %v1519
    %v1619 = vmul.f32 %v1614, %v1558
    %v1620 = vmul.f32 %v1614, %v1560
    %v1621 = vmul.f32 %v1614, %v1599
    %v1622 = vmul.f32 %v1614, %v1601
    %v1623 = vsel %vm1605, %v1476, %v1615
    %v1624 = vsel %vm1606, %v1478, %v1616
    %v1625 = vsel %vm1607, %v1517, %v1617
    %v1626 = vsel %vm1608, %v1519, %v1618
    %v1627 = vsel %vm1609, %v1558, %v1619
    %v1628 = vsel %vm1610, %v1560, %v1620
    %v1629 = vsel %vm1611, %v1599, %v1621
    %v1630 = vsel %vm1612, %v1601, %v1622
    %s1631 = sld [smem:[#allocation2 + $0x1]]
    %v1632 = vld [vmem:[%s6] sm:$0xff]
    %v1633 = vld [vmem:[%s6 + $0x8] sm:$0xff]
    %v1634 = vld [vmem:[%s6 + $0x10] sm:$0xff]
    %v1635 = vld [vmem:[%s6 + $0x18] sm:$0xff]
    %v1636 = vld [vmem:[%s6 + $0x20] sm:$0xff]
    %v1637 = vld [vmem:[%s6 + $0x28] sm:$0xff]
    %v1638 = vld [vmem:[%s6 + $0x30] sm:$0xff]
    %v1639 = vld [vmem:[%s6 + $0x38] sm:$0xff]
    %v1640 = vld [vmem:[%s6 + $0x40] sm:$0xff]
    %v1641 = vld [vmem:[%s6 + $0x48] sm:$0xff]
    %v1642 = vld [vmem:[%s6 + $0x50] sm:$0xff]
    %v1643 = vld [vmem:[%s6 + $0x58] sm:$0xff]
    %v1644 = vld [vmem:[%s6 + $0x60] sm:$0xff]
    %v1645 = vld [vmem:[%s6 + $0x68] sm:$0xff]
    %v1646 = vld [vmem:[%s6 + $0x70] sm:$0xff]
    %v1647 = vld [vmem:[%s6 + $0x78] sm:$0xff]
    %v1648 = vld [vmem:[%s6 + $0x80] sm:$0xff]
    %v1649 = vld [vmem:[%s6 + $0x88] sm:$0xff]
    %v1650 = vld [vmem:[%s6 + $0x90] sm:$0xff]
    %v1651 = vld [vmem:[%s6 + $0x98] sm:$0xff]
    %v1652 = vld [vmem:[%s6 + $0xa0] sm:$0xff]
    %v1653 = vld [vmem:[%s6 + $0xa8] sm:$0xff]
    %v1654 = vld [vmem:[%s6 + $0xb0] sm:$0xff]
    %v1655 = vld [vmem:[%s6 + $0xb8] sm:$0xff]
    %v1656 = vld [vmem:[%s6 + $0xc0] sm:$0xff]
    %v1657 = vld [vmem:[%s6 + $0xc8] sm:$0xff]
    %v1658 = vld [vmem:[%s6 + $0xd0] sm:$0xff]
    %v1659 = vld [vmem:[%s6 + $0xd8] sm:$0xff]
    %v1660 = vld [vmem:[%s6 + $0xe0] sm:$0xff]
    %v1661 = vld [vmem:[%s6 + $0xe8] sm:$0xff]
    %v1662 = vld [vmem:[%s6 + $0xf0] sm:$0xff]
    %v1663 = vld [vmem:[%s6 + $0xf8] sm:$0xff]
    %v1664 = vld [vmem:[%s6 + $0x100] sm:$0xff]
    %v1665 = vld [vmem:[%s6 + $0x108] sm:$0xff]
    %v1666 = vld [vmem:[%s6 + $0x110] sm:$0xff]
    %v1667 = vld [vmem:[%s6 + $0x118] sm:$0xff]
    %v1668 = vld [vmem:[%s6 + $0x120] sm:$0xff]
    %v1669 = vld [vmem:[%s6 + $0x128] sm:$0xff]
    %v1670 = vld [vmem:[%s6 + $0x130] sm:$0xff]
    %v1671 = vld [vmem:[%s6 + $0x138] sm:$0xff]
    %v1672 = vld [vmem:[%s6 + $0x140] sm:$0xff]
    %v1673 = vld [vmem:[%s6 + $0x148] sm:$0xff]
    %v1674 = vld [vmem:[%s6 + $0x150] sm:$0xff]
    %v1675 = vld [vmem:[%s6 + $0x158] sm:$0xff]
    %v1676 = vld [vmem:[%s6 + $0x160] sm:$0xff]
    %v1677 = vld [vmem:[%s6 + $0x168] sm:$0xff]
    %v1678 = vld [vmem:[%s6 + $0x170] sm:$0xff]
    %v1679 = vld [vmem:[%s6 + $0x178] sm:$0xff]
    %v1680 = vld [vmem:[%s6 + $0x180] sm:$0xff]
    %v1681 = vld [vmem:[%s6 + $0x188] sm:$0xff]
    %v1682 = vld [vmem:[%s6 + $0x190] sm:$0xff]
    %v1683 = vld [vmem:[%s6 + $0x198] sm:$0xff]
    %v1684 = vld [vmem:[%s6 + $0x1a0] sm:$0xff]
    %v1685 = vld [vmem:[%s6 + $0x1a8] sm:$0xff]
    %v1686 = vld [vmem:[%s6 + $0x1b0] sm:$0xff]
    %v1687 = vld [vmem:[%s6 + $0x1b8] sm:$0xff]
    %v1688 = vld [vmem:[%s6 + $0x1c0] sm:$0xff]
    %v1689 = vld [vmem:[%s6 + $0x1c8] sm:$0xff]
    %v1690 = vld [vmem:[%s6 + $0x1d0] sm:$0xff]
    %v1691 = vld [vmem:[%s6 + $0x1d8] sm:$0xff]
    %v1692 = vld [vmem:[%s6 + $0x1e0] sm:$0xff]
    %v1693 = vld [vmem:[%s6 + $0x1e8] sm:$0xff]
    %v1694 = vld [vmem:[%s6 + $0x1f0] sm:$0xff]
    %v1695 = vld [vmem:[%s6 + $0x1f8] sm:$0xff]
    %v1696 = vld [vmem:[%s6 + $0x200] sm:$0xff]
    %v1697 = vld [vmem:[%s6 + $0x208] sm:$0xff]
    %v1698 = vld [vmem:[%s6 + $0x210] sm:$0xff]
    %v1699 = vld [vmem:[%s6 + $0x218] sm:$0xff]
    %v1700 = vld [vmem:[%s6 + $0x220] sm:$0xff]
    %v1701 = vld [vmem:[%s6 + $0x228] sm:$0xff]
    %v1702 = vld [vmem:[%s6 + $0x230] sm:$0xff]
    %v1703 = vld [vmem:[%s6 + $0x238] sm:$0xff]
    %v1704 = vld [vmem:[%s6 + $0x240] sm:$0xff]
    %v1705 = vld [vmem:[%s6 + $0x248] sm:$0xff]
    %v1706 = vld [vmem:[%s6 + $0x250] sm:$0xff]
    %v1707 = vld [vmem:[%s6 + $0x258] sm:$0xff]
    %v1708 = vld [vmem:[%s6 + $0x260] sm:$0xff]
    %v1709 = vld [vmem:[%s6 + $0x268] sm:$0xff]
    %v1710 = vld [vmem:[%s6 + $0x270] sm:$0xff]
    %v1711 = vld [vmem:[%s6 + $0x278] sm:$0xff]
    %v1712 = vld [vmem:[%s6 + $0x280] sm:$0xff]
    %v1713 = vld [vmem:[%s6 + $0x288] sm:$0xff]
    %v1714 = vld [vmem:[%s6 + $0x290] sm:$0xff]
    %v1715 = vld [vmem:[%s6 + $0x298] sm:$0xff]
    %v1716 = vld [vmem:[%s6 + $0x2a0] sm:$0xff]
    %v1717 = vld [vmem:[%s6 + $0x2a8] sm:$0xff]
    %v1718 = vld [vmem:[%s6 + $0x2b0] sm:$0xff]
    %v1719 = vld [vmem:[%s6 + $0x2b8] sm:$0xff]
    %v1720 = vld [vmem:[%s6 + $0x2c0] sm:$0xff]
    %v1721 = vld [vmem:[%s6 + $0x2c8] sm:$0xff]
    %v1722 = vld [vmem:[%s6 + $0x2d0] sm:$0xff]
    %v1723 = vld [vmem:[%s6 + $0x2d8] sm:$0xff]
    %v1724 = vld [vmem:[%s6 + $0x2e0] sm:$0xff]
    %v1725 = vld [vmem:[%s6 + $0x2e8] sm:$0xff]
    %v1726 = vld [vmem:[%s6 + $0x2f0] sm:$0xff]
    %v1727 = vld [vmem:[%s6 + $0x2f8] sm:$0xff]
    %v1728 = vld [vmem:[%s6 + $0x300] sm:$0xff]
    %v1729 = vld [vmem:[%s6 + $0x308] sm:$0xff]
    %v1730 = vld [vmem:[%s6 + $0x310] sm:$0xff]
    %v1731 = vld [vmem:[%s6 + $0x318] sm:$0xff]
    %v1732 = vld [vmem:[%s6 + $0x320] sm:$0xff]
    %v1733 = vld [vmem:[%s6 + $0x328] sm:$0xff]
    %v1734 = vld [vmem:[%s6 + $0x330] sm:$0xff]
    %v1735 = vld [vmem:[%s6 + $0x338] sm:$0xff]
    %v1736 = vld [vmem:[%s6 + $0x340] sm:$0xff]
    %v1737 = vld [vmem:[%s6 + $0x348] sm:$0xff]
    %v1738 = vld [vmem:[%s6 + $0x350] sm:$0xff]
    %v1739 = vld [vmem:[%s6 + $0x358] sm:$0xff]
    %v1740 = vld [vmem:[%s6 + $0x360] sm:$0xff]
    %v1741 = vld [vmem:[%s6 + $0x368] sm:$0xff]
    %v1742 = vld [vmem:[%s6 + $0x370] sm:$0xff]
    %v1743 = vld [vmem:[%s6 + $0x378] sm:$0xff]
    %v1744 = vld [vmem:[%s6 + $0x380] sm:$0xff]
    %v1745 = vld [vmem:[%s6 + $0x388] sm:$0xff]
    %v1746 = vld [vmem:[%s6 + $0x390] sm:$0xff]
    %v1747 = vld [vmem:[%s6 + $0x398] sm:$0xff]
    %v1748 = vld [vmem:[%s6 + $0x3a0] sm:$0xff]
    %v1749 = vld [vmem:[%s6 + $0x3a8] sm:$0xff]
    %v1750 = vld [vmem:[%s6 + $0x3b0] sm:$0xff]
    %v1751 = vld [vmem:[%s6 + $0x3b8] sm:$0xff]
    %v1752 = vld [vmem:[%s6 + $0x3c0] sm:$0xff]
    %v1753 = vld [vmem:[%s6 + $0x3c8] sm:$0xff]
    %v1754 = vld [vmem:[%s6 + $0x3d0] sm:$0xff]
    %v1755 = vld [vmem:[%s6 + $0x3d8] sm:$0xff]
    %v1756 = vld [vmem:[%s6 + $0x3e0] sm:$0xff]
    %v1757 = vld [vmem:[%s6 + $0x3e8] sm:$0xff]
    %v1758 = vld [vmem:[%s6 + $0x3f0] sm:$0xff]
    %v1759 = vld [vmem:[%s6 + $0x3f8] sm:$0xff]
    %v1760 = vld [vmem:[%s6 + $0x400] sm:$0xff]
    %v1761 = vld [vmem:[%s6 + $0x408] sm:$0xff]
    %v1762 = vld [vmem:[%s6 + $0x410] sm:$0xff]
    %v1763 = vld [vmem:[%s6 + $0x418] sm:$0xff]
    %v1764 = vld [vmem:[%s6 + $0x420] sm:$0xff]
    %v1765 = vld [vmem:[%s6 + $0x428] sm:$0xff]
    %v1766 = vld [vmem:[%s6 + $0x430] sm:$0xff]
    %v1767 = vld [vmem:[%s6 + $0x438] sm:$0xff]
    %v1768 = vld [vmem:[%s6 + $0x440] sm:$0xff]
    %v1769 = vld [vmem:[%s6 + $0x448] sm:$0xff]
    %v1770 = vld [vmem:[%s6 + $0x450] sm:$0xff]
    %v1771 = vld [vmem:[%s6 + $0x458] sm:$0xff]
    %v1772 = vld [vmem:[%s6 + $0x460] sm:$0xff]
    %v1773 = vld [vmem:[%s6 + $0x468] sm:$0xff]
    %v1774 = vld [vmem:[%s6 + $0x470] sm:$0xff]
    %v1775 = vld [vmem:[%s6 + $0x478] sm:$0xff]
    %v1776 = vld [vmem:[%s6 + $0x480] sm:$0xff]
    %v1777 = vld [vmem:[%s6 + $0x488] sm:$0xff]
    %v1778 = vld [vmem:[%s6 + $0x490] sm:$0xff]
    %v1779 = vld [vmem:[%s6 + $0x498] sm:$0xff]
    %v1780 = vld [vmem:[%s6 + $0x4a0] sm:$0xff]
    %v1781 = vld [vmem:[%s6 + $0x4a8] sm:$0xff]
    %v1782 = vld [vmem:[%s6 + $0x4b0] sm:$0xff]
    %v1783 = vld [vmem:[%s6 + $0x4b8] sm:$0xff]
    %v1784 = vld [vmem:[%s6 + $0x4c0] sm:$0xff]
    %v1785 = vld [vmem:[%s6 + $0x4c8] sm:$0xff]
    %v1786 = vld [vmem:[%s6 + $0x4d0] sm:$0xff]
    %v1787 = vld [vmem:[%s6 + $0x4d8] sm:$0xff]
    %v1788 = vld [vmem:[%s6 + $0x4e0] sm:$0xff]
    %v1789 = vld [vmem:[%s6 + $0x4e8] sm:$0xff]
    %v1790 = vld [vmem:[%s6 + $0x4f0] sm:$0xff]
    %v1791 = vld [vmem:[%s6 + $0x4f8] sm:$0xff]
    %v1792 = vld [vmem:[%s6 + $0x500] sm:$0xff]
    %v1793 = vld [vmem:[%s6 + $0x508] sm:$0xff]
    %v1794 = vld [vmem:[%s6 + $0x510] sm:$0xff]
    %v1795 = vld [vmem:[%s6 + $0x518] sm:$0xff]
    %v1796 = vld [vmem:[%s6 + $0x520] sm:$0xff]
    %v1797 = vld [vmem:[%s6 + $0x528] sm:$0xff]
    %v1798 = vld [vmem:[%s6 + $0x530] sm:$0xff]
    %v1799 = vld [vmem:[%s6 + $0x538] sm:$0xff]
    %v1800 = vld [vmem:[%s6 + $0x540] sm:$0xff]
    %v1801 = vld [vmem:[%s6 + $0x548] sm:$0xff]
    %v1802 = vld [vmem:[%s6 + $0x550] sm:$0xff]
    %v1803 = vld [vmem:[%s6 + $0x558] sm:$0xff]
    %v1804 = vld [vmem:[%s6 + $0x560] sm:$0xff]
    %v1805 = vld [vmem:[%s6 + $0x568] sm:$0xff]
    %v1806 = vld [vmem:[%s6 + $0x570] sm:$0xff]
    %v1807 = vld [vmem:[%s6 + $0x578] sm:$0xff]
    %v1808 = vld [vmem:[%s6 + $0x580] sm:$0xff]
    %v1809 = vld [vmem:[%s6 + $0x588] sm:$0xff]
    %v1810 = vld [vmem:[%s6 + $0x590] sm:$0xff]
    %v1811 = vld [vmem:[%s6 + $0x598] sm:$0xff]
    %v1812 = vld [vmem:[%s6 + $0x5a0] sm:$0xff]
    %v1813 = vld [vmem:[%s6 + $0x5a8] sm:$0xff]
    %v1814 = vld [vmem:[%s6 + $0x5b0] sm:$0xff]
    %v1815 = vld [vmem:[%s6 + $0x5b8] sm:$0xff]
    %v1816 = vld [vmem:[%s6 + $0x5c0] sm:$0xff]
    %v1817 = vld [vmem:[%s6 + $0x5c8] sm:$0xff]
    %v1818 = vld [vmem:[%s6 + $0x5d0] sm:$0xff]
    %v1819 = vld [vmem:[%s6 + $0x5d8] sm:$0xff]
    %v1820 = vld [vmem:[%s6 + $0x5e0] sm:$0xff]
    %v1821 = vld [vmem:[%s6 + $0x5e8] sm:$0xff]
    %v1822 = vld [vmem:[%s6 + $0x5f0] sm:$0xff]
    %v1823 = vld [vmem:[%s6 + $0x5f8] sm:$0xff]
    %v1824 = vld [vmem:[%s6 + $0x600] sm:$0xff]
    %v1825 = vld [vmem:[%s6 + $0x608] sm:$0xff]
    %v1826 = vld [vmem:[%s6 + $0x610] sm:$0xff]
    %v1827 = vld [vmem:[%s6 + $0x618] sm:$0xff]
    %v1828 = vld [vmem:[%s6 + $0x620] sm:$0xff]
    %v1829 = vld [vmem:[%s6 + $0x628] sm:$0xff]
    %v1830 = vld [vmem:[%s6 + $0x630] sm:$0xff]
    %v1831 = vld [vmem:[%s6 + $0x638] sm:$0xff]
    %v1832 = vld [vmem:[%s6 + $0x640] sm:$0xff]
    %v1833 = vld [vmem:[%s6 + $0x648] sm:$0xff]
    %v1834 = vld [vmem:[%s6 + $0x650] sm:$0xff]
    %v1835 = vld [vmem:[%s6 + $0x658] sm:$0xff]
    %v1836 = vld [vmem:[%s6 + $0x660] sm:$0xff]
    %v1837 = vld [vmem:[%s6 + $0x668] sm:$0xff]
    %v1838 = vld [vmem:[%s6 + $0x670] sm:$0xff]
    %v1839 = vld [vmem:[%s6 + $0x678] sm:$0xff]
    %v1840 = vld [vmem:[%s6 + $0x680] sm:$0xff]
    %v1841 = vld [vmem:[%s6 + $0x688] sm:$0xff]
    %v1842 = vld [vmem:[%s6 + $0x690] sm:$0xff]
    %v1843 = vld [vmem:[%s6 + $0x698] sm:$0xff]
    %v1844 = vld [vmem:[%s6 + $0x6a0] sm:$0xff]
    %v1845 = vld [vmem:[%s6 + $0x6a8] sm:$0xff]
    %v1846 = vld [vmem:[%s6 + $0x6b0] sm:$0xff]
    %v1847 = vld [vmem:[%s6 + $0x6b8] sm:$0xff]
    %v1848 = vld [vmem:[%s6 + $0x6c0] sm:$0xff]
    %v1849 = vld [vmem:[%s6 + $0x6c8] sm:$0xff]
    %v1850 = vld [vmem:[%s6 + $0x6d0] sm:$0xff]
    %v1851 = vld [vmem:[%s6 + $0x6d8] sm:$0xff]
    %v1852 = vld [vmem:[%s6 + $0x6e0] sm:$0xff]
    %v1853 = vld [vmem:[%s6 + $0x6e8] sm:$0xff]
    %v1854 = vld [vmem:[%s6 + $0x6f0] sm:$0xff]
    %v1855 = vld [vmem:[%s6 + $0x6f8] sm:$0xff]
    %v1856 = vld [vmem:[%s6 + $0x700] sm:$0xff]
    %v1857 = vld [vmem:[%s6 + $0x708] sm:$0xff]
    %v1858 = vld [vmem:[%s6 + $0x710] sm:$0xff]
    %v1859 = vld [vmem:[%s6 + $0x718] sm:$0xff]
    %v1860 = vld [vmem:[%s6 + $0x720] sm:$0xff]
    %v1861 = vld [vmem:[%s6 + $0x728] sm:$0xff]
    %v1862 = vld [vmem:[%s6 + $0x730] sm:$0xff]
    %v1863 = vld [vmem:[%s6 + $0x738] sm:$0xff]
    %v1864 = vld [vmem:[%s6 + $0x740] sm:$0xff]
    %v1865 = vld [vmem:[%s6 + $0x748] sm:$0xff]
    %v1866 = vld [vmem:[%s6 + $0x750] sm:$0xff]
    %v1867 = vld [vmem:[%s6 + $0x758] sm:$0xff]
    %v1868 = vld [vmem:[%s6 + $0x760] sm:$0xff]
    %v1869 = vld [vmem:[%s6 + $0x768] sm:$0xff]
    %v1870 = vld [vmem:[%s6 + $0x770] sm:$0xff]
    %v1871 = vld [vmem:[%s6 + $0x778] sm:$0xff]
    %v1872 = vld [vmem:[%s6 + $0x780] sm:$0xff]
    %v1873 = vld [vmem:[%s6 + $0x788] sm:$0xff]
    %v1874 = vld [vmem:[%s6 + $0x790] sm:$0xff]
    %v1875 = vld [vmem:[%s6 + $0x798] sm:$0xff]
    %v1876 = vld [vmem:[%s6 + $0x7a0] sm:$0xff]
    %v1877 = vld [vmem:[%s6 + $0x7a8] sm:$0xff]
    %v1878 = vld [vmem:[%s6 + $0x7b0] sm:$0xff]
    %v1879 = vld [vmem:[%s6 + $0x7b8] sm:$0xff]
    %v1880 = vld [vmem:[%s6 + $0x7c0] sm:$0xff]
    %v1881 = vld [vmem:[%s6 + $0x7c8] sm:$0xff]
    %v1882 = vld [vmem:[%s6 + $0x7d0] sm:$0xff]
    %v1883 = vld [vmem:[%s6 + $0x7d8] sm:$0xff]
    %v1884 = vld [vmem:[%s6 + $0x7e0] sm:$0xff]
    %v1885 = vld [vmem:[%s6 + $0x7e8] sm:$0xff]
    %v1886 = vld [vmem:[%s6 + $0x7f0] sm:$0xff]
    %v1887 = vld [vmem:[%s6 + $0x7f8] sm:$0xff]
    %v1888 = vpack.c.bf16 %v1623, %v1623
    %v1889 = vpack.c.bf16 %v1624, %v1624
    %v1890 = vpack.c.bf16 %v1625, %v1625
    %v1891 = vpack.c.bf16 %v1626, %v1626
    %v1892 = vpack.c.bf16 %v1627, %v1627
    %v1893 = vpack.c.bf16 %v1628, %v1628
    %v1894 = vpack.c.bf16 %v1629, %v1629
    %v1895 = vpack.c.bf16 %v1630, %v1630
    %v1896 = vld [vmem:[%s7] sm:$0xf]
    %v1898 = vlaneseq
    %v1899 = vshrl.u32 %v1898, 7
    %v1900 = vsub.s32 0, %v1899
    %v1901 = vrot.slane %v1896, %v1900
    %v1902 = vlaneseq
    %v1903 = vshrl.u32 %v1902, 7
    %v1904 = vsub.s32 1, %v1903
    %v1905 = vrot.slane %v1896, %v1904
    %v1906 = vlaneseq
    %v1907 = vshrl.u32 %v1906, 7
    %v1908 = vsub.s32 2, %v1907
    %v1909 = vrot.slane %v1896, %v1908
    %v1910 = vlaneseq
    %v1911 = vshrl.u32 %v1910, 7
    %v1912 = vsub.s32 3, %v1911
    %v1913 = vrot.slane %v1896, %v1912
    %v2174 = vunpack.c.l.b16 %v1632
    %v2175 = vunpack.c.h.b16 %v1632
    %v2176 = vunpack.c.l.b16 %v1633
    %v2177 = vunpack.c.h.b16 %v1633
    %v2178 = vunpack.c.l.b16 %v1634
    %v2179 = vunpack.c.h.b16 %v1634
    %v2180 = vunpack.c.l.b16 %v1635
    %v2181 = vunpack.c.h.b16 %v1635
    %v2182 = vunpack.c.l.b16 %v1636
    %v2183 = vunpack.c.h.b16 %v1636
    %v2184 = vunpack.c.l.b16 %v1637
    %v2185 = vunpack.c.h.b16 %v1637
    %v2186 = vunpack.c.l.b16 %v1638
    %v2187 = vunpack.c.h.b16 %v1638
    %v2188 = vunpack.c.l.b16 %v1639
    %v2189 = vunpack.c.h.b16 %v1639
    %v2190 = vunpack.c.l.b16 %v1640
    %v2191 = vunpack.c.h.b16 %v1640
    %v2192 = vunpack.c.l.b16 %v1641
    %v2193 = vunpack.c.h.b16 %v1641
    %v2194 = vunpack.c.l.b16 %v1642
    %v2195 = vunpack.c.h.b16 %v1642
    %v2196 = vunpack.c.l.b16 %v1643
    %v2197 = vunpack.c.h.b16 %v1643
    %v2198 = vunpack.c.l.b16 %v1644
    %v2199 = vunpack.c.h.b16 %v1644
    %v2200 = vunpack.c.l.b16 %v1645
    %v2201 = vunpack.c.h.b16 %v1645
    %v2202 = vunpack.c.l.b16 %v1646
    %v2203 = vunpack.c.h.b16 %v1646
    %v2204 = vunpack.c.l.b16 %v1647
    %v2205 = vunpack.c.h.b16 %v1647
    %v2206 = vunpack.c.l.b16 %v1648
    %v2207 = vunpack.c.h.b16 %v1648
    %v2208 = vunpack.c.l.b16 %v1649
    %v2209 = vunpack.c.h.b16 %v1649
    %v2210 = vunpack.c.l.b16 %v1650
    %v2211 = vunpack.c.h.b16 %v1650
    %v2212 = vunpack.c.l.b16 %v1651
    %v2213 = vunpack.c.h.b16 %v1651
    %v2214 = vunpack.c.l.b16 %v1652
    %v2215 = vunpack.c.h.b16 %v1652
    %v2216 = vunpack.c.l.b16 %v1653
    %v2217 = vunpack.c.h.b16 %v1653
    %v2218 = vunpack.c.l.b16 %v1654
    %v2219 = vunpack.c.h.b16 %v1654
    %v2220 = vunpack.c.l.b16 %v1655
    %v2221 = vunpack.c.h.b16 %v1655
    %v2222 = vunpack.c.l.b16 %v1656
    %v2223 = vunpack.c.h.b16 %v1656
    %v2224 = vunpack.c.l.b16 %v1657
    %v2225 = vunpack.c.h.b16 %v1657
    %v2226 = vunpack.c.l.b16 %v1658
    %v2227 = vunpack.c.h.b16 %v1658
    %v2228 = vunpack.c.l.b16 %v1659
    %v2229 = vunpack.c.h.b16 %v1659
    %v2230 = vunpack.c.l.b16 %v1660
    %v2231 = vunpack.c.h.b16 %v1660
    %v2232 = vunpack.c.l.b16 %v1661
    %v2233 = vunpack.c.h.b16 %v1661
    %v2234 = vunpack.c.l.b16 %v1662
    %v2235 = vunpack.c.h.b16 %v1662
    %v2236 = vunpack.c.l.b16 %v1663
    %v2237 = vunpack.c.h.b16 %v1663
    %v2238 = vunpack.c.l.b16 %v1664
    %v2239 = vunpack.c.h.b16 %v1664
    %v2240 = vunpack.c.l.b16 %v1665
    %v2241 = vunpack.c.h.b16 %v1665
    %v2242 = vunpack.c.l.b16 %v1666
    %v2243 = vunpack.c.h.b16 %v1666
    %v2244 = vunpack.c.l.b16 %v1667
    %v2245 = vunpack.c.h.b16 %v1667
    %v2246 = vunpack.c.l.b16 %v1668
    %v2247 = vunpack.c.h.b16 %v1668
    %v2248 = vunpack.c.l.b16 %v1669
    %v2249 = vunpack.c.h.b16 %v1669
    %v2250 = vunpack.c.l.b16 %v1670
    %v2251 = vunpack.c.h.b16 %v1670
    %v2252 = vunpack.c.l.b16 %v1671
    %v2253 = vunpack.c.h.b16 %v1671
    %v2254 = vunpack.c.l.b16 %v1672
    %v2255 = vunpack.c.h.b16 %v1672
    %v2256 = vunpack.c.l.b16 %v1673
    %v2257 = vunpack.c.h.b16 %v1673
    %v2258 = vunpack.c.l.b16 %v1674
    %v2259 = vunpack.c.h.b16 %v1674
    %v2260 = vunpack.c.l.b16 %v1675
    %v2261 = vunpack.c.h.b16 %v1675
    %v2262 = vunpack.c.l.b16 %v1676
    %v2263 = vunpack.c.h.b16 %v1676
    %v2264 = vunpack.c.l.b16 %v1677
    %v2265 = vunpack.c.h.b16 %v1677
    %v2266 = vunpack.c.l.b16 %v1678
    %v2267 = vunpack.c.h.b16 %v1678
    %v2268 = vunpack.c.l.b16 %v1679
    %v2269 = vunpack.c.h.b16 %v1679
    %v2270 = vunpack.c.l.b16 %v1680
    %v2271 = vunpack.c.h.b16 %v1680
    %v2272 = vunpack.c.l.b16 %v1681
    %v2273 = vunpack.c.h.b16 %v1681
    %v2274 = vunpack.c.l.b16 %v1682
    %v2275 = vunpack.c.h.b16 %v1682
    %v2276 = vunpack.c.l.b16 %v1683
    %v2277 = vunpack.c.h.b16 %v1683
    %v2278 = vunpack.c.l.b16 %v1684
    %v2279 = vunpack.c.h.b16 %v1684
    %v2280 = vunpack.c.l.b16 %v1685
    %v2281 = vunpack.c.h.b16 %v1685
    %v2282 = vunpack.c.l.b16 %v1686
    %v2283 = vunpack.c.h.b16 %v1686
    %v2284 = vunpack.c.l.b16 %v1687
    %v2285 = vunpack.c.h.b16 %v1687
    %v2286 = vunpack.c.l.b16 %v1688
    %v2287 = vunpack.c.h.b16 %v1688
    %v2288 = vunpack.c.l.b16 %v1689
    %v2289 = vunpack.c.h.b16 %v1689
    %v2290 = vunpack.c.l.b16 %v1690
    %v2291 = vunpack.c.h.b16 %v1690
    %v2292 = vunpack.c.l.b16 %v1691
    %v2293 = vunpack.c.h.b16 %v1691
    %v2294 = vunpack.c.l.b16 %v1692
    %v2295 = vunpack.c.h.b16 %v1692
    %v2296 = vunpack.c.l.b16 %v1693
    %v2297 = vunpack.c.h.b16 %v1693
    %v2298 = vunpack.c.l.b16 %v1694
    %v2299 = vunpack.c.h.b16 %v1694
    %v2300 = vunpack.c.l.b16 %v1695
    %v2301 = vunpack.c.h.b16 %v1695
    %v2302 = vunpack.c.l.b16 %v1696
    %v2303 = vunpack.c.h.b16 %v1696
    %v2304 = vunpack.c.l.b16 %v1697
    %v2305 = vunpack.c.h.b16 %v1697
    %v2306 = vunpack.c.l.b16 %v1698
    %v2307 = vunpack.c.h.b16 %v1698
    %v2308 = vunpack.c.l.b16 %v1699
    %v2309 = vunpack.c.h.b16 %v1699
    %v2310 = vunpack.c.l.b16 %v1700
    %v2311 = vunpack.c.h.b16 %v1700
    %v2312 = vunpack.c.l.b16 %v1701
    %v2313 = vunpack.c.h.b16 %v1701
    %v2314 = vunpack.c.l.b16 %v1702
    %v2315 = vunpack.c.h.b16 %v1702
    %v2316 = vunpack.c.l.b16 %v1703
    %v2317 = vunpack.c.h.b16 %v1703
    %v2318 = vunpack.c.l.b16 %v1704
    %v2319 = vunpack.c.h.b16 %v1704
    %v2320 = vunpack.c.l.b16 %v1705
    %v2321 = vunpack.c.h.b16 %v1705
    %v2322 = vunpack.c.l.b16 %v1706
    %v2323 = vunpack.c.h.b16 %v1706
    %v2324 = vunpack.c.l.b16 %v1707
    %v2325 = vunpack.c.h.b16 %v1707
    %v2326 = vunpack.c.l.b16 %v1708
    %v2327 = vunpack.c.h.b16 %v1708
    %v2328 = vunpack.c.l.b16 %v1709
    %v2329 = vunpack.c.h.b16 %v1709
    %v2330 = vunpack.c.l.b16 %v1710
    %v2331 = vunpack.c.h.b16 %v1710
    %v2332 = vunpack.c.l.b16 %v1711
    %v2333 = vunpack.c.h.b16 %v1711
    %v2334 = vunpack.c.l.b16 %v1712
    %v2335 = vunpack.c.h.b16 %v1712
    %v2336 = vunpack.c.l.b16 %v1713
    %v2337 = vunpack.c.h.b16 %v1713
    %v2338 = vunpack.c.l.b16 %v1714
    %v2339 = vunpack.c.h.b16 %v1714
    %v2340 = vunpack.c.l.b16 %v1715
    %v2341 = vunpack.c.h.b16 %v1715
    %v2342 = vunpack.c.l.b16 %v1716
    %v2343 = vunpack.c.h.b16 %v1716
    %v2344 = vunpack.c.l.b16 %v1717
    %v2345 = vunpack.c.h.b16 %v1717
    %v2346 = vunpack.c.l.b16 %v1718
    %v2347 = vunpack.c.h.b16 %v1718
    %v2348 = vunpack.c.l.b16 %v1719
    %v2349 = vunpack.c.h.b16 %v1719
    %v2350 = vunpack.c.l.b16 %v1720
    %v2351 = vunpack.c.h.b16 %v1720
    %v2352 = vunpack.c.l.b16 %v1721
    %v2353 = vunpack.c.h.b16 %v1721
    %v2354 = vunpack.c.l.b16 %v1722
    %v2355 = vunpack.c.h.b16 %v1722
    %v2356 = vunpack.c.l.b16 %v1723
    %v2357 = vunpack.c.h.b16 %v1723
    %v2358 = vunpack.c.l.b16 %v1724
    %v2359 = vunpack.c.h.b16 %v1724
    %v2360 = vunpack.c.l.b16 %v1725
    %v2361 = vunpack.c.h.b16 %v1725
    %v2362 = vunpack.c.l.b16 %v1726
    %v2363 = vunpack.c.h.b16 %v1726
    %v2364 = vunpack.c.l.b16 %v1727
    %v2365 = vunpack.c.h.b16 %v1727
    %v2366 = vunpack.c.l.b16 %v1728
    %v2367 = vunpack.c.h.b16 %v1728
    %v2368 = vunpack.c.l.b16 %v1729
    %v2369 = vunpack.c.h.b16 %v1729
    %v2370 = vunpack.c.l.b16 %v1730
    %v2371 = vunpack.c.h.b16 %v1730
    %v2372 = vunpack.c.l.b16 %v1731
    %v2373 = vunpack.c.h.b16 %v1731
    %v2374 = vunpack.c.l.b16 %v1732
    %v2375 = vunpack.c.h.b16 %v1732
    %v2376 = vunpack.c.l.b16 %v1733
    %v2377 = vunpack.c.h.b16 %v1733
    %v2378 = vunpack.c.l.b16 %v1734
    %v2379 = vunpack.c.h.b16 %v1734
    %v2380 = vunpack.c.l.b16 %v1735
    %v2381 = vunpack.c.h.b16 %v1735
    %v2382 = vunpack.c.l.b16 %v1736
    %v2383 = vunpack.c.h.b16 %v1736
    %v2384 = vunpack.c.l.b16 %v1737
    %v2385 = vunpack.c.h.b16 %v1737
    %v2386 = vunpack.c.l.b16 %v1738
    %v2387 = vunpack.c.h.b16 %v1738
    %v2388 = vunpack.c.l.b16 %v1739
    %v2389 = vunpack.c.h.b16 %v1739
    %v2390 = vunpack.c.l.b16 %v1740
    %v2391 = vunpack.c.h.b16 %v1740
    %v2392 = vunpack.c.l.b16 %v1741
    %v2393 = vunpack.c.h.b16 %v1741
    %v2394 = vunpack.c.l.b16 %v1742
    %v2395 = vunpack.c.h.b16 %v1742
    %v2396 = vunpack.c.l.b16 %v1743
    %v2397 = vunpack.c.h.b16 %v1743
    %v2398 = vunpack.c.l.b16 %v1744
    %v2399 = vunpack.c.h.b16 %v1744
    %v2400 = vunpack.c.l.b16 %v1745
    %v2401 = vunpack.c.h.b16 %v1745
    %v2402 = vunpack.c.l.b16 %v1746
    %v2403 = vunpack.c.h.b16 %v1746
    %v2404 = vunpack.c.l.b16 %v1747
    %v2405 = vunpack.c.h.b16 %v1747
    %v2406 = vunpack.c.l.b16 %v1748
    %v2407 = vunpack.c.h.b16 %v1748
    %v2408 = vunpack.c.l.b16 %v1749
    %v2409 = vunpack.c.h.b16 %v1749
    %v2410 = vunpack.c.l.b16 %v1750
    %v2411 = vunpack.c.h.b16 %v1750
    %v2412 = vunpack.c.l.b16 %v1751
    %v2413 = vunpack.c.h.b16 %v1751
    %v2414 = vunpack.c.l.b16 %v1752
    %v2415 = vunpack.c.h.b16 %v1752
    %v2416 = vunpack.c.l.b16 %v1753
    %v2417 = vunpack.c.h.b16 %v1753
    %v2418 = vunpack.c.l.b16 %v1754
    %v2419 = vunpack.c.h.b16 %v1754
    %v2420 = vunpack.c.l.b16 %v1755
    %v2421 = vunpack.c.h.b16 %v1755
    %v2422 = vunpack.c.l.b16 %v1756
    %v2423 = vunpack.c.h.b16 %v1756
    %v2424 = vunpack.c.l.b16 %v1757
    %v2425 = vunpack.c.h.b16 %v1757
    %v2426 = vunpack.c.l.b16 %v1758
    %v2427 = vunpack.c.h.b16 %v1758
    %v2428 = vunpack.c.l.b16 %v1759
    %v2429 = vunpack.c.h.b16 %v1759
    %v2430 = vunpack.c.l.b16 %v1760
    %v2431 = vunpack.c.h.b16 %v1760
    %v2432 = vunpack.c.l.b16 %v1761
    %v2433 = vunpack.c.h.b16 %v1761
    %v2434 = vunpack.c.l.b16 %v1762
    %v2435 = vunpack.c.h.b16 %v1762
    %v2436 = vunpack.c.l.b16 %v1763
    %v2437 = vunpack.c.h.b16 %v1763
    %v2438 = vunpack.c.l.b16 %v1764
    %v2439 = vunpack.c.h.b16 %v1764
    %v2440 = vunpack.c.l.b16 %v1765
    %v2441 = vunpack.c.h.b16 %v1765
    %v2442 = vunpack.c.l.b16 %v1766
    %v2443 = vunpack.c.h.b16 %v1766
    %v2444 = vunpack.c.l.b16 %v1767
    %v2445 = vunpack.c.h.b16 %v1767
    %v2446 = vunpack.c.l.b16 %v1768
    %v2447 = vunpack.c.h.b16 %v1768
    %v2448 = vunpack.c.l.b16 %v1769
    %v2449 = vunpack.c.h.b16 %v1769
    %v2450 = vunpack.c.l.b16 %v1770
    %v2451 = vunpack.c.h.b16 %v1770
    %v2452 = vunpack.c.l.b16 %v1771
    %v2453 = vunpack.c.h.b16 %v1771
    %v2454 = vunpack.c.l.b16 %v1772
    %v2455 = vunpack.c.h.b16 %v1772
    %v2456 = vunpack.c.l.b16 %v1773
    %v2457 = vunpack.c.h.b16 %v1773
    %v2458 = vunpack.c.l.b16 %v1774
    %v2459 = vunpack.c.h.b16 %v1774
    %v2460 = vunpack.c.l.b16 %v1775
    %v2461 = vunpack.c.h.b16 %v1775
    %v2462 = vunpack.c.l.b16 %v1776
    %v2463 = vunpack.c.h.b16 %v1776
    %v2464 = vunpack.c.l.b16 %v1777
    %v2465 = vunpack.c.h.b16 %v1777
    %v2466 = vunpack.c.l.b16 %v1778
    %v2467 = vunpack.c.h.b16 %v1778
    %v2468 = vunpack.c.l.b16 %v1779
    %v2469 = vunpack.c.h.b16 %v1779
    %v2470 = vunpack.c.l.b16 %v1780
    %v2471 = vunpack.c.h.b16 %v1780
    %v2472 = vunpack.c.l.b16 %v1781
    %v2473 = vunpack.c.h.b16 %v1781
    %v2474 = vunpack.c.l.b16 %v1782
    %v2475 = vunpack.c.h.b16 %v1782
    %v2476 = vunpack.c.l.b16 %v1783
    %v2477 = vunpack.c.h.b16 %v1783
    %v2478 = vunpack.c.l.b16 %v1784
    %v2479 = vunpack.c.h.b16 %v1784
    %v2480 = vunpack.c.l.b16 %v1785
    %v2481 = vunpack.c.h.b16 %v1785
    %v2482 = vunpack.c.l.b16 %v1786
    %v2483 = vunpack.c.h.b16 %v1786
    %v2484 = vunpack.c.l.b16 %v1787
    %v2485 = vunpack.c.h.b16 %v1787
    %v2486 = vunpack.c.l.b16 %v1788
    %v2487 = vunpack.c.h.b16 %v1788
    %v2488 = vunpack.c.l.b16 %v1789
    %v2489 = vunpack.c.h.b16 %v1789
    %v2490 = vunpack.c.l.b16 %v1790
    %v2491 = vunpack.c.h.b16 %v1790
    %v2492 = vunpack.c.l.b16 %v1791
    %v2493 = vunpack.c.h.b16 %v1791
    %v2494 = vunpack.c.l.b16 %v1792
    %v2495 = vunpack.c.h.b16 %v1792
    %v2496 = vunpack.c.l.b16 %v1793
    %v2497 = vunpack.c.h.b16 %v1793
    %v2498 = vunpack.c.l.b16 %v1794
    %v2499 = vunpack.c.h.b16 %v1794
    %v2500 = vunpack.c.l.b16 %v1795
    %v2501 = vunpack.c.h.b16 %v1795
    %v2502 = vunpack.c.l.b16 %v1796
    %v2503 = vunpack.c.h.b16 %v1796
    %v2504 = vunpack.c.l.b16 %v1797
    %v2505 = vunpack.c.h.b16 %v1797
    %v2506 = vunpack.c.l.b16 %v1798
    %v2507 = vunpack.c.h.b16 %v1798
    %v2508 = vunpack.c.l.b16 %v1799
    %v2509 = vunpack.c.h.b16 %v1799
    %v2510 = vunpack.c.l.b16 %v1800
    %v2511 = vunpack.c.h.b16 %v1800
    %v2512 = vunpack.c.l.b16 %v1801
    %v2513 = vunpack.c.h.b16 %v1801
    %v2514 = vunpack.c.l.b16 %v1802
    %v2515 = vunpack.c.h.b16 %v1802
    %v2516 = vunpack.c.l.b16 %v1803
    %v2517 = vunpack.c.h.b16 %v1803
    %v2518 = vunpack.c.l.b16 %v1804
    %v2519 = vunpack.c.h.b16 %v1804
    %v2520 = vunpack.c.l.b16 %v1805
    %v2521 = vunpack.c.h.b16 %v1805
    %v2522 = vunpack.c.l.b16 %v1806
    %v2523 = vunpack.c.h.b16 %v1806
    %v2524 = vunpack.c.l.b16 %v1807
    %v2525 = vunpack.c.h.b16 %v1807
    %v2526 = vunpack.c.l.b16 %v1808
    %v2527 = vunpack.c.h.b16 %v1808
    %v2528 = vunpack.c.l.b16 %v1809
    %v2529 = vunpack.c.h.b16 %v1809
    %v2530 = vunpack.c.l.b16 %v1810
    %v2531 = vunpack.c.h.b16 %v1810
    %v2532 = vunpack.c.l.b16 %v1811
    %v2533 = vunpack.c.h.b16 %v1811
    %v2534 = vunpack.c.l.b16 %v1812
    %v2535 = vunpack.c.h.b16 %v1812
    %v2536 = vunpack.c.l.b16 %v1813
    %v2537 = vunpack.c.h.b16 %v1813
    %v2538 = vunpack.c.l.b16 %v1814
    %v2539 = vunpack.c.h.b16 %v1814
    %v2540 = vunpack.c.l.b16 %v1815
    %v2541 = vunpack.c.h.b16 %v1815
    %v2542 = vunpack.c.l.b16 %v1816
    %v2543 = vunpack.c.h.b16 %v1816
    %v2544 = vunpack.c.l.b16 %v1817
    %v2545 = vunpack.c.h.b16 %v1817
    %v2546 = vunpack.c.l.b16 %v1818
    %v2547 = vunpack.c.h.b16 %v1818
    %v2548 = vunpack.c.l.b16 %v1819
    %v2549 = vunpack.c.h.b16 %v1819
    %v2550 = vunpack.c.l.b16 %v1820
    %v2551 = vunpack.c.h.b16 %v1820
    %v2552 = vunpack.c.l.b16 %v1821
    %v2553 = vunpack.c.h.b16 %v1821
    %v2554 = vunpack.c.l.b16 %v1822
    %v2555 = vunpack.c.h.b16 %v1822
    %v2556 = vunpack.c.l.b16 %v1823
    %v2557 = vunpack.c.h.b16 %v1823
    %v2558 = vunpack.c.l.b16 %v1824
    %v2559 = vunpack.c.h.b16 %v1824
    %v2560 = vunpack.c.l.b16 %v1825
    %v2561 = vunpack.c.h.b16 %v1825
    %v2562 = vunpack.c.l.b16 %v1826
    %v2563 = vunpack.c.h.b16 %v1826
    %v2564 = vunpack.c.l.b16 %v1827
    %v2565 = vunpack.c.h.b16 %v1827
    %v2566 = vunpack.c.l.b16 %v1828
    %v2567 = vunpack.c.h.b16 %v1828
    %v2568 = vunpack.c.l.b16 %v1829
    %v2569 = vunpack.c.h.b16 %v1829
    %v2570 = vunpack.c.l.b16 %v1830
    %v2571 = vunpack.c.h.b16 %v1830
    %v2572 = vunpack.c.l.b16 %v1831
    %v2573 = vunpack.c.h.b16 %v1831
    %v2574 = vunpack.c.l.b16 %v1832
    %v2575 = vunpack.c.h.b16 %v1832
    %v2576 = vunpack.c.l.b16 %v1833
    %v2577 = vunpack.c.h.b16 %v1833
    %v2578 = vunpack.c.l.b16 %v1834
    %v2579 = vunpack.c.h.b16 %v1834
    %v2580 = vunpack.c.l.b16 %v1835
    %v2581 = vunpack.c.h.b16 %v1835
    %v2582 = vunpack.c.l.b16 %v1836
    %v2583 = vunpack.c.h.b16 %v1836
    %v2584 = vunpack.c.l.b16 %v1837
    %v2585 = vunpack.c.h.b16 %v1837
    %v2586 = vunpack.c.l.b16 %v1838
    %v2587 = vunpack.c.h.b16 %v1838
    %v2588 = vunpack.c.l.b16 %v1839
    %v2589 = vunpack.c.h.b16 %v1839
    %v2590 = vunpack.c.l.b16 %v1840
    %v2591 = vunpack.c.h.b16 %v1840
    %v2592 = vunpack.c.l.b16 %v1841
    %v2593 = vunpack.c.h.b16 %v1841
    %v2594 = vunpack.c.l.b16 %v1842
    %v2595 = vunpack.c.h.b16 %v1842
    %v2596 = vunpack.c.l.b16 %v1843
    %v2597 = vunpack.c.h.b16 %v1843
    %v2598 = vunpack.c.l.b16 %v1844
    %v2599 = vunpack.c.h.b16 %v1844
    %v2600 = vunpack.c.l.b16 %v1845
    %v2601 = vunpack.c.h.b16 %v1845
    %v2602 = vunpack.c.l.b16 %v1846
    %v2603 = vunpack.c.h.b16 %v1846
    %v2604 = vunpack.c.l.b16 %v1847
    %v2605 = vunpack.c.h.b16 %v1847
    %v2606 = vunpack.c.l.b16 %v1848
    %v2607 = vunpack.c.h.b16 %v1848
    %v2608 = vunpack.c.l.b16 %v1849
    %v2609 = vunpack.c.h.b16 %v1849
    %v2610 = vunpack.c.l.b16 %v1850
    %v2611 = vunpack.c.h.b16 %v1850
    %v2612 = vunpack.c.l.b16 %v1851
    %v2613 = vunpack.c.h.b16 %v1851
    %v2614 = vunpack.c.l.b16 %v1852
    %v2615 = vunpack.c.h.b16 %v1852
    %v2616 = vunpack.c.l.b16 %v1853
    %v2617 = vunpack.c.h.b16 %v1853
    %v2618 = vunpack.c.l.b16 %v1854
    %v2619 = vunpack.c.h.b16 %v1854
    %v2620 = vunpack.c.l.b16 %v1855
    %v2621 = vunpack.c.h.b16 %v1855
    %v2622 = vunpack.c.l.b16 %v1856
    %v2623 = vunpack.c.h.b16 %v1856
    %v2624 = vunpack.c.l.b16 %v1857
    %v2625 = vunpack.c.h.b16 %v1857
    %v2626 = vunpack.c.l.b16 %v1858
    %v2627 = vunpack.c.h.b16 %v1858
    %v2628 = vunpack.c.l.b16 %v1859
    %v2629 = vunpack.c.h.b16 %v1859
    %v2630 = vunpack.c.l.b16 %v1860
    %v2631 = vunpack.c.h.b16 %v1860
    %v2632 = vunpack.c.l.b16 %v1861
    %v2633 = vunpack.c.h.b16 %v1861
    %v2634 = vunpack.c.l.b16 %v1862
    %v2635 = vunpack.c.h.b16 %v1862
    %v2636 = vunpack.c.l.b16 %v1863
    %v2637 = vunpack.c.h.b16 %v1863
    %v2638 = vunpack.c.l.b16 %v1864
    %v2639 = vunpack.c.h.b16 %v1864
    %v2640 = vunpack.c.l.b16 %v1865
    %v2641 = vunpack.c.h.b16 %v1865
    %v2642 = vunpack.c.l.b16 %v1866
    %v2643 = vunpack.c.h.b16 %v1866
    %v2644 = vunpack.c.l.b16 %v1867
    %v2645 = vunpack.c.h.b16 %v1867
    %v2646 = vunpack.c.l.b16 %v1868
    %v2647 = vunpack.c.h.b16 %v1868
    %v2648 = vunpack.c.l.b16 %v1869
    %v2649 = vunpack.c.h.b16 %v1869
    %v2650 = vunpack.c.l.b16 %v1870
    %v2651 = vunpack.c.h.b16 %v1870
    %v2652 = vunpack.c.l.b16 %v1871
    %v2653 = vunpack.c.h.b16 %v1871
    %v2654 = vunpack.c.l.b16 %v1872
    %v2655 = vunpack.c.h.b16 %v1872
    %v2656 = vunpack.c.l.b16 %v1873
    %v2657 = vunpack.c.h.b16 %v1873
    %v2658 = vunpack.c.l.b16 %v1874
    %v2659 = vunpack.c.h.b16 %v1874
    %v2660 = vunpack.c.l.b16 %v1875
    %v2661 = vunpack.c.h.b16 %v1875
    %v2662 = vunpack.c.l.b16 %v1876
    %v2663 = vunpack.c.h.b16 %v1876
    %v2664 = vunpack.c.l.b16 %v1877
    %v2665 = vunpack.c.h.b16 %v1877
    %v2666 = vunpack.c.l.b16 %v1878
    %v2667 = vunpack.c.h.b16 %v1878
    %v2668 = vunpack.c.l.b16 %v1879
    %v2669 = vunpack.c.h.b16 %v1879
    %v2670 = vunpack.c.l.b16 %v1880
    %v2671 = vunpack.c.h.b16 %v1880
    %v2672 = vunpack.c.l.b16 %v1881
    %v2673 = vunpack.c.h.b16 %v1881
    %v2674 = vunpack.c.l.b16 %v1882
    %v2675 = vunpack.c.h.b16 %v1882
    %v2676 = vunpack.c.l.b16 %v1883
    %v2677 = vunpack.c.h.b16 %v1883
    %v2678 = vunpack.c.l.b16 %v1884
    %v2679 = vunpack.c.h.b16 %v1884
    %v2680 = vunpack.c.l.b16 %v1885
    %v2681 = vunpack.c.h.b16 %v1885
    %v2682 = vunpack.c.l.b16 %v1886
    %v2683 = vunpack.c.h.b16 %v1886
    %v2684 = vunpack.c.l.b16 %v1887
    %v2685 = vunpack.c.h.b16 %v1887
    %v2686 = vpack.c.b16 %v2178, %v2174
    %v2687 = vpack.c.b16 %v2179, %v2175
    %v2688 = vpack.c.b16 %v2180, %v2176
    %v2689 = vpack.c.b16 %v2181, %v2177
    %v2690 = vpack.c.b16 %v2186, %v2182
    %v2691 = vpack.c.b16 %v2187, %v2183
    %v2692 = vpack.c.b16 %v2188, %v2184
    %v2693 = vpack.c.b16 %v2189, %v2185
    %v2694 = vpack.c.b16 %v2194, %v2190
    %v2695 = vpack.c.b16 %v2195, %v2191
    %v2696 = vpack.c.b16 %v2196, %v2192
    %v2697 = vpack.c.b16 %v2197, %v2193
    %v2698 = vpack.c.b16 %v2202, %v2198
    %v2699 = vpack.c.b16 %v2203, %v2199
    %v2700 = vpack.c.b16 %v2204, %v2200
    %v2701 = vpack.c.b16 %v2205, %v2201
    %v2702 = vpack.c.b16 %v2210, %v2206
    %v2703 = vpack.c.b16 %v2211, %v2207
    %v2704 = vpack.c.b16 %v2212, %v2208
    %v2705 = vpack.c.b16 %v2213, %v2209
    %v2706 = vpack.c.b16 %v2218, %v2214
    %v2707 = vpack.c.b16 %v2219, %v2215
    %v2708 = vpack.c.b16 %v2220, %v2216
    %v2709 = vpack.c.b16 %v2221, %v2217
    %v2710 = vpack.c.b16 %v2226, %v2222
    %v2711 = vpack.c.b16 %v2227, %v2223
    %v2712 = vpack.c.b16 %v2228, %v2224
    %v2713 = vpack.c.b16 %v2229, %v2225
    %v2714 = vpack.c.b16 %v2234, %v2230
    %v2715 = vpack.c.b16 %v2235, %v2231
    %v2716 = vpack.c.b16 %v2236, %v2232
    %v2717 = vpack.c.b16 %v2237, %v2233
    %v2718 = vpack.c.b16 %v2242, %v2238
    %v2719 = vpack.c.b16 %v2243, %v2239
    %v2720 = vpack.c.b16 %v2244, %v2240
    %v2721 = vpack.c.b16 %v2245, %v2241
    %v2722 = vpack.c.b16 %v2250, %v2246
    %v2723 = vpack.c.b16 %v2251, %v2247
    %v2724 = vpack.c.b16 %v2252, %v2248
    %v2725 = vpack.c.b16 %v2253, %v2249
    %v2726 = vpack.c.b16 %v2258, %v2254
    %v2727 = vpack.c.b16 %v2259, %v2255
    %v2728 = vpack.c.b16 %v2260, %v2256
    %v2729 = vpack.c.b16 %v2261, %v2257
    %v2730 = vpack.c.b16 %v2266, %v2262
    %v2731 = vpack.c.b16 %v2267, %v2263
    %v2732 = vpack.c.b16 %v2268, %v2264
    %v2733 = vpack.c.b16 %v2269, %v2265
    %v2734 = vpack.c.b16 %v2274, %v2270
    %v2735 = vpack.c.b16 %v2275, %v2271
    %v2736 = vpack.c.b16 %v2276, %v2272
    %v2737 = vpack.c.b16 %v2277, %v2273
    %v2738 = vpack.c.b16 %v2282, %v2278
    %v2739 = vpack.c.b16 %v2283, %v2279
    %v2740 = vpack.c.b16 %v2284, %v2280
    %v2741 = vpack.c.b16 %v2285, %v2281
    %v2742 = vpack.c.b16 %v2290, %v2286
    %v2743 = vpack.c.b16 %v2291, %v2287
    %v2744 = vpack.c.b16 %v2292, %v2288
    %v2745 = vpack.c.b16 %v2293, %v2289
    %v2746 = vpack.c.b16 %v2298, %v2294
    %v2747 = vpack.c.b16 %v2299, %v2295
    %v2748 = vpack.c.b16 %v2300, %v2296
    %v2749 = vpack.c.b16 %v2301, %v2297
    %v2750 = vpack.c.b16 %v2306, %v2302
    %v2751 = vpack.c.b16 %v2307, %v2303
    %v2752 = vpack.c.b16 %v2308, %v2304
    %v2753 = vpack.c.b16 %v2309, %v2305
    %v2754 = vpack.c.b16 %v2314, %v2310
    %v2755 = vpack.c.b16 %v2315, %v2311
    %v2756 = vpack.c.b16 %v2316, %v2312
    %v2757 = vpack.c.b16 %v2317, %v2313
    %v2758 = vpack.c.b16 %v2322, %v2318
    %v2759 = vpack.c.b16 %v2323, %v2319
    %v2760 = vpack.c.b16 %v2324, %v2320
    %v2761 = vpack.c.b16 %v2325, %v2321
    %v2762 = vpack.c.b16 %v2330, %v2326
    %v2763 = vpack.c.b16 %v2331, %v2327
    %v2764 = vpack.c.b16 %v2332, %v2328
    %v2765 = vpack.c.b16 %v2333, %v2329
    %v2766 = vpack.c.b16 %v2338, %v2334
    %v2767 = vpack.c.b16 %v2339, %v2335
    %v2768 = vpack.c.b16 %v2340, %v2336
    %v2769 = vpack.c.b16 %v2341, %v2337
    %v2770 = vpack.c.b16 %v2346, %v2342
    %v2771 = vpack.c.b16 %v2347, %v2343
    %v2772 = vpack.c.b16 %v2348, %v2344
    %v2773 = vpack.c.b16 %v2349, %v2345
    %v2774 = vpack.c.b16 %v2354, %v2350
    %v2775 = vpack.c.b16 %v2355, %v2351
    %v2776 = vpack.c.b16 %v2356, %v2352
    %v2777 = vpack.c.b16 %v2357, %v2353
    %v2778 = vpack.c.b16 %v2362, %v2358
    %v2779 = vpack.c.b16 %v2363, %v2359
    %v2780 = vpack.c.b16 %v2364, %v2360
    %v2781 = vpack.c.b16 %v2365, %v2361
    %v2782 = vpack.c.b16 %v2370, %v2366
    %v2783 = vpack.c.b16 %v2371, %v2367
    %v2784 = vpack.c.b16 %v2372, %v2368
    %v2785 = vpack.c.b16 %v2373, %v2369
    %v2786 = vpack.c.b16 %v2378, %v2374
    %v2787 = vpack.c.b16 %v2379, %v2375
    %v2788 = vpack.c.b16 %v2380, %v2376
    %v2789 = vpack.c.b16 %v2381, %v2377
    %v2790 = vpack.c.b16 %v2386, %v2382
    %v2791 = vpack.c.b16 %v2387, %v2383
    %v2792 = vpack.c.b16 %v2388, %v2384
    %v2793 = vpack.c.b16 %v2389, %v2385
    %v2794 = vpack.c.b16 %v2394, %v2390
    %v2795 = vpack.c.b16 %v2395, %v2391
    %v2796 = vpack.c.b16 %v2396, %v2392
    %v2797 = vpack.c.b16 %v2397, %v2393
    %v2798 = vpack.c.b16 %v2402, %v2398
    %v2799 = vpack.c.b16 %v2403, %v2399
    %v2800 = vpack.c.b16 %v2404, %v2400
    %v2801 = vpack.c.b16 %v2405, %v2401
    %v2802 = vpack.c.b16 %v2410, %v2406
    %v2803 = vpack.c.b16 %v2411, %v2407
    %v2804 = vpack.c.b16 %v2412, %v2408
    %v2805 = vpack.c.b16 %v2413, %v2409
    %v2806 = vpack.c.b16 %v2418, %v2414
    %v2807 = vpack.c.b16 %v2419, %v2415
    %v2808 = vpack.c.b16 %v2420, %v2416
    %v2809 = vpack.c.b16 %v2421, %v2417
    %v2810 = vpack.c.b16 %v2426, %v2422
    %v2811 = vpack.c.b16 %v2427, %v2423
    %v2812 = vpack.c.b16 %v2428, %v2424
    %v2813 = vpack.c.b16 %v2429, %v2425
    %v2814 = vpack.c.b16 %v2434, %v2430
    %v2815 = vpack.c.b16 %v2435, %v2431
    %v2816 = vpack.c.b16 %v2436, %v2432
    %v2817 = vpack.c.b16 %v2437, %v2433
    %v2818 = vpack.c.b16 %v2442, %v2438
    %v2819 = vpack.c.b16 %v2443, %v2439
    %v2820 = vpack.c.b16 %v2444, %v2440
    %v2821 = vpack.c.b16 %v2445, %v2441
    %v2822 = vpack.c.b16 %v2450, %v2446
    %v2823 = vpack.c.b16 %v2451, %v2447
    %v2824 = vpack.c.b16 %v2452, %v2448
    %v2825 = vpack.c.b16 %v2453, %v2449
    %v2826 = vpack.c.b16 %v2458, %v2454
    %v2827 = vpack.c.b16 %v2459, %v2455
    %v2828 = vpack.c.b16 %v2460, %v2456
    %v2829 = vpack.c.b16 %v2461, %v2457
    %v2830 = vpack.c.b16 %v2466, %v2462
    %v2831 = vpack.c.b16 %v2467, %v2463
    %v2832 = vpack.c.b16 %v2468, %v2464
    %v2833 = vpack.c.b16 %v2469, %v2465
    %v2834 = vpack.c.b16 %v2474, %v2470
    %v2835 = vpack.c.b16 %v2475, %v2471
    %v2836 = vpack.c.b16 %v2476, %v2472
    %v2837 = vpack.c.b16 %v2477, %v2473
    %v2838 = vpack.c.b16 %v2482, %v2478
    %v2839 = vpack.c.b16 %v2483, %v2479
    %v2840 = vpack.c.b16 %v2484, %v2480
    %v2841 = vpack.c.b16 %v2485, %v2481
    %v2842 = vpack.c.b16 %v2490, %v2486
    %v2843 = vpack.c.b16 %v2491, %v2487
    %v2844 = vpack.c.b16 %v2492, %v2488
    %v2845 = vpack.c.b16 %v2493, %v2489
    %v2846 = vpack.c.b16 %v2498, %v2494
    %v2847 = vpack.c.b16 %v2499, %v2495
    %v2848 = vpack.c.b16 %v2500, %v2496
    %v2849 = vpack.c.b16 %v2501, %v2497
    %v2850 = vpack.c.b16 %v2506, %v2502
    %v2851 = vpack.c.b16 %v2507, %v2503
    %v2852 = vpack.c.b16 %v2508, %v2504
    %v2853 = vpack.c.b16 %v2509, %v2505
    %v2854 = vpack.c.b16 %v2514, %v2510
    %v2855 = vpack.c.b16 %v2515, %v2511
    %v2856 = vpack.c.b16 %v2516, %v2512
    %v2857 = vpack.c.b16 %v2517, %v2513
    %v2858 = vpack.c.b16 %v2522, %v2518
    %v2859 = vpack.c.b16 %v2523, %v2519
    %v2860 = vpack.c.b16 %v2524, %v2520
    %v2861 = vpack.c.b16 %v2525, %v2521
    %v2862 = vpack.c.b16 %v2530, %v2526
    %v2863 = vpack.c.b16 %v2531, %v2527
    %v2864 = vpack.c.b16 %v2532, %v2528
    %v2865 = vpack.c.b16 %v2533, %v2529
    %v2866 = vpack.c.b16 %v2538, %v2534
    %v2867 = vpack.c.b16 %v2539, %v2535
    %v2868 = vpack.c.b16 %v2540, %v2536
    %v2869 = vpack.c.b16 %v2541, %v2537
    %v2870 = vpack.c.b16 %v2546, %v2542
    %v2871 = vpack.c.b16 %v2547, %v2543
    %v2872 = vpack.c.b16 %v2548, %v2544
    %v2873 = vpack.c.b16 %v2549, %v2545
    %v2874 = vpack.c.b16 %v2554, %v2550
    %v2875 = vpack.c.b16 %v2555, %v2551
    %v2876 = vpack.c.b16 %v2556, %v2552
    %v2877 = vpack.c.b16 %v2557, %v2553
    %v2878 = vpack.c.b16 %v2562, %v2558
    %v2879 = vpack.c.b16 %v2563, %v2559
    %v2880 = vpack.c.b16 %v2564, %v2560
    %v2881 = vpack.c.b16 %v2565, %v2561
    %v2882 = vpack.c.b16 %v2570, %v2566
    %v2883 = vpack.c.b16 %v2571, %v2567
    %v2884 = vpack.c.b16 %v2572, %v2568
    %v2885 = vpack.c.b16 %v2573, %v2569
    %v2886 = vpack.c.b16 %v2578, %v2574
    %v2887 = vpack.c.b16 %v2579, %v2575
    %v2888 = vpack.c.b16 %v2580, %v2576
    %v2889 = vpack.c.b16 %v2581, %v2577
    %v2890 = vpack.c.b16 %v2586, %v2582
    %v2891 = vpack.c.b16 %v2587, %v2583
    %v2892 = vpack.c.b16 %v2588, %v2584
    %v2893 = vpack.c.b16 %v2589, %v2585
    %v2894 = vpack.c.b16 %v2594, %v2590
    %v2895 = vpack.c.b16 %v2595, %v2591
    %v2896 = vpack.c.b16 %v2596, %v2592
    %v2897 = vpack.c.b16 %v2597, %v2593
    %v2898 = vpack.c.b16 %v2602, %v2598
    %v2899 = vpack.c.b16 %v2603, %v2599
    %v2900 = vpack.c.b16 %v2604, %v2600
    %v2901 = vpack.c.b16 %v2605, %v2601
    %v2902 = vpack.c.b16 %v2610, %v2606
    %v2903 = vpack.c.b16 %v2611, %v2607
    %v2904 = vpack.c.b16 %v2612, %v2608
    %v2905 = vpack.c.b16 %v2613, %v2609
    %v2906 = vpack.c.b16 %v2618, %v2614
    %v2907 = vpack.c.b16 %v2619, %v2615
    %v2908 = vpack.c.b16 %v2620, %v2616
    %v2909 = vpack.c.b16 %v2621, %v2617
    %v2910 = vpack.c.b16 %v2626, %v2622
    %v2911 = vpack.c.b16 %v2627, %v2623
    %v2912 = vpack.c.b16 %v2628, %v2624
    %v2913 = vpack.c.b16 %v2629, %v2625
    %v2914 = vpack.c.b16 %v2634, %v2630
    %v2915 = vpack.c.b16 %v2635, %v2631
    %v2916 = vpack.c.b16 %v2636, %v2632
    %v2917 = vpack.c.b16 %v2637, %v2633
    %v2918 = vpack.c.b16 %v2642, %v2638
    %v2919 = vpack.c.b16 %v2643, %v2639
    %v2920 = vpack.c.b16 %v2644, %v2640
    %v2921 = vpack.c.b16 %v2645, %v2641
    %v2922 = vpack.c.b16 %v2650, %v2646
    %v2923 = vpack.c.b16 %v2651, %v2647
    %v2924 = vpack.c.b16 %v2652, %v2648
    %v2925 = vpack.c.b16 %v2653, %v2649
    %v2926 = vpack.c.b16 %v2658, %v2654
    %v2927 = vpack.c.b16 %v2659, %v2655
    %v2928 = vpack.c.b16 %v2660, %v2656
    %v2929 = vpack.c.b16 %v2661, %v2657
    %v2930 = vpack.c.b16 %v2666, %v2662
    %v2931 = vpack.c.b16 %v2667, %v2663
    %v2932 = vpack.c.b16 %v2668, %v2664
    %v2933 = vpack.c.b16 %v2669, %v2665
    %v2934 = vpack.c.b16 %v2674, %v2670
    %v2935 = vpack.c.b16 %v2675, %v2671
    %v2936 = vpack.c.b16 %v2676, %v2672
    %v2937 = vpack.c.b16 %v2677, %v2673
    %v2938 = vpack.c.b16 %v2682, %v2678
    %v2939 = vpack.c.b16 %v2683, %v2679
    %v2940 = vpack.c.b16 %v2684, %v2680
    %v2941 = vpack.c.b16 %v2685, %v2681
    %3198 = vmatprep.subr.bf16.mxu0 %v2687
    %3199 = vmatpush1.bf16.msra.mxu0 %v2686
    %3200 = vmatprep.subr.bf16.mxu0 %v2691
    %3201 = vmatpush1.bf16.msra.mxu0 %v2690
    %3202 = vmatprep.subr.bf16.mxu0 %v2695
    %3203 = vmatpush1.bf16.msra.mxu0 %v2694
    %3204 = vmatprep.subr.bf16.mxu0 %v2699
    %3205 = vmatpush1.bf16.msra.mxu0 %v2698
    %3206 = vmatprep.subr.bf16.mxu0 %v2703
    %3207 = vmatpush1.bf16.msra.mxu0 %v2702
    %3208 = vmatprep.subr.bf16.mxu0 %v2707
    %3209 = vmatpush1.bf16.msra.mxu0 %v2706
    %3210 = vmatprep.subr.bf16.mxu0 %v2711
    %3211 = vmatpush1.bf16.msra.mxu0 %v2710
    %3212 = vmatprep.subr.bf16.mxu0 %v2715
    %3213 = vmatpush1.bf16.msra.mxu0 %v2714
    %3214 = vmatprep.subr.bf16.mxu0 %v2719
    %3215 = vmatpush1.bf16.msra.mxu0 %v2718
    %3216 = vmatprep.subr.bf16.mxu0 %v2723
    %3217 = vmatpush1.bf16.msra.mxu0 %v2722
    %3218 = vmatprep.subr.bf16.mxu0 %v2727
    %3219 = vmatpush1.bf16.msra.mxu0 %v2726
    %3220 = vmatprep.subr.bf16.mxu0 %v2731
    %3221 = vmatpush1.bf16.msra.mxu0 %v2730
    %3222 = vmatprep.subr.bf16.mxu0 %v2735
    %3223 = vmatpush1.bf16.msra.mxu0 %v2734
    %3224 = vmatprep.subr.bf16.mxu0 %v2739
    %3225 = vmatpush1.bf16.msra.mxu0 %v2738
    %3226 = vmatprep.subr.bf16.mxu0 %v2743
    %3227 = vmatpush1.bf16.msra.mxu0 %v2742
    %3228 = vmatprep.subr.bf16.mxu0 %v2747
    %3229 = vmatpush1.bf16.msra.mxu0 %v2746
    %3230 = vmatprep.mubr.bf16.mxu0 %v1889
    %3231 = vmatmul.mubr.bf16.gmra.mrb[0].mxu0 %v1888
    %v3232 = vpop.f32.mrb[0].mxu0
    %v3233 = vadd.f32 %v1901, %v3232
    %v3234 = vpop.f32.mrb[0].mxu0
    %v3235 = vadd.f32 %v1905, %v3234
    %v3236 = vpop.f32.mrb[0].mxu0
    %v3237 = vpop.f32.mrb[0].mxu0
    %3238 = vdwg.mxu0
    %3239 = vmatprep.subr.bf16.mxu0 %v2751
    %3240 = vmatpush1.bf16.msra.mxu0 %v2750
    %3241 = vmatprep.subr.bf16.mxu0 %v2755
    %3242 = vmatpush1.bf16.msra.mxu0 %v2754
    %3243 = vmatprep.subr.bf16.mxu0 %v2759
    %3244 = vmatpush1.bf16.msra.mxu0 %v2758
    %3245 = vmatprep.subr.bf16.mxu0 %v2763
    %3246 = vmatpush1.bf16.msra.mxu0 %v2762
    %3247 = vmatprep.subr.bf16.mxu0 %v2767
    %3248 = vmatpush1.bf16.msra.mxu0 %v2766
    %3249 = vmatprep.subr.bf16.mxu0 %v2771
    %3250 = vmatpush1.bf16.msra.mxu0 %v2770
    %3251 = vmatprep.subr.bf16.mxu0 %v2775
    %3252 = vmatpush1.bf16.msra.mxu0 %v2774
    %3253 = vmatprep.subr.bf16.mxu0 %v2779
    %3254 = vmatpush1.bf16.msra.mxu0 %v2778
    %3255 = vmatprep.subr.bf16.mxu0 %v2783
    %3256 = vmatpush1.bf16.msra.mxu0 %v2782
    %3257 = vmatprep.subr.bf16.mxu0 %v2787
    %3258 = vmatpush1.bf16.msra.mxu0 %v2786
    %3259 = vmatprep.subr.bf16.mxu0 %v2791
    %3260 = vmatpush1.bf16.msra.mxu0 %v2790
    %3261 = vmatprep.subr.bf16.mxu0 %v2795
    %3262 = vmatpush1.bf16.msra.mxu0 %v2794
    %3263 = vmatprep.subr.bf16.mxu0 %v2799
    %3264 = vmatpush1.bf16.msra.mxu0 %v2798
    %3265 = vmatprep.subr.bf16.mxu0 %v2803
    %3266 = vmatpush1.bf16.msra.mxu0 %v2802
    %3267 = vmatprep.subr.bf16.mxu0 %v2807
    %3268 = vmatpush1.bf16.msra.mxu0 %v2806
    %3269 = vmatprep.subr.bf16.mxu0 %v2811
    %3270 = vmatpush1.bf16.msra.mxu0 %v2810
    %3271 = vmatprep.mubr.bf16.mxu0 %v1891
    %3272 = vmatmul.mubr.bf16.gmra.mrb[0].mxu0 %v1890
    %v3273 = vpop.f32.mrb[0].mxu0
    %v3274 = vadd.f32 %v3233, %v3273
    %v3275 = vpop.f32.mrb[0].mxu0
    %v3276 = vadd.f32 %v3235, %v3275
    %v3277 = vpop.f32.mrb[0].mxu0
    %v3278 = vpop.f32.mrb[0].mxu0
    %3279 = vdwg.mxu0
    %3280 = vmatprep.subr.bf16.mxu0 %v2815
    %3281 = vmatpush1.bf16.msra.mxu0 %v2814
    %3282 = vmatprep.subr.bf16.mxu0 %v2819
    %3283 = vmatpush1.bf16.msra.mxu0 %v2818
    %3284 = vmatprep.subr.bf16.mxu0 %v2823
    %3285 = vmatpush1.bf16.msra.mxu0 %v2822
    %3286 = vmatprep.subr.bf16.mxu0 %v2827
    %3287 = vmatpush1.bf16.msra.mxu0 %v2826
    %3288 = vmatprep.subr.bf16.mxu0 %v2831
    %3289 = vmatpush1.bf16.msra.mxu0 %v2830
    %3290 = vmatprep.subr.bf16.mxu0 %v2835
    %3291 = vmatpush1.bf16.msra.mxu0 %v2834
    %3292 = vmatprep.subr.bf16.mxu0 %v2839
    %3293 = vmatpush1.bf16.msra.mxu0 %v2838
    %3294 = vmatprep.subr.bf16.mxu0 %v2843
    %3295 = vmatpush1.bf16.msra.mxu0 %v2842
    %3296 = vmatprep.subr.bf16.mxu0 %v2847
    %3297 = vmatpush1.bf16.msra.mxu0 %v2846
    %3298 = vmatprep.subr.bf16.mxu0 %v2851
    %3299 = vmatpush1.bf16.msra.mxu0 %v2850
    %3300 = vmatprep.subr.bf16.mxu0 %v2855
    %3301 = vmatpush1.bf16.msra.mxu0 %v2854
    %3302 = vmatprep.subr.bf16.mxu0 %v2859
    %3303 = vmatpush1.bf16.msra.mxu0 %v2858
    %3304 = vmatprep.subr.bf16.mxu0 %v2863
    %3305 = vmatpush1.bf16.msra.mxu0 %v2862
    %3306 = vmatprep.subr.bf16.mxu0 %v2867
    %3307 = vmatpush1.bf16.msra.mxu0 %v2866
    %3308 = vmatprep.subr.bf16.mxu0 %v2871
    %3309 = vmatpush1.bf16.msra.mxu0 %v2870
    %3310 = vmatprep.subr.bf16.mxu0 %v2875
    %3311 = vmatpush1.bf16.msra.mxu0 %v2874
    %3312 = vmatprep.mubr.bf16.mxu0 %v1893
    %3313 = vmatmul.mubr.bf16.gmra.mrb[0].mxu0 %v1892
    %v3314 = vpop.f32.mrb[0].mxu0
    %v3315 = vadd.f32 %v3274, %v3314
    %v3316 = vpop.f32.mrb[0].mxu0
    %v3317 = vadd.f32 %v3276, %v3316
    %v3318 = vpop.f32.mrb[0].mxu0
    %v3319 = vpop.f32.mrb[0].mxu0
    %3320 = vdwg.mxu0
    %3321 = vmatprep.subr.bf16.mxu0 %v2879
    %3322 = vmatpush1.bf16.msra.mxu0 %v2878
    %3323 = vmatprep.subr.bf16.mxu0 %v2883
    %3324 = vmatpush1.bf16.msra.mxu0 %v2882
    %3325 = vmatprep.subr.bf16.mxu0 %v2887
    %3326 = vmatpush1.bf16.msra.mxu0 %v2886
    %3327 = vmatprep.subr.bf16.mxu0 %v2891
    %3328 = vmatpush1.bf16.msra.mxu0 %v2890
    %3329 = vmatprep.subr.bf16.mxu0 %v2895
    %3330 = vmatpush1.bf16.msra.mxu0 %v2894
    %3331 = vmatprep.subr.bf16.mxu0 %v2899
    %3332 = vmatpush1.bf16.msra.mxu0 %v2898
    %3333 = vmatprep.subr.bf16.mxu0 %v2903
    %3334 = vmatpush1.bf16.msra.mxu0 %v2902
    %3335 = vmatprep.subr.bf16.mxu0 %v2907
    %3336 = vmatpush1.bf16.msra.mxu0 %v2906
    %3337 = vmatprep.subr.bf16.mxu0 %v2911
    %3338 = vmatpush1.bf16.msra.mxu0 %v2910
    %3339 = vmatprep.subr.bf16.mxu0 %v2915
    %3340 = vmatpush1.bf16.msra.mxu0 %v2914
    %3341 = vmatprep.subr.bf16.mxu0 %v2919
    %3342 = vmatpush1.bf16.msra.mxu0 %v2918
    %3343 = vmatprep.subr.bf16.mxu0 %v2923
    %3344 = vmatpush1.bf16.msra.mxu0 %v2922
    %3345 = vmatprep.subr.bf16.mxu0 %v2927
    %3346 = vmatpush1.bf16.msra.mxu0 %v2926
    %3347 = vmatprep.subr.bf16.mxu0 %v2931
    %3348 = vmatpush1.bf16.msra.mxu0 %v2930
    %3349 = vmatprep.subr.bf16.mxu0 %v2935
    %3350 = vmatpush1.bf16.msra.mxu0 %v2934
    %3351 = vmatprep.subr.bf16.mxu0 %v2939
    %3352 = vmatpush1.bf16.msra.mxu0 %v2938
    %3353 = vmatprep.mubr.bf16.mxu0 %v1895
    %3354 = vmatmul.mubr.bf16.gmra.mrb[0].mxu0 %v1894
    %v3355 = vpop.f32.mrb[0].mxu0
    %v3356 = vadd.f32 %v3315, %v3355
    %v3357 = vpop.f32.mrb[0].mxu0
    %v3358 = vadd.f32 %v3317, %v3357
    %v3359 = vpop.f32.mrb[0].mxu0
    %v3360 = vpop.f32.mrb[0].mxu0
    %3361 = vdwg.mxu0
    %3362 = vmatprep.subr.bf16.mxu0 %v2689
    %3363 = vmatpush1.bf16.msra.mxu0 %v2688
    %3364 = vmatprep.subr.bf16.mxu0 %v2693
    %3365 = vmatpush1.bf16.msra.mxu0 %v2692
    %3366 = vmatprep.subr.bf16.mxu0 %v2697
    %3367 = vmatpush1.bf16.msra.mxu0 %v2696
    %3368 = vmatprep.subr.bf16.mxu0 %v2701
    %3369 = vmatpush1.bf16.msra.mxu0 %v2700
    %3370 = vmatprep.subr.bf16.mxu0 %v2705
    %3371 = vmatpush1.bf16.msra.mxu0 %v2704
    %3372 = vmatprep.subr.bf16.mxu0 %v2709
    %3373 = vmatpush1.bf16.msra.mxu0 %v2708
    %3374 = vmatprep.subr.bf16.mxu0 %v2713
    %3375 = vmatpush1.bf16.msra.mxu0 %v2712
    %3376 = vmatprep.subr.bf16.mxu0 %v2717
    %3377 = vmatpush1.bf16.msra.mxu0 %v2716
    %3378 = vmatprep.subr.bf16.mxu0 %v2721
    %3379 = vmatpush1.bf16.msra.mxu0 %v2720
    %3380 = vmatprep.subr.bf16.mxu0 %v2725
    %3381 = vmatpush1.bf16.msra.mxu0 %v2724
    %3382 = vmatprep.subr.bf16.mxu0 %v2729
    %3383 = vmatpush1.bf16.msra.mxu0 %v2728
    %3384 = vmatprep.subr.bf16.mxu0 %v2733
    %3385 = vmatpush1.bf16.msra.mxu0 %v2732
    %3386 = vmatprep.subr.bf16.mxu0 %v2737
    %3387 = vmatpush1.bf16.msra.mxu0 %v2736
    %3388 = vmatprep.subr.bf16.mxu0 %v2741
    %3389 = vmatpush1.bf16.msra.mxu0 %v2740
    %3390 = vmatprep.subr.bf16.mxu0 %v2745
    %3391 = vmatpush1.bf16.msra.mxu0 %v2744
    %3392 = vmatprep.subr.bf16.mxu0 %v2749
    %3393 = vmatpush1.bf16.msra.mxu0 %v2748
    %3394 = vmatprep.mubr.bf16.mxu0 %v1889
    %3395 = vmatmul.mubr.bf16.gmra.mrb[0].mxu0 %v1888
    %v3396 = vpop.f32.mrb[0].mxu0
    %v3397 = vadd.f32 %v1909, %v3396
    %v3398 = vpop.f32.mrb[0].mxu0
    %v3399 = vadd.f32 %v1913, %v3398
    %v3400 = vpop.f32.mrb[0].mxu0
    %v3401 = vpop.f32.mrb[0].mxu0
    %3402 = vdwg.mxu0
    %3403 = vmatprep.subr.bf16.mxu0 %v2753
    %3404 = vmatpush1.bf16.msra.mxu0 %v2752
    %3405 = vmatprep.subr.bf16.mxu0 %v2757
    %3406 = vmatpush1.bf16.msra.mxu0 %v2756
    %3407 = vmatprep.subr.bf16.mxu0 %v2761
    %3408 = vmatpush1.bf16.msra.mxu0 %v2760
    %3409 = vmatprep.subr.bf16.mxu0 %v2765
    %3410 = vmatpush1.bf16.msra.mxu0 %v2764
    %3411 = vmatprep.subr.bf16.mxu0 %v2769
    %3412 = vmatpush1.bf16.msra.mxu0 %v2768
    %3413 = vmatprep.subr.bf16.mxu0 %v2773
    %3414 = vmatpush1.bf16.msra.mxu0 %v2772
    %3415 = vmatprep.subr.bf16.mxu0 %v2777
    %3416 = vmatpush1.bf16.msra.mxu0 %v2776
    %3417 = vmatprep.subr.bf16.mxu0 %v2781
    %3418 = vmatpush1.bf16.msra.mxu0 %v2780
    %3419 = vmatprep.subr.bf16.mxu0 %v2785
    %3420 = vmatpush1.bf16.msra.mxu0 %v2784
    %3421 = vmatprep.subr.bf16.mxu0 %v2789
    %3422 = vmatpush1.bf16.msra.mxu0 %v2788
    %3423 = vmatprep.subr.bf16.mxu0 %v2793
    %3424 = vmatpush1.bf16.msra.mxu0 %v2792
    %3425 = vmatprep.subr.bf16.mxu0 %v2797
    %3426 = vmatpush1.bf16.msra.mxu0 %v2796
    %3427 = vmatprep.subr.bf16.mxu0 %v2801
    %3428 = vmatpush1.bf16.msra.mxu0 %v2800
    %3429 = vmatprep.subr.bf16.mxu0 %v2805
    %3430 = vmatpush1.bf16.msra.mxu0 %v2804
    %3431 = vmatprep.subr.bf16.mxu0 %v2809
    %3432 = vmatpush1.bf16.msra.mxu0 %v2808
    %3433 = vmatprep.subr.bf16.mxu0 %v2813
    %3434 = vmatpush1.bf16.msra.mxu0 %v2812
    %3435 = vmatprep.mubr.bf16.mxu0 %v1891
    %3436 = vmatmul.mubr.bf16.gmra.mrb[0].mxu0 %v1890
    %v3437 = vpop.f32.mrb[0].mxu0
    %v3438 = vadd.f32 %v3397, %v3437
    %v3439 = vpop.f32.mrb[0].mxu0
    %v3440 = vadd.f32 %v3399, %v3439
    %v3441 = vpop.f32.mrb[0].mxu0
    %v3442 = vpop.f32.mrb[0].mxu0
    %3443 = vdwg.mxu0
    %3444 = vmatprep.subr.bf16.mxu0 %v2817
    %3445 = vmatpush1.bf16.msra.mxu0 %v2816
    %3446 = vmatprep.subr.bf16.mxu0 %v2821
    %3447 = vmatpush1.bf16.msra.mxu0 %v2820
    %3448 = vmatprep.subr.bf16.mxu0 %v2825
    %3449 = vmatpush1.bf16.msra.mxu0 %v2824
    %3450 = vmatprep.subr.bf16.mxu0 %v2829
    %3451 = vmatpush1.bf16.msra.mxu0 %v2828
    %3452 = vmatprep.subr.bf16.mxu0 %v2833
    %3453 = vmatpush1.bf16.msra.mxu0 %v2832
    %3454 = vmatprep.subr.bf16.mxu0 %v2837
    %3455 = vmatpush1.bf16.msra.mxu0 %v2836
    %3456 = vmatprep.subr.bf16.mxu0 %v2841
    %3457 = vmatpush1.bf16.msra.mxu0 %v2840
    %3458 = vmatprep.subr.bf16.mxu0 %v2845
    %3459 = vmatpush1.bf16.msra.mxu0 %v2844
    %3460 = vmatprep.subr.bf16.mxu0 %v2849
    %3461 = vmatpush1.bf16.msra.mxu0 %v2848
    %3462 = vmatprep.subr.bf16.mxu0 %v2853
    %3463 = vmatpush1.bf16.msra.mxu0 %v2852
    %3464 = vmatprep.subr.bf16.mxu0 %v2857
    %3465 = vmatpush1.bf16.msra.mxu0 %v2856
    %3466 = vmatprep.subr.bf16.mxu0 %v2861
    %3467 = vmatpush1.bf16.msra.mxu0 %v2860
    %3468 = vmatprep.subr.bf16.mxu0 %v2865
    %3469 = vmatpush1.bf16.msra.mxu0 %v2864
    %3470 = vmatprep.subr.bf16.mxu0 %v2869
    %3471 = vmatpush1.bf16.msra.mxu0 %v2868
    %3472 = vmatprep.subr.bf16.mxu0 %v2873
    %3473 = vmatpush1.bf16.msra.mxu0 %v2872
    %3474 = vmatprep.subr.bf16.mxu0 %v2877
    %3475 = vmatpush1.bf16.msra.mxu0 %v2876
    %3476 = vmatprep.mubr.bf16.mxu0 %v1893
    %3477 = vmatmul.mubr.bf16.gmra.mrb[0].mxu0 %v1892
    %v3478 = vpop.f32.mrb[0].mxu0
    %v3479 = vadd.f32 %v3438, %v3478
    %v3480 = vpop.f32.mrb[0].mxu0
    %v3481 = vadd.f32 %v3440, %v3480
    %v3482 = vpop.f32.mrb[0].mxu0
    %v3483 = vpop.f32.mrb[0].mxu0
    %3484 = vdwg.mxu0
    %3485 = vmatprep.subr.bf16.mxu0 %v2881
    %3486 = vmatpush1.bf16.msra.mxu0 %v2880
    %3487 = vmatprep.subr.bf16.mxu0 %v2885
    %3488 = vmatpush1.bf16.msra.mxu0 %v2884
    %3489 = vmatprep.subr.bf16.mxu0 %v2889
    %3490 = vmatpush1.bf16.msra.mxu0 %v2888
    %3491 = vmatprep.subr.bf16.mxu0 %v2893
    %3492 = vmatpush1.bf16.msra.mxu0 %v2892
    %3493 = vmatprep.subr.bf16.mxu0 %v2897
    %3494 = vmatpush1.bf16.msra.mxu0 %v2896
    %3495 = vmatprep.subr.bf16.mxu0 %v2901
    %3496 = vmatpush1.bf16.msra.mxu0 %v2900
    %3497 = vmatprep.subr.bf16.mxu0 %v2905
    %3498 = vmatpush1.bf16.msra.mxu0 %v2904
    %3499 = vmatprep.subr.bf16.mxu0 %v2909
    %3500 = vmatpush1.bf16.msra.mxu0 %v2908
    %3501 = vmatprep.subr.bf16.mxu0 %v2913
    %3502 = vmatpush1.bf16.msra.mxu0 %v2912
    %3503 = vmatprep.subr.bf16.mxu0 %v2917
    %3504 = vmatpush1.bf16.msra.mxu0 %v2916
    %3505 = vmatprep.subr.bf16.mxu0 %v2921
    %3506 = vmatpush1.bf16.msra.mxu0 %v2920
    %3507 = vmatprep.subr.bf16.mxu0 %v2925
    %3508 = vmatpush1.bf16.msra.mxu0 %v2924
    %3509 = vmatprep.subr.bf16.mxu0 %v2929
    %3510 = vmatpush1.bf16.msra.mxu0 %v2928
    %3511 = vmatprep.subr.bf16.mxu0 %v2933
    %3512 = vmatpush1.bf16.msra.mxu0 %v2932
    %3513 = vmatprep.subr.bf16.mxu0 %v2937
    %3514 = vmatpush1.bf16.msra.mxu0 %v2936
    %3515 = vmatprep.subr.bf16.mxu0 %v2941
    %3516 = vmatpush1.bf16.msra.mxu0 %v2940
    %3517 = vmatprep.mubr.bf16.mxu0 %v1895
    %3518 = vmatmul.mubr.bf16.gmra.mrb[0].mxu0 %v1894
    %v3519 = vpop.f32.mrb[0].mxu0
    %v3520 = vadd.f32 %v3479, %v3519
    %v3521 = vpop.f32.mrb[0].mxu0
    %v3522 = vadd.f32 %v3481, %v3521
    %v3523 = vpop.f32.mrb[0].mxu0
    %v3524 = vpop.f32.mrb[0].mxu0
    %3525 = vdwg.mxu0
    %vm3526 = vcmp.ge.f32.partialorder %v3356, 0.0
    %vm3527 = vcmp.ge.f32.partialorder %v3358, 0.0
    %vm3528 = vcmp.ge.f32.partialorder %v3520, 0.0
    %vm3529 = vcmp.ge.f32.partialorder %v3522, 0.0
    %v3530 = vstv %s1631
    %v3531 = vmul.f32 %v3530, %v3356
    %v3532 = vmul.f32 %v3530, %v3358
    %v3533 = vmul.f32 %v3530, %v3520
    %v3534 = vmul.f32 %v3530, %v3522
    %v3535 = vsel %vm3526, %v3356, %v3531
    %v3536 = vsel %vm3527, %v3358, %v3532
    %v3537 = vsel %vm3528, %v3520, %v3533
    %v3538 = vsel %vm3529, %v3522, %v3534
    %s3539 = sld [smem:[#allocation2 + $0x2]]
    %v3540 = vld [vmem:[%s8] sm:$0xf]
    %v3541 = vld [vmem:[%s8 + $0x4] sm:$0xf]
    %v3542 = vld [vmem:[%s8 + $0x8] sm:$0xf]
    %v3543 = vld [vmem:[%s8 + $0xc] sm:$0xf]
    %v3544 = vld [vmem:[%s8 + $0x10] sm:$0xf]
    %v3545 = vld [vmem:[%s8 + $0x14] sm:$0xf]
    %v3546 = vld [vmem:[%s8 + $0x18] sm:$0xf]
    %v3547 = vld [vmem:[%s8 + $0x1c] sm:$0xf]
    %v3548 = vld [vmem:[%s8 + $0x20] sm:$0xf]
    %v3549 = vld [vmem:[%s8 + $0x24] sm:$0xf]
    %v3550 = vld [vmem:[%s8 + $0x28] sm:$0xf]
    %v3551 = vld [vmem:[%s8 + $0x2c] sm:$0xf]
    %v3552 = vld [vmem:[%s8 + $0x30] sm:$0xf]
    %v3553 = vld [vmem:[%s8 + $0x34] sm:$0xf]
    %v3554 = vld [vmem:[%s8 + $0x38] sm:$0xf]
    %v3555 = vld [vmem:[%s8 + $0x3c] sm:$0xf]
    %v3556 = vld [vmem:[%s8 + $0x40] sm:$0xf]
    %v3557 = vld [vmem:[%s8 + $0x44] sm:$0xf]
    %v3558 = vld [vmem:[%s8 + $0x48] sm:$0xf]
    %v3559 = vld [vmem:[%s8 + $0x4c] sm:$0xf]
    %v3560 = vld [vmem:[%s8 + $0x50] sm:$0xf]
    %v3561 = vld [vmem:[%s8 + $0x54] sm:$0xf]
    %v3562 = vld [vmem:[%s8 + $0x58] sm:$0xf]
    %v3563 = vld [vmem:[%s8 + $0x5c] sm:$0xf]
    %v3564 = vld [vmem:[%s8 + $0x60] sm:$0xf]
    %v3565 = vld [vmem:[%s8 + $0x64] sm:$0xf]
    %v3566 = vld [vmem:[%s8 + $0x68] sm:$0xf]
    %v3567 = vld [vmem:[%s8 + $0x6c] sm:$0xf]
    %v3568 = vld [vmem:[%s8 + $0x70] sm:$0xf]
    %v3569 = vld [vmem:[%s8 + $0x74] sm:$0xf]
    %v3570 = vld [vmem:[%s8 + $0x78] sm:$0xf]
    %v3571 = vld [vmem:[%s8 + $0x7c] sm:$0xf]
    %v3572 = vld [vmem:[%s8 + $0x80] sm:$0xf]
    %v3573 = vld [vmem:[%s8 + $0x84] sm:$0xf]
    %v3574 = vld [vmem:[%s8 + $0x88] sm:$0xf]
    %v3575 = vld [vmem:[%s8 + $0x8c] sm:$0xf]
    %v3576 = vld [vmem:[%s8 + $0x90] sm:$0xf]
    %v3577 = vld [vmem:[%s8 + $0x94] sm:$0xf]
    %v3578 = vld [vmem:[%s8 + $0x98] sm:$0xf]
    %v3579 = vld [vmem:[%s8 + $0x9c] sm:$0xf]
    %v3580 = vld [vmem:[%s8 + $0xa0] sm:$0xf]
    %v3581 = vld [vmem:[%s8 + $0xa4] sm:$0xf]
    %v3582 = vld [vmem:[%s8 + $0xa8] sm:$0xf]
    %v3583 = vld [vmem:[%s8 + $0xac] sm:$0xf]
    %v3584 = vld [vmem:[%s8 + $0xb0] sm:$0xf]
    %v3585 = vld [vmem:[%s8 + $0xb4] sm:$0xf]
    %v3586 = vld [vmem:[%s8 + $0xb8] sm:$0xf]
    %v3587 = vld [vmem:[%s8 + $0xbc] sm:$0xf]
    %v3588 = vld [vmem:[%s8 + $0xc0] sm:$0xf]
    %v3589 = vld [vmem:[%s8 + $0xc4] sm:$0xf]
    %v3590 = vld [vmem:[%s8 + $0xc8] sm:$0xf]
    %v3591 = vld [vmem:[%s8 + $0xcc] sm:$0xf]
    %v3592 = vld [vmem:[%s8 + $0xd0] sm:$0xf]
    %v3593 = vld [vmem:[%s8 + $0xd4] sm:$0xf]
    %v3594 = vld [vmem:[%s8 + $0xd8] sm:$0xf]
    %v3595 = vld [vmem:[%s8 + $0xdc] sm:$0xf]
    %v3596 = vld [vmem:[%s8 + $0xe0] sm:$0xf]
    %v3597 = vld [vmem:[%s8 + $0xe4] sm:$0xf]
    %v3598 = vld [vmem:[%s8 + $0xe8] sm:$0xf]
    %v3599 = vld [vmem:[%s8 + $0xec] sm:$0xf]
    %v3600 = vld [vmem:[%s8 + $0xf0] sm:$0xf]
    %v3601 = vld [vmem:[%s8 + $0xf4] sm:$0xf]
    %v3602 = vld [vmem:[%s8 + $0xf8] sm:$0xf]
    %v3603 = vld [vmem:[%s8 + $0xfc] sm:$0xf]
    %v3604 = vpack.c.bf16 %v3535, %v3535
    %v3605 = vpack.c.bf16 %v3536, %v3536
    %v3606 = vpack.c.bf16 %v3537, %v3537
    %v3607 = vpack.c.bf16 %v3538, %v3538
    %v3608 = vld [vmem:[%s9] sm:$0x1]
    %v3610 = vlaneseq
    %v3611 = vshrl.u32 %v3610, 7
    %v3612 = vsub.s32 0, %v3611
    %v3613 = vrot.slane %v3608, %v3612
    %v3679 = vunpack.c.l.b16 %v3540
    %v3680 = vunpack.c.l.b16 %v3541
    %v3681 = vunpack.c.l.b16 %v3542
    %v3682 = vunpack.c.l.b16 %v3543
    %v3683 = vunpack.c.l.b16 %v3544
    %v3684 = vunpack.c.l.b16 %v3545
    %v3685 = vunpack.c.l.b16 %v3546
    %v3686 = vunpack.c.l.b16 %v3547
    %v3687 = vunpack.c.l.b16 %v3548
    %v3688 = vunpack.c.l.b16 %v3549
    %v3689 = vunpack.c.l.b16 %v3550
    %v3690 = vunpack.c.l.b16 %v3551
    %v3691 = vunpack.c.l.b16 %v3552
    %v3692 = vunpack.c.l.b16 %v3553
    %v3693 = vunpack.c.l.b16 %v3554
    %v3694 = vunpack.c.l.b16 %v3555
    %v3695 = vunpack.c.l.b16 %v3556
    %v3696 = vunpack.c.l.b16 %v3557
    %v3697 = vunpack.c.l.b16 %v3558
    %v3698 = vunpack.c.l.b16 %v3559
    %v3699 = vunpack.c.l.b16 %v3560
    %v3700 = vunpack.c.l.b16 %v3561
    %v3701 = vunpack.c.l.b16 %v3562
    %v3702 = vunpack.c.l.b16 %v3563
    %v3703 = vunpack.c.l.b16 %v3564
    %v3704 = vunpack.c.l.b16 %v3565
    %v3705 = vunpack.c.l.b16 %v3566
    %v3706 = vunpack.c.l.b16 %v3567
    %v3707 = vunpack.c.l.b16 %v3568
    %v3708 = vunpack.c.l.b16 %v3569
    %v3709 = vunpack.c.l.b16 %v3570
    %v3710 = vunpack.c.l.b16 %v3571
    %v3711 = vunpack.c.l.b16 %v3572
    %v3712 = vunpack.c.l.b16 %v3573
    %v3713 = vunpack.c.l.b16 %v3574
    %v3714 = vunpack.c.l.b16 %v3575
    %v3715 = vunpack.c.l.b16 %v3576
    %v3716 = vunpack.c.l.b16 %v3577
    %v3717 = vunpack.c.l.b16 %v3578
    %v3718 = vunpack.c.l.b16 %v3579
    %v3719 = vunpack.c.l.b16 %v3580
    %v3720 = vunpack.c.l.b16 %v3581
    %v3721 = vunpack.c.l.b16 %v3582
    %v3722 = vunpack.c.l.b16 %v3583
    %v3723 = vunpack.c.l.b16 %v3584
    %v3724 = vunpack.c.l.b16 %v3585
    %v3725 = vunpack.c.l.b16 %v3586
    %v3726 = vunpack.c.l.b16 %v3587
    %v3727 = vunpack.c.l.b16 %v3588
    %v3728 = vunpack.c.l.b16 %v3589
    %v3729 = vunpack.c.l.b16 %v3590
    %v3730 = vunpack.c.l.b16 %v3591
    %v3731 = vunpack.c.l.b16 %v3592
    %v3732 = vunpack.c.l.b16 %v3593
    %v3733 = vunpack.c.l.b16 %v3594
    %v3734 = vunpack.c.l.b16 %v3595
    %v3735 = vunpack.c.l.b16 %v3596
    %v3736 = vunpack.c.l.b16 %v3597
    %v3737 = vunpack.c.l.b16 %v3598
    %v3738 = vunpack.c.l.b16 %v3599
    %v3739 = vunpack.c.l.b16 %v3600
    %v3740 = vunpack.c.l.b16 %v3601
    %v3741 = vunpack.c.l.b16 %v3602
    %v3742 = vunpack.c.l.b16 %v3603
    %v3743 = vpack.c.b16 %v3680, %v3679
    %v3744 = vpack.c.b16 %v3682, %v3681
    %v3745 = vpack.c.b16 %v3684, %v3683
    %v3746 = vpack.c.b16 %v3686, %v3685
    %v3747 = vpack.c.b16 %v3688, %v3687
    %v3748 = vpack.c.b16 %v3690, %v3689
    %v3749 = vpack.c.b16 %v3692, %v3691
    %v3750 = vpack.c.b16 %v3694, %v3693
    %v3751 = vpack.c.b16 %v3696, %v3695
    %v3752 = vpack.c.b16 %v3698, %v3697
    %v3753 = vpack.c.b16 %v3700, %v3699
    %v3754 = vpack.c.b16 %v3702, %v3701
    %v3755 = vpack.c.b16 %v3704, %v3703
    %v3756 = vpack.c.b16 %v3706, %v3705
    %v3757 = vpack.c.b16 %v3708, %v3707
    %v3758 = vpack.c.b16 %v3710, %v3709
    %v3759 = vpack.c.b16 %v3712, %v3711
    %v3760 = vpack.c.b16 %v3714, %v3713
    %v3761 = vpack.c.b16 %v3716, %v3715
    %v3762 = vpack.c.b16 %v3718, %v3717
    %v3763 = vpack.c.b16 %v3720, %v3719
    %v3764 = vpack.c.b16 %v3722, %v3721
    %v3765 = vpack.c.b16 %v3724, %v3723
    %v3766 = vpack.c.b16 %v3726, %v3725
    %v3767 = vpack.c.b16 %v3728, %v3727
    %v3768 = vpack.c.b16 %v3730, %v3729
    %v3769 = vpack.c.b16 %v3732, %v3731
    %v3770 = vpack.c.b16 %v3734, %v3733
    %v3771 = vpack.c.b16 %v3736, %v3735
    %v3772 = vpack.c.b16 %v3738, %v3737
    %v3773 = vpack.c.b16 %v3740, %v3739
    %v3774 = vpack.c.b16 %v3742, %v3741
    %3807 = vmatprep.subr.bf16.mxu0 0
    %3808 = vmatpush1.bf16.msra.mxu0 %v3743
    %3809 = vmatprep.subr.bf16.mxu0 0
    %3810 = vmatpush1.bf16.msra.mxu0 %v3744
    %3811 = vmatprep.subr.bf16.mxu0 0
    %3812 = vmatpush1.bf16.msra.mxu0 %v3745
    %3813 = vmatprep.subr.bf16.mxu0 0
    %3814 = vmatpush1.bf16.msra.mxu0 %v3746
    %3815 = vmatprep.subr.bf16.mxu0 0
    %3816 = vmatpush1.bf16.msra.mxu0 %v3747
    %3817 = vmatprep.subr.bf16.mxu0 0
    %3818 = vmatpush1.bf16.msra.mxu0 %v3748
    %3819 = vmatprep.subr.bf16.mxu0 0
    %3820 = vmatpush1.bf16.msra.mxu0 %v3749
    %3821 = vmatprep.subr.bf16.mxu0 0
    %3822 = vmatpush1.bf16.msra.mxu0 %v3750
    %3823 = vmatprep.subr.bf16.mxu0 0
    %3824 = vmatpush1.bf16.msra.mxu0 %v3751
    %3825 = vmatprep.subr.bf16.mxu0 0
    %3826 = vmatpush1.bf16.msra.mxu0 %v3752
    %3827 = vmatprep.subr.bf16.mxu0 0
    %3828 = vmatpush1.bf16.msra.mxu0 %v3753
    %3829 = vmatprep.subr.bf16.mxu0 0
    %3830 = vmatpush1.bf16.msra.mxu0 %v3754
    %3831 = vmatprep.subr.bf16.mxu0 0
    %3832 = vmatpush1.bf16.msra.mxu0 %v3755
    %3833 = vmatprep.subr.bf16.mxu0 0
    %3834 = vmatpush1.bf16.msra.mxu0 %v3756
    %3835 = vmatprep.subr.bf16.mxu0 0
    %3836 = vmatpush1.bf16.msra.mxu0 %v3757
    %3837 = vmatprep.subr.bf16.mxu0 0
    %3838 = vmatpush1.bf16.msra.mxu0 %v3758
    %3839 = vmatprep.mubr.bf16.mxu0 %v3605
    %3840 = vmatmul.mubr.bf16.gmra.mrb[0].mxu0 %v3604
    %v3841 = vpop.f32.mrb[0].mxu0
    %v3842 = vadd.f32 %v3613, %v3841
    %v3843 = vpop.f32.mrb[0].mxu0
    %v3844 = vpop.f32.mrb[0].mxu0
    %v3845 = vpop.f32.mrb[0].mxu0
    %3846 = vdwg.mxu0
    %3847 = vmatprep.subr.bf16.mxu0 0
    %3848 = vmatpush1.bf16.msra.mxu0 %v3759
    %3849 = vmatprep.subr.bf16.mxu0 0
    %3850 = vmatpush1.bf16.msra.mxu0 %v3760
    %3851 = vmatprep.subr.bf16.mxu0 0
    %3852 = vmatpush1.bf16.msra.mxu0 %v3761
    %3853 = vmatprep.subr.bf16.mxu0 0
    %3854 = vmatpush1.bf16.msra.mxu0 %v3762
    %3855 = vmatprep.subr.bf16.mxu0 0
    %3856 = vmatpush1.bf16.msra.mxu0 %v3763
    %3857 = vmatprep.subr.bf16.mxu0 0
    %3858 = vmatpush1.bf16.msra.mxu0 %v3764
    %3859 = vmatprep.subr.bf16.mxu0 0
    %3860 = vmatpush1.bf16.msra.mxu0 %v3765
    %3861 = vmatprep.subr.bf16.mxu0 0
    %3862 = vmatpush1.bf16.msra.mxu0 %v3766
    %3863 = vmatprep.subr.bf16.mxu0 0
    %3864 = vmatpush1.bf16.msra.mxu0 %v3767
    %3865 = vmatprep.subr.bf16.mxu0 0
    %3866 = vmatpush1.bf16.msra.mxu0 %v3768
    %3867 = vmatprep.subr.bf16.mxu0 0
    %3868 = vmatpush1.bf16.msra.mxu0 %v3769
    %3869 = vmatprep.subr.bf16.mxu0 0
    %3870 = vmatpush1.bf16.msra.mxu0 %v3770
    %3871 = vmatprep.subr.bf16.mxu0 0
    %3872 = vmatpush1.bf16.msra.mxu0 %v3771
    %3873 = vmatprep.subr.bf16.mxu0 0
    %3874 = vmatpush1.bf16.msra.mxu0 %v3772
    %3875 = vmatprep.subr.bf16.mxu0 0
    %3876 = vmatpush1.bf16.msra.mxu0 %v3773
    %3877 = vmatprep.subr.bf16.mxu0 0
    %3878 = vmatpush1.bf16.msra.mxu0 %v3774
    %3879 = vmatprep.mubr.bf16.mxu0 %v3607
    %3880 = vmatmul.mubr.bf16.gmra.mrb[0].mxu0 %v3606
    %v3881 = vpop.f32.mrb[0].mxu0
    %v3882 = vadd.f32 %v3842, %v3881
    %v3883 = vpop.f32.mrb[0].mxu0
    %v3884 = vpop.f32.mrb[0].mxu0
    %v3885 = vpop.f32.mrb[0].mxu0
    %3886 = vdwg.mxu0
    %vm3887 = vcmp.ge.f32.partialorder %v3882, 0.0
    %v3888 = vstv %s3539
    %v3889 = vmul.f32 %v3888, %v3882
    %v3890 = vsel %vm3887, %v3882, %v3889
    %v3891 = vld [vmem:[%s10] sm:$0xf]
    %v3892 = vld [vmem:[%s10 + $0x4] sm:$0xf]
    %v3893 = vld [vmem:[%s10 + $0x8] sm:$0xf]
    %v3894 = vld [vmem:[%s10 + $0xc] sm:$0xf]
    %v3895 = vld [vmem:[%s10 + $0x10] sm:$0xf]
    %v3896 = vld [vmem:[%s10 + $0x14] sm:$0xf]
    %v3897 = vld [vmem:[%s10 + $0x18] sm:$0xf]
    %v3898 = vld [vmem:[%s10 + $0x1c] sm:$0xf]
    %v3899 = vld [vmem:[%s10 + $0x20] sm:$0xf]
    %v3900 = vld [vmem:[%s10 + $0x24] sm:$0xf]
    %v3901 = vld [vmem:[%s10 + $0x28] sm:$0xf]
    %v3902 = vld [vmem:[%s10 + $0x2c] sm:$0xf]
    %v3903 = vld [vmem:[%s10 + $0x30] sm:$0xf]
    %v3904 = vld [vmem:[%s10 + $0x34] sm:$0xf]
    %v3905 = vld [vmem:[%s10 + $0x38] sm:$0xf]
    %v3906 = vld [vmem:[%s10 + $0x3c] sm:$0xf]
    %v3907 = vpack.c.bf16 %v3890, %v3890
    %v3908 = vld [vmem:[%s11] sm:$0x1]
    %v3910 = vlaneseq
    %v3911 = vshrl.u32 %v3910, 7
    %v3912 = vsub.s32 0, %v3911
    %v3913 = vrot.slane %v3908, %v3912
    %v3931 = vunpack.c.l.b16 %v3891
    %v3932 = vunpack.c.l.b16 %v3892
    %v3933 = vunpack.c.l.b16 %v3893
    %v3934 = vunpack.c.l.b16 %v3894
    %v3935 = vunpack.c.l.b16 %v3895
    %v3936 = vunpack.c.l.b16 %v3896
    %v3937 = vunpack.c.l.b16 %v3897
    %v3938 = vunpack.c.l.b16 %v3898
    %v3939 = vunpack.c.l.b16 %v3899
    %v3940 = vunpack.c.l.b16 %v3900
    %v3941 = vunpack.c.l.b16 %v3901
    %v3942 = vunpack.c.l.b16 %v3902
    %v3943 = vunpack.c.l.b16 %v3903
    %v3944 = vunpack.c.l.b16 %v3904
    %v3945 = vunpack.c.l.b16 %v3905
    %v3946 = vunpack.c.l.b16 %v3906
    %v3947 = vpack.c.b16 %v3932, %v3931
    %v3948 = vpack.c.b16 %v3934, %v3933
    %v3949 = vpack.c.b16 %v3936, %v3935
    %v3950 = vpack.c.b16 %v3938, %v3937
    %v3951 = vpack.c.b16 %v3940, %v3939
    %v3952 = vpack.c.b16 %v3942, %v3941
    %v3953 = vpack.c.b16 %v3944, %v3943
    %v3954 = vpack.c.b16 %v3946, %v3945
    %3963 = vmatprep.subr.bf16.mxu0 0
    %3964 = vmatpush1.bf16.msra.mxu0 %v3947
    %3965 = vmatprep.subr.bf16.mxu0 0
    %3966 = vmatpush1.bf16.msra.mxu0 %v3948
    %3967 = vmatprep.subr.bf16.mxu0 0
    %3968 = vmatpush1.bf16.msra.mxu0 %v3949
    %3969 = vmatprep.subr.bf16.mxu0 0
    %3970 = vmatpush1.bf16.msra.mxu0 %v3950
    %3971 = vmatprep.subr.bf16.mxu0 0
    %3972 = vmatpush1.bf16.msra.mxu0 %v3951
    %3973 = vmatprep.subr.bf16.mxu0 0
    %3974 = vmatpush1.bf16.msra.mxu0 %v3952
    %3975 = vmatprep.subr.bf16.mxu0 0
    %3976 = vmatpush1.bf16.msra.mxu0 %v3953
    %3977 = vmatprep.subr.bf16.mxu0 0
    %3978 = vmatpush1.bf16.msra.mxu0 %v3954
    %3979 = vmatprep.subr.bf16.mxu0 0
    %3980 = vmatpush1.bf16.msra.mxu0 0
    %3981 = vmatprep.subr.bf16.mxu0 0
    %3982 = vmatpush1.bf16.msra.mxu0 0
    %3983 = vmatprep.subr.bf16.mxu0 0
    %3984 = vmatpush1.bf16.msra.mxu0 0
    %3985 = vmatprep.subr.bf16.mxu0 0
    %3986 = vmatpush1.bf16.msra.mxu0 0
    %3987 = vmatprep.subr.bf16.mxu0 0
    %3988 = vmatpush1.bf16.msra.mxu0 0
    %3989 = vmatprep.subr.bf16.mxu0 0
    %3990 = vmatpush1.bf16.msra.mxu0 0
    %3991 = vmatprep.subr.bf16.mxu0 0
    %3992 = vmatpush1.bf16.msra.mxu0 0
    %3993 = vmatprep.subr.bf16.mxu0 0
    %3994 = vmatpush1.bf16.msra.mxu0 0
    %3995 = vmatprep.mubr.bf16.mxu0 0
    %3996 = vmatmul.mubr.bf16.gmra.mrb[0].mxu0 %v3907
    %v3997 = vpop.f32.mrb[0].mxu0
    %v3998 = vadd.f32 %v3913, %v3997
    %v3999 = vpop.f32.mrb[0].mxu0
    %v4000 = vpop.f32.mrb[0].mxu0
    %v4001 = vpop.f32.mrb[0].mxu0
    %4002 = vdwg.mxu0
    %4003 = vst [vmem:[#allocation5] sm:$0x3] %v3998
    // Predicated region
    $region54: #{timm_model_complex_forward.1} parent=1 // pred_check
      _
    $region55: #{timm_model_complex_forward.1} parent=1 // pred_check_branch
      %4005 = sbr.rel (0) target = $region57
    $region56: #{timm_model_complex_forward.1} parent=1 // pred_region
      %s4007 = ssub.s32 32, 32
      %4008 = vsyncadd [#allocation3], %s4007
      %s4010 = sshll.u32 [#allocation5], 4
      %s4011 = int_to_ptr.vmem [resolvable:$true] %s4010
      %4013 = dma.vmem_to_hbm [thread:$0]  %s4011, 32, %s12, [#allocation3]
    $region57: #{timm_model_complex_forward.1} parent=1 // pred_fallthru
      _
    // Predicated region
    $region58: #{timm_model_complex_forward.1} parent=1 // pred_check
      _
    $region59: #{timm_model_complex_forward.1} parent=1 // pred_check_branch
      %4015 = sbr.rel (0) target = $region61
    $region60: #{timm_model_complex_forward.1} parent=1 // pred_region
      %4016 = dma.done [#allocation3], 32
    $region61: #{timm_model_complex_forward.1} parent=1 // pred_fallthru
      _
    %4017 = vsyncpa [#allocation3], 1
    %4018 = vsyncpa [#allocation4], 1

</llo_original>
